<compile_context>
chip_gen: v6e
topology: v6e:2x2x1
jax: 0.10.0
libtpu: 0.0.40
codegen_flags: <defaults>
</compile_context>

<pallas_src>
import functools
import math

import jax
import jax.numpy as jnp
from jax.experimental import pallas as pl
from jax.experimental.pallas import tpu as pltpu


def _mha_kernel(x_ref, wq_ref, wk_ref, wv_ref, wph_ref, bp_ref, o_ref, *,
                approx_recip):
    # x_ref:   (bb, T, C)     block of batch elements (original dtype)
    # wq_ref:  (H, C, hs)     per-head Q weights (compute dtype); wk/wv same
    # wph_ref: (H, hs, C)     output projection split into per-head row bands
    # bp_ref:  (1, C)         output projection bias (f32)
    # o_ref:   (bb, T, C)
    bb, T, C = x_ref.shape
    H, _, hs = wq_ref.shape
    cdtype = wq_ref.dtype
    M = bb * T           # rows fed to the projection matmuls
    G = bb * H           # (batch, head) pairs for the attention batch

    # Leading-dim merge (free) + in-kernel cast to the MXU compute dtype.
    x2d = x_ref[...].reshape(M, C).astype(cdtype)
    # Leading-dim broadcast, built once and shared by the three projections.
    xb = jnp.broadcast_to(x2d, (H, M, C))

    scale = 1.0 / math.sqrt(hs)
    # Head-batched Q/K/V projections: (H,M,C) x (H,C,hs) -> (H,M,hs), f32 acc.
    q = jnp.einsum("hmc,hcd->hmd", xb, wq_ref[...],
                   preferred_element_type=jnp.float32) * scale
    k = jnp.einsum("hmc,hcd->hmd", xb, wk_ref[...],
                   preferred_element_type=jnp.float32)
    v = jnp.einsum("hmc,hcd->hmd", xb, wv_ref[...],
                   preferred_element_type=jnp.float32)

    # (H, bb*T, hs) -> (bb*H, T, hs).  Identity when bb == 1 (the default path
    # at small B); for bb > 1 it is a sublane-tile-aligned split (the wrapper
    # guarantees T % 8 == 0 whenever bb > 1).
    q = q.astype(cdtype).reshape(G, T, hs)
    k = k.astype(cdtype).reshape(G, T, hs)
    v = v.astype(cdtype).reshape(G, T, hs)

    # Additive causal mask, built once and broadcast over all (batch, head).
    row = jax.lax.broadcasted_iota(jnp.int32, (1, T, T), 1)
    col = jax.lax.broadcasted_iota(jnp.int32, (1, T, T), 2)
    mask_bias = jnp.where(row >= col, 0.0, -1e30).astype(jnp.float32)

    # TODO(synk): for production T, tile the key axis (flash-style online
    # softmax) instead of materializing the full (G, T, T) score tensor.
    s = jnp.einsum("gtd,gsd->gts", q, k,
                   preferred_element_type=jnp.float32)         # (G, T, T)
    s = s + mask_bias
    m = jnp.max(s, axis=-1, keepdims=True)
    p = jnp.exp(s - m)                                          # masked -> 0
    inv = pl.reciprocal(jnp.sum(p, axis=-1, keepdims=True), approx=approx_recip)

    o = jnp.einsum("gts,gsd->gtd", p.astype(cdtype), v,
                   preferred_element_type=jnp.float32)          # (G, T, hs)
    o = o * inv

    # Fold the head concat into the output projection: per-head row band of Wp,
    # (H,M,hs) x (H,hs,C) -> (H,M,C), then sum over heads + bias.
    oh = o.reshape(H, M, hs).astype(cdtype)
    yh = jnp.einsum("hmd,hdc->hmc", oh, wph_ref[...],
                    preferred_element_type=jnp.float32)
    y = jnp.sum(yh, axis=0) + bp_ref[...]                       # (M, C)

    # TODO(synk): dropout(p=0.1) omitted (identity in eval mode).
    o_ref[...] = y.reshape(bb, T, C).astype(o_ref.dtype)


def pack_mha_params(wq, wk, wv, wp, bp, compute_dtype=jnp.bfloat16):
    """One-time weight packing (layout + dtype cast).

    Keep this OUT of the per-call hot path: pack once, then call
    multi_head_attention_packed repeatedly with the packed params.
    """
    H, C, hs = wq.shape
    wq_p = jnp.asarray(wq, compute_dtype)
    wk_p = jnp.asarray(wk, compute_dtype)
    wv_p = jnp.asarray(wv, compute_dtype)
    wph = jnp.asarray(wp, compute_dtype).reshape(H, hs, C)   # per-head row bands
    bp2 = jnp.asarray(bp, jnp.float32).reshape(1, C)
    return wq_p, wk_p, wv_p, wph, bp2


def _estimate_vmem_bytes(block_b, T, C, H, hs, x_bytes, c_bytes, out_bytes):
    """Rough VMEM footprint of one grid step (used to cap block_b on v7x)."""
    M, G = block_b * T, block_b * H
    io_tiles = 2 * M * C * (x_bytes + out_bytes)          # double-buffered in/out
    weights = 2 * ((3 * H * C * hs + H * hs * C) * c_bytes + C * 4)
    x_bcast = H * M * C * c_bytes                          # broadcast copy of x
    qkv = 3 * G * T * hs * (4 + c_bytes)                   # f32 + compute copies
    scores = G * T * T * (4 + c_bytes)                     # s and p
    proj = (H + 1) * M * C * 4                             # per-head partials + y
    return io_tiles + weights + x_bcast + qkv + scores + proj


@functools.partial(jax.jit, static_argnames=("block_b",))
def multi_head_attention_packed(x, wq_p, wk_p, wv_p, wph, bp2, *, block_b=None):
    B, T, C = x.shape
    H, _, hs = wq_p.shape
    assert H * hs == C, "num_heads * head_size must equal embed_dim"
    compute_dtype = wq_p.dtype

    x_bytes = jnp.dtype(x.dtype).itemsize
    c_bytes = jnp.dtype(compute_dtype).itemsize

    if block_b is None:
        # Feed the 256-row MXU (v6e/v7x) when B allows, but keep at least two
        # grid steps whenever B >= 2 so the "parallel" batch axis can shard
        # across v7x's two TensorCores (v5e needs only ~128 rows anyway).
        block_b = min(B, max(1, 256 // max(T, 1)))
        if B >= 2:
            block_b = min(block_b, pl.cdiv(B, 2))
    block_b = max(1, min(block_b, B))
    if T % 8 != 0:
        block_b = 1   # keep the in-kernel (H, bb*T) -> (bb*H, T) regroup tile-aligned

    VMEM_BUDGET = 24 * 1024 * 1024   # stay well below v7x's 64 MiB physical VMEM
    while block_b > 1 and _estimate_vmem_bytes(
            block_b, T, C, H, hs, x_bytes, c_bytes, x_bytes) > VMEM_BUDGET:
        block_b -= 1
    while B % block_b:               # full blocks only
        block_b -= 1
    grid = (B // block_b,)

    est = _estimate_vmem_bytes(block_b, T, C, H, hs, x_bytes, c_bytes, x_bytes)
    vmem_limit = int(min(max(32 * 1024 * 1024, 4 * est), 48 * 1024 * 1024))

    kernel = functools.partial(
        _mha_kernel, approx_recip=(compute_dtype != jnp.float32))

    # TODO(synk): if C grows enough for the (constant-index) weight specs'
    # double-buffered copies to matter in VMEM, mark them pl.Buffered(1).
    return pl.pallas_call(
        kernel,
        out_shape=jax.ShapeDtypeStruct((B, T, C), x.dtype),
        grid=grid,
        in_specs=[
            pl.BlockSpec((block_b, T, C), lambda i: (i, 0, 0)),
            pl.BlockSpec((H, C, hs), lambda i: (0, 0, 0)),
            pl.BlockSpec((H, C, hs), lambda i: (0, 0, 0)),
            pl.BlockSpec((H, C, hs), lambda i: (0, 0, 0)),
            pl.BlockSpec((H, hs, C), lambda i: (0, 0, 0)),
            pl.BlockSpec((1, C), lambda i: (0, 0)),
        ],
        out_specs=pl.BlockSpec((block_b, T, C), lambda i: (i, 0, 0)),
        compiler_params=pltpu.CompilerParams(
            dimension_semantics=("parallel",),
            vmem_limit_bytes=vmem_limit),
    )(x, wq_p, wk_p, wv_p, wph, bp2)


def multi_head_attention(x, wq, wk, wv, wp, bp, *, block_b=None,
                         compute_dtype=jnp.bfloat16):
    """Convenience wrapper (packs every call). Prefer pack_mha_params + packed."""
    params = pack_mha_params(wq, wk, wv, wp, bp, compute_dtype)
    return multi_head_attention_packed(x, *params, block_b=block_b)


def mha_reference(x, wq, wk, wv, wp, bp):
    """Pure-JAX f32 reference for correctness checking."""
    B, T, C = x.shape
    H, _, hs = wq.shape
    scale = 1.0 / math.sqrt(hs)
    mask = jnp.tril(jnp.ones((T, T), dtype=bool))
    outs = []
    for h in range(H):
        q = x @ wq[h]
        k = x @ wk[h]
        v = x @ wv[h]
        s = (q @ jnp.swapaxes(k, -1, -2)) * scale
        s = jnp.where(mask, s, -jnp.inf)
        p = jax.nn.softmax(s, axis=-1)
        outs.append(p @ v)
    cat = jnp.concatenate(outs, axis=-1)            # (B, T, H*hs) == (B, T, C)
    return cat @ wp + bp


if __name__ == "__main__":
    # Small shapes consistent with the module defaults:
    # head_size=16, embed_dim=128 -> num_heads = 128 / 16 = 8.
    B, T = 2, 8
    num_heads, head_size = 8, 16
    embed_dim = num_heads * head_size               # 128 (lane-dense output)

    key = jax.random.PRNGKey(0)
    kx, kq, kk, kv, kp, kb = jax.random.split(key, 6)

    x = jax.random.normal(kx, (B, T, embed_dim), dtype=jnp.float32)
    # Deterministic synthetic parameters (no checkpoint load).
    wq = jax.random.normal(kq, (num_heads, embed_dim, head_size), jnp.float32) * 0.1
    wk = jax.random.normal(kk, (num_heads, embed_dim, head_size), jnp.float32) * 0.1
    wv = jax.random.normal(kv, (num_heads, embed_dim, head_size), jnp.float32) * 0.1
    wp = jax.random.normal(kp, (embed_dim, embed_dim), jnp.float32) * 0.1
    bp = jax.random.normal(kb, (embed_dim,), jnp.float32) * 0.1

    ref = mha_reference(x, wq, wk, wv, wp, bp)

    # Full-precision path (exact reciprocal when compute dtype is f32).
    params_f32 = pack_mha_params(wq, wk, wv, wp, bp, compute_dtype=jnp.float32)
    out_f32 = jax.block_until_ready(multi_head_attention_packed(x, *params_f32))
    assert out_f32.shape == (B, T, embed_dim)
    assert jnp.allclose(out_f32, ref, atol=5e-3, rtol=5e-3), "f32 mismatch vs reference"

    # bf16 MXU operands with f32 accumulation (production fast path; weights
    # packed ONCE here and reused across calls).
    params_bf16 = pack_mha_params(wq, wk, wv, wp, bp, compute_dtype=jnp.bfloat16)
    out_bf16 = jax.block_until_ready(multi_head_attention_packed(x, *params_bf16))
    assert out_bf16.shape == (B, T, embed_dim)
    assert jnp.allclose(out_bf16, ref, atol=8e-2, rtol=8e-2), "bf16 mismatch vs reference"

    print("KERNEL_OK")
</pallas_src>

<mosaic_0001>
module attributes {stable_mosaic.version = 11 : i64} {
  func.func @_mha_kernel(%arg0: i32, %arg1: memref<1x8x128xf32, #tpu.memory_space<vmem>>, %arg2: memref<8x128x16xf32, #tpu.memory_space<vmem>>, %arg3: memref<8x128x16xf32, #tpu.memory_space<vmem>>, %arg4: memref<8x128x16xf32, #tpu.memory_space<vmem>>, %arg5: memref<8x16x128xf32, #tpu.memory_space<vmem>>, %arg6: memref<1x128xf32, #tpu.memory_space<vmem>>, %arg7: memref<1x8x128xf32, #tpu.memory_space<vmem>>) attributes {dimension_semantics = [#tpu.dimension_semantics<parallel>], iteration_bounds = array<i64: 2>, scalar_prefetch = 0 : i64, scratch_operands = 0 : i64, tpu.core_type = #tpu.core_type<tc>, window_params = [{transform_indices = @transform_0, window_bounds = array<i64: 1, 8, 128>}, {pipeline_mode = #tpu.pipeline_mode<synchronous>, transform_indices = @transform_1, window_bounds = array<i64: 8, 128, 16>}, {pipeline_mode = #tpu.pipeline_mode<synchronous>, transform_indices = @transform_2, window_bounds = array<i64: 8, 128, 16>}, {pipeline_mode = #tpu.pipeline_mode<synchronous>, transform_indices = @transform_3, window_bounds = array<i64: 8, 128, 16>}, {pipeline_mode = #tpu.pipeline_mode<synchronous>, transform_indices = @transform_4, window_bounds = array<i64: 8, 16, 128>}, {pipeline_mode = #tpu.pipeline_mode<synchronous>, transform_indices = @transform_5, window_bounds = array<i64: 1, 128>}, {transform_indices = @transform_6, window_bounds = array<i64: 1, 8, 128>}]} {
    %c0 = arith.constant 0 : index
    %c0_0 = arith.constant 0 : index
    %c0_1 = arith.constant 0 : index
    %0 = vector.load %arg1[%c0, %c0_0, %c0_1] : memref<1x8x128xf32, #tpu.memory_space<vmem>>, vector<1x8x128xf32>
    %1 = vector.shape_cast %0 : vector<1x8x128xf32> to vector<8x128xf32>
    %2 = vector.shape_cast %1 : vector<8x128xf32> to vector<1x8x128xf32>
    %3 = vector.broadcast %2 : vector<1x8x128xf32> to vector<8x8x128xf32>
    %c0_2 = arith.constant 0 : index
    %c0_3 = arith.constant 0 : index
    %c0_4 = arith.constant 0 : index
    %4 = vector.load %arg2[%c0_2, %c0_3, %c0_4] : memref<8x128x16xf32, #tpu.memory_space<vmem>>, vector<8x128x16xf32>
    "tpu.trace_start"() <{level = 10 : i32, message = "hmc,hcd->hmd"}> : () -> ()
    %cst = arith.constant dense<0.000000e+00> : vector<8x8x16xf32>
    %5 = tpu.matmul %3, %4, %cst {dimension_numbers = #tpu.dot_dimension_numbers<[2], [1], [1], [2], [0, 0, 0, 1, 1, 2], [0], [0]>} : vector<8x8x128xf32>, vector<8x128x16xf32>, vector<8x8x16xf32> -> vector<8x8x16xf32>
    "tpu.trace_stop"() : () -> ()
    %cst_5 = arith.constant 2.500000e-01 : f32
    %6 = vector.broadcast %cst_5 : f32 to vector<8x8x16xf32>
    %7 = arith.mulf %5, %6 : vector<8x8x16xf32>
    %c0_6 = arith.constant 0 : index
    %c0_7 = arith.constant 0 : index
    %c0_8 = arith.constant 0 : index
    %8 = vector.load %arg3[%c0_6, %c0_7, %c0_8] : memref<8x128x16xf32, #tpu.memory_space<vmem>>, vector<8x128x16xf32>
    "tpu.trace_start"() <{level = 10 : i32, message = "hmc,hcd->hmd"}> : () -> ()
    %cst_9 = arith.constant dense<0.000000e+00> : vector<8x8x16xf32>
    %9 = tpu.matmul %3, %8, %cst_9 {dimension_numbers = #tpu.dot_dimension_numbers<[2], [1], [1], [2], [0, 0, 0, 1, 1, 2], [0], [0]>} : vector<8x8x128xf32>, vector<8x128x16xf32>, vector<8x8x16xf32> -> vector<8x8x16xf32>
    "tpu.trace_stop"() : () -> ()
    %c0_10 = arith.constant 0 : index
    %c0_11 = arith.constant 0 : index
    %c0_12 = arith.constant 0 : index
    %10 = vector.load %arg4[%c0_10, %c0_11, %c0_12] : memref<8x128x16xf32, #tpu.memory_space<vmem>>, vector<8x128x16xf32>
    "tpu.trace_start"() <{level = 10 : i32, message = "hmc,hcd->hmd"}> : () -> ()
    %cst_13 = arith.constant dense<0.000000e+00> : vector<8x8x16xf32>
    %11 = tpu.matmul %3, %10, %cst_13 {dimension_numbers = #tpu.dot_dimension_numbers<[2], [1], [1], [2], [0, 0, 0, 1, 1, 2], [0], [0]>} : vector<8x8x128xf32>, vector<8x128x16xf32>, vector<8x8x16xf32> -> vector<8x8x16xf32>
    "tpu.trace_stop"() : () -> ()
    %12 = tpu.iota {dimensions = array<i32: 1>} : vector<1x8x8xi32>
    %13 = tpu.iota {dimensions = array<i32: 2>} : vector<1x8x8xi32>
    %14 = arith.cmpi sge, %12, %13 : vector<1x8x8xi32>
    %cst_14 = arith.constant 0.000000e+00 : f32
    %cst_15 = arith.constant -1.000000e+30 : f32
    %15 = vector.broadcast %cst_14 : f32 to vector<1x8x8xf32>
    %16 = vector.broadcast %cst_15 : f32 to vector<1x8x8xf32>
    %17 = arith.select %14, %15, %16 : vector<1x8x8xi1>, vector<1x8x8xf32>
    "tpu.trace_start"() <{level = 10 : i32, message = "gtd,gsd->gts"}> : () -> ()
    %cst_16 = arith.constant dense<0.000000e+00> : vector<8x8x8xf32>
    %18 = tpu.matmul %7, %9, %cst_16 {dimension_numbers = #tpu.dot_dimension_numbers<[2], [2], [1], [1], [0, 0, 0, 1, 1, 1], [0], [0]>} : vector<8x8x16xf32>, vector<8x8x16xf32>, vector<8x8x8xf32> -> vector<8x8x8xf32>
    "tpu.trace_stop"() : () -> ()
    %19 = vector.broadcast %17 : vector<1x8x8xf32> to vector<8x8x8xf32>
    %20 = arith.addf %18, %19 : vector<8x8x8xf32>
    %cst_17 = arith.constant dense<0xFF800000> : vector<8x8xf32>
    %21 = vector.multi_reduction <maximumf>, %20, %cst_17 [2] : vector<8x8x8xf32> to vector<8x8xf32>
    %22 = vector.shape_cast %21 : vector<8x8xf32> to vector<8x8x1xf32>
    %23 = vector.broadcast %22 : vector<8x8x1xf32> to vector<8x8x8xf32>
    %24 = arith.subf %20, %23 : vector<8x8x8xf32>
    %25 = math.exp %24 : vector<8x8x8xf32>
    %cst_18 = arith.constant dense<0.000000e+00> : vector<8x8xf32>
    %26 = vector.multi_reduction <add>, %25, %cst_18 [2] : vector<8x8x8xf32> to vector<8x8xf32>
    %27 = vector.shape_cast %26 : vector<8x8xf32> to vector<8x8x1xf32>
    %28 = tpu.reciprocal %27 : vector<8x8x1xf32> -> vector<8x8x1xf32>
    "tpu.trace_start"() <{level = 10 : i32, message = "gts,gsd->gtd"}> : () -> ()
    %cst_19 = arith.constant dense<0.000000e+00> : vector<8x8x16xf32>
    %29 = tpu.matmul %25, %11, %cst_19 {dimension_numbers = #tpu.dot_dimension_numbers<[2], [1], [1], [2], [0, 0, 0, 1, 1, 2], [0], [0]>} : vector<8x8x8xf32>, vector<8x8x16xf32>, vector<8x8x16xf32> -> vector<8x8x16xf32>
    "tpu.trace_stop"() : () -> ()
    %30 = vector.broadcast %28 : vector<8x8x1xf32> to vector<8x8x16xf32>
    %31 = arith.mulf %29, %30 : vector<8x8x16xf32>
    %c0_20 = arith.constant 0 : index
    %c0_21 = arith.constant 0 : index
    %c0_22 = arith.constant 0 : index
    %32 = vector.load %arg5[%c0_20, %c0_21, %c0_22] : memref<8x16x128xf32, #tpu.memory_space<vmem>>, vector<8x16x128xf32>
    "tpu.trace_start"() <{level = 10 : i32, message = "hmd,hdc->hmc"}> : () -> ()
    %cst_23 = arith.constant dense<0.000000e+00> : vector<8x8x128xf32>
    %33 = tpu.matmul %31, %32, %cst_23 {dimension_numbers = #tpu.dot_dimension_numbers<[2], [1], [1], [2], [0, 0, 0, 1, 1, 2], [0], [0]>} : vector<8x8x16xf32>, vector<8x16x128xf32>, vector<8x8x128xf32> -> vector<8x8x128xf32>
    "tpu.trace_stop"() : () -> ()
    %cst_24 = arith.constant dense<0.000000e+00> : vector<8x128xf32>
    %34 = vector.multi_reduction <add>, %33, %cst_24 [0] : vector<8x8x128xf32> to vector<8x128xf32>
    %c0_25 = arith.constant 0 : index
    %c0_26 = arith.constant 0 : index
    %35 = vector.load %arg6[%c0_25, %c0_26] : memref<1x128xf32, #tpu.memory_space<vmem>>, vector<1x128xf32>
    %36 = vector.broadcast %35 : vector<1x128xf32> to vector<8x128xf32>
    %37 = arith.addf %34, %36 : vector<8x128xf32>
    %38 = vector.shape_cast %37 : vector<8x128xf32> to vector<1x8x128xf32>
    %c0_27 = arith.constant 0 : index
    %c0_28 = arith.constant 0 : index
    %c0_29 = arith.constant 0 : index
    %39 = vector.load %arg7[%c0_27, %c0_28, %c0_29] : memref<1x8x128xf32, #tpu.memory_space<vmem>>, vector<1x8x128xf32>
    tpu.vector_store %arg7[%c0_27, %c0_28, %c0_29], %38 {strides = array<i32>} : memref<1x8x128xf32, #tpu.memory_space<vmem>>, vector<1x8x128xf32>,
    return
  }
  func.func @transform_0(%arg0: i32) -> (i32, i32, i32) {
    %c0_i32 = arith.constant 0 : i32
    %c0_i32_0 = arith.constant 0 : i32
    %c0_i32_1 = arith.constant 0 : i32
    return %arg0, %c0_i32, %c0_i32_0 : i32, i32, i32
  }
  func.func @transform_1(%arg0: i32) -> (i32, i32, i32) {
    %c0_i32 = arith.constant 0 : i32
    %c0_i32_0 = arith.constant 0 : i32
    %c0_i32_1 = arith.constant 0 : i32
    %c0_i32_2 = arith.constant 0 : i32
    return %c0_i32, %c0_i32_0, %c0_i32_1 : i32, i32, i32
  }
  func.func @transform_2(%arg0: i32) -> (i32, i32, i32) {
    %c0_i32 = arith.constant 0 : i32
    %c0_i32_0 = arith.constant 0 : i32
    %c0_i32_1 = arith.constant 0 : i32
    %c0_i32_2 = arith.constant 0 : i32
    return %c0_i32, %c0_i32_0, %c0_i32_1 : i32, i32, i32
  }
  func.func @transform_3(%arg0: i32) -> (i32, i32, i32) {
    %c0_i32 = arith.constant 0 : i32
    %c0_i32_0 = arith.constant 0 : i32
    %c0_i32_1 = arith.constant 0 : i32
    %c0_i32_2 = arith.constant 0 : i32
    return %c0_i32, %c0_i32_0, %c0_i32_1 : i32, i32, i32
  }
  func.func @transform_4(%arg0: i32) -> (i32, i32, i32) {
    %c0_i32 = arith.constant 0 : i32
    %c0_i32_0 = arith.constant 0 : i32
    %c0_i32_1 = arith.constant 0 : i32
    %c0_i32_2 = arith.constant 0 : i32
    return %c0_i32, %c0_i32_0, %c0_i32_1 : i32, i32, i32
  }
  func.func @transform_5(%arg0: i32) -> (i32, i32) {
    %c0_i32 = arith.constant 0 : i32
    %c0_i32_0 = arith.constant 0 : i32
    %c0_i32_1 = arith.constant 0 : i32
    return %c0_i32, %c0_i32_0 : i32, i32
  }
  func.func @transform_6(%arg0: i32) -> (i32, i32, i32) {
    %c0_i32 = arith.constant 0 : i32
    %c0_i32_0 = arith.constant 0 : i32
    %c0_i32_1 = arith.constant 0 : i32
    return %arg0, %c0_i32, %c0_i32_0 : i32, i32, i32
  }
}

</mosaic_0001>

<llo_original>
// kernel: multi_head_attention_packed.1
$region0: #{multi_head_attention_packed.1}
  #allocation0 [shape = 'u32[]', space=smem, size = 0x4, offset = 0x4, fixed_abs, tag = 'smem constant byte address 0x4 - core index']
  #allocation1 [shape = 'u32[144,128]{1,0:T(1,128)}', space=vmem, size = 0x12000, scoped, tag = 'internal scratch']
  %s0 = inlined_call_operand.vmem [shape: f32[2,8,128], index: 0, kind: input, shape index: {}]
  %s1 = inlined_call_operand.vmem [shape: f32[8,128,16], index: 1, kind: input, shape index: {}]
  %s2 = inlined_call_operand.vmem [shape: f32[8,128,16], index: 2, kind: input, shape index: {}]
  %s3 = inlined_call_operand.vmem [shape: f32[8,128,16], index: 3, kind: input, shape index: {}]
  %s4 = inlined_call_operand.vmem [shape: f32[8,16,128], index: 4, kind: input, shape index: {}]
  %s5 = inlined_call_operand.vmem [shape: f32[1,128], index: 5, kind: input, shape index: {}]
  %s6 = inlined_call_operand.hbm [shape: f32[2,8,128], index: 6, kind: output, shape index: {}]
  %s7 = sld [smem:[#allocation0]]
  $region57: #{multi_head_attention_packed.1} parent=0
    _
  %s9 = ssub.s32 1, %s7
  %s10 = scalar_select 0, %s9, %s7
  $region1: #{multi_head_attention_packed.1} parent=0
    #allocation2 [shape = 'u8[8192]{0}', space=vmem, size = 0x2000, scoped, tag = 'output window, operand 0']
    #allocation3 [shape = 's32[2]{0}', space=sflag, size = 0x8, scoped, tag = 'scoped memory for multi_head_attention_packed.1']
    %11 = vsyncpa [#allocation3], 0
    %s12 = scalar_lea.sflag [#allocation3], 1
    %13 = vsyncpa %s12, 0
    loop: start=0, step=1, limit=4
    $region2: #{multi_head_attention_packed.1} parent=1 // loop_pre_header
      _
    $region3: #{multi_head_attention_packed.1} parent=1 // loop_header
      %s15 = sphi 0, %s19
      %p16 = scmp.ge.s32.totalorder %s15, 4
      %s25 = sphi 0, %s27
      %s28 = sphi 0, %s25
      %s29 = sphi 0, %s28
      %s45 = sphi 0, %s29
      %s49 = sphi 0, %s49
      %s51 = sphi 0, %s49
      %s52 = sphi 0, %s51
      %s66 = sphi 0, %s52
      %s70 = sphi 0, %s70
      %s72 = sphi 0, %s70
      %s73 = sphi 0, %s72
      %s87 = sphi 0, %s73
      %s91 = sphi 0, %s91
      %s93 = sphi 0, %s91
      %s94 = sphi 0, %s93
      %s108 = sphi 0, %s94
      %s112 = sphi 0, %s112
      %s114 = sphi 0, %s112
      %s115 = sphi 0, %s114
      %s129 = sphi 0, %s115
      %s133 = sphi 0, %s133
      %s135 = sphi 0, %s133
      %s136 = sphi 0, %s135
      %s150 = sphi 0, %s136
      %s156 = sphi 0, %s158
      %s159 = sphi 0, %s156
      %s160 = sphi 0, %s159
      %s176 = sphi 0, %s160
    $region4: #{multi_head_attention_packed.1} parent=1 // loop_header_branch
      %18 = sbr.rel (%p16) target = $region8
    $region5: #{multi_head_attention_packed.1} parent=1 // loop_body
      %s20 = ssub.s32 %s15, 1
      %s21 = ssub.s32 %s15, 2
      %s22 = sadd.s32 %s15, 1
      %s23 = ssub.s32 %s15, %s22
      %p24 = scmp.eq.s32.totalorder %s23, 0
      %s26 = sadd.s32 %s25, 1
      %s27 = scalar_select %p24, %s25, %s26
      %p30 = pneg %p24
      %p31 = scmp.eq.s32.totalorder %s15, 1
      %p32 = por %p30, %p31
      %p33 = scmp.ne.s32.totalorder %s25, %s28
      %p34 = scmp.eq.s32.totalorder %s15, 0
      %p35 = por %p33, %p34
      %p36 = scmp.ne.s32.totalorder %s25, %s28
      %p37 = scmp.eq.s32.totalorder %s20, 1
      %p38 = por %p36, %p37
      %p39 = scmp.ne.s32.totalorder %s28, %s29
      %p40 = scmp.eq.s32.totalorder %s20, 0
      %p41 = por %p39, %p40
      %p42 = scmp.ne.s32.totalorder %s28, %s29
      %p43 = scmp.eq.s32.totalorder %s21, 1
      %p44 = por %p42, %p43
      %p46 = scmp.ne.s32.totalorder %s29, %s45
      %p47 = scmp.eq.s32.totalorder %s21, 0
      %p48 = por %p46, %p47
      %s50 = sadd.s32 %s49, 1
      %p53 = scmp.eq.s32.totalorder %s15, 1
      %p54 = scmp.ne.s32.totalorder %s49, %s51
      %p55 = scmp.eq.s32.totalorder %s15, 0
      %p56 = por %p54, %p55
      %p57 = scmp.ne.s32.totalorder %s49, %s51
      %p58 = scmp.eq.s32.totalorder %s20, 1
      %p59 = por %p57, %p58
      %p60 = scmp.ne.s32.totalorder %s51, %s52
      %p61 = scmp.eq.s32.totalorder %s20, 0
      %p62 = por %p60, %p61
      %p63 = scmp.ne.s32.totalorder %s51, %s52
      %p64 = scmp.eq.s32.totalorder %s21, 1
      %p65 = por %p63, %p64
      %p67 = scmp.ne.s32.totalorder %s52, %s66
      %p68 = scmp.eq.s32.totalorder %s21, 0
      %p69 = por %p67, %p68
      %s71 = sadd.s32 %s70, 1
      %p74 = scmp.eq.s32.totalorder %s15, 1
      %p75 = scmp.ne.s32.totalorder %s70, %s72
      %p76 = scmp.eq.s32.totalorder %s15, 0
      %p77 = por %p75, %p76
      %p78 = scmp.ne.s32.totalorder %s70, %s72
      %p79 = scmp.eq.s32.totalorder %s20, 1
      %p80 = por %p78, %p79
      %p81 = scmp.ne.s32.totalorder %s72, %s73
      %p82 = scmp.eq.s32.totalorder %s20, 0
      %p83 = por %p81, %p82
      %p84 = scmp.ne.s32.totalorder %s72, %s73
      %p85 = scmp.eq.s32.totalorder %s21, 1
      %p86 = por %p84, %p85
      %p88 = scmp.ne.s32.totalorder %s73, %s87
      %p89 = scmp.eq.s32.totalorder %s21, 0
      %p90 = por %p88, %p89
      %s92 = sadd.s32 %s91, 1
      %p95 = scmp.eq.s32.totalorder %s15, 1
      %p96 = scmp.ne.s32.totalorder %s91, %s93
      %p97 = scmp.eq.s32.totalorder %s15, 0
      %p98 = por %p96, %p97
      %p99 = scmp.ne.s32.totalorder %s91, %s93
      %p100 = scmp.eq.s32.totalorder %s20, 1
      %p101 = por %p99, %p100
      %p102 = scmp.ne.s32.totalorder %s93, %s94
      %p103 = scmp.eq.s32.totalorder %s20, 0
      %p104 = por %p102, %p103
      %p105 = scmp.ne.s32.totalorder %s93, %s94
      %p106 = scmp.eq.s32.totalorder %s21, 1
      %p107 = por %p105, %p106
      %p109 = scmp.ne.s32.totalorder %s94, %s108
      %p110 = scmp.eq.s32.totalorder %s21, 0
      %p111 = por %p109, %p110
      %s113 = sadd.s32 %s112, 1
      %p116 = scmp.eq.s32.totalorder %s15, 1
      %p117 = scmp.ne.s32.totalorder %s112, %s114
      %p118 = scmp.eq.s32.totalorder %s15, 0
      %p119 = por %p117, %p118
      %p120 = scmp.ne.s32.totalorder %s112, %s114
      %p121 = scmp.eq.s32.totalorder %s20, 1
      %p122 = por %p120, %p121
      %p123 = scmp.ne.s32.totalorder %s114, %s115
      %p124 = scmp.eq.s32.totalorder %s20, 0
      %p125 = por %p123, %p124
      %p126 = scmp.ne.s32.totalorder %s114, %s115
      %p127 = scmp.eq.s32.totalorder %s21, 1
      %p128 = por %p126, %p127
      %p130 = scmp.ne.s32.totalorder %s115, %s129
      %p131 = scmp.eq.s32.totalorder %s21, 0
      %p132 = por %p130, %p131
      %s134 = sadd.s32 %s133, 1
      %p137 = scmp.eq.s32.totalorder %s15, 1
      %p138 = scmp.ne.s32.totalorder %s133, %s135
      %p139 = scmp.eq.s32.totalorder %s15, 0
      %p140 = por %p138, %p139
      %p141 = scmp.ne.s32.totalorder %s133, %s135
      %p142 = scmp.eq.s32.totalorder %s20, 1
      %p143 = por %p141, %p142
      %p144 = scmp.ne.s32.totalorder %s135, %s136
      %p145 = scmp.eq.s32.totalorder %s20, 0
      %p146 = por %p144, %p145
      %p147 = scmp.ne.s32.totalorder %s135, %s136
      %p148 = scmp.eq.s32.totalorder %s21, 1
      %p149 = por %p147, %p148
      %p151 = scmp.ne.s32.totalorder %s136, %s150
      %p152 = scmp.eq.s32.totalorder %s21, 0
      %p153 = por %p151, %p152
      %s154 = ssub.s32 %s15, %s22
      %p155 = scmp.eq.s32.totalorder %s154, 0
      %s157 = sadd.s32 %s156, 1
      %s158 = scalar_select %p155, %s156, %s157
      %p161 = pneg %p155
      %p162 = scmp.eq.s32.totalorder %s15, 1
      %p163 = por %p161, %p162
      %p164 = scmp.ne.s32.totalorder %s156, %s159
      %p165 = scmp.eq.s32.totalorder %s15, 0
      %p166 = por %p164, %p165
      %p167 = scmp.ne.s32.totalorder %s156, %s159
      %p168 = scmp.eq.s32.totalorder %s20, 1
      %p169 = por %p167, %p168
      %p170 = scmp.ne.s32.totalorder %s159, %s160
      %p171 = scmp.eq.s32.totalorder %s20, 0
      %p172 = por %p170, %p171
      %p173 = scmp.ne.s32.totalorder %s159, %s160
      %p174 = scmp.eq.s32.totalorder %s21, 1
      %p175 = por %p173, %p174
      %p177 = scmp.ne.s32.totalorder %s160, %s176
      %p178 = scmp.eq.s32.totalorder %s21, 0
      %p179 = por %p177, %p178
      %p180 = scmp.le.s32.totalorder 1, %s15
      %p181 = scmp.lt.s32.totalorder %s15, 3
      %p182 = pnand %p180, %p181
      %p183 = pneg %p182
      // Predicated region
      $region9: #{multi_head_attention_packed.1} parent=5 // pred_check
        _
      $region10: #{multi_head_attention_packed.1} parent=5 // pred_check_branch
        %185 = sbr.rel (%p182) target = $region12
      $region11: #{multi_head_attention_packed.1} parent=5 // pred_region
        %s186 = ssub.s32 %s15, 1
        // Predicated region
        $region13: #{multi_head_attention_packed.1} parent=11 // pred_check
          %p187 = pneg %p62
        $region14: #{multi_head_attention_packed.1} parent=11 // pred_check_branch
          %189 = sbr.rel (%p187) target = $region16
        $region15: #{multi_head_attention_packed.1} parent=11 // pred_region
          _
        $region16: #{multi_head_attention_packed.1} parent=11 // pred_fallthru
          _
        // Predicated region
        $region17: #{multi_head_attention_packed.1} parent=11 // pred_check
          %p190 = pneg %p83
        $region18: #{multi_head_attention_packed.1} parent=11 // pred_check_branch
          %192 = sbr.rel (%p190) target = $region20
        $region19: #{multi_head_attention_packed.1} parent=11 // pred_region
          _
        $region20: #{multi_head_attention_packed.1} parent=11 // pred_fallthru
          _
        // Predicated region
        $region21: #{multi_head_attention_packed.1} parent=11 // pred_check
          %p193 = pneg %p104
        $region22: #{multi_head_attention_packed.1} parent=11 // pred_check_branch
          %195 = sbr.rel (%p193) target = $region24
        $region23: #{multi_head_attention_packed.1} parent=11 // pred_region
          _
        $region24: #{multi_head_attention_packed.1} parent=11 // pred_fallthru
          _
        // Predicated region
        $region25: #{multi_head_attention_packed.1} parent=11 // pred_check
          %p196 = pneg %p125
        $region26: #{multi_head_attention_packed.1} parent=11 // pred_check_branch
          %198 = sbr.rel (%p196) target = $region28
        $region27: #{multi_head_attention_packed.1} parent=11 // pred_region
          _
        $region28: #{multi_head_attention_packed.1} parent=11 // pred_fallthru
          _
        // Predicated region
        $region29: #{multi_head_attention_packed.1} parent=11 // pred_check
          %p199 = pneg %p146
        $region30: #{multi_head_attention_packed.1} parent=11 // pred_check_branch
          %201 = sbr.rel (%p199) target = $region32
        $region31: #{multi_head_attention_packed.1} parent=11 // pred_region
          _
        $region32: #{multi_head_attention_packed.1} parent=11 // pred_fallthru
          _
      $region12: #{multi_head_attention_packed.1} parent=5 // pred_fallthru
        _
      %p202 = scmp.lt.s32.totalorder %s15, 2
      // Predicated region
      $region33: #{multi_head_attention_packed.1} parent=5 // pred_check
        %p203 = pneg %p202
      $region34: #{multi_head_attention_packed.1} parent=5 // pred_check_branch
        %205 = sbr.rel (%p203) target = $region36
      $region35: #{multi_head_attention_packed.1} parent=5 // pred_region
        // Predicated region
        $region37: #{multi_head_attention_packed.1} parent=35 // pred_check
          %p206 = pneg %p35
        $region38: #{multi_head_attention_packed.1} parent=35 // pred_check_branch
          %208 = sbr.rel (%p206) target = $region40
        $region39: #{multi_head_attention_packed.1} parent=35 // pred_region
          %p209 = scmp.lt.s32.totalorder %s15, 1
          %s210 = scalar_select %p209, %s15, 1
          %s211 = smul.addr %s210, 8
          %s212 = scalar_lea.vmem %s0, %s211
        $region40: #{multi_head_attention_packed.1} parent=35 // pred_fallthru
          _
      $region36: #{multi_head_attention_packed.1} parent=5 // pred_fallthru
        _
      %p213 = scmp.le.s32.totalorder 1, %s15
      %p214 = scmp.lt.s32.totalorder %s15, 3
      %p215 = pnand %p213, %p214
      %p216 = pneg %p215
      // Predicated region
      $region41: #{multi_head_attention_packed.1} parent=5 // pred_check
        _
      $region42: #{multi_head_attention_packed.1} parent=5 // pred_check_branch
        %218 = sbr.rel (%p215) target = $region44
      $region43: #{multi_head_attention_packed.1} parent=5 // pred_region
        %s219 = ssub.s32 %s15, 1
        %p220 = scmp.lt.s32.totalorder %s20, 1
        %s221 = scalar_select %p220, %s20, 1
        %s222 = smul.addr %s221, 8
        %s223 = scalar_lea.vmem %s0, %s222
        %p224 = pneg %p41
        %p225 = pneg %p38
        %p226 = pneg %p62
        %p227 = pneg %p59
        %p228 = pneg %p83
        %p229 = pneg %p80
        %p230 = pneg %p104
        %p231 = pneg %p101
        %p232 = pneg %p125
        %p233 = pneg %p122
        %p234 = pneg %p146
        %p235 = pneg %p143
        %p236 = pneg %p172
        %p237 = pneg %p169
        %s238 = sand.u32 %s159, 1
        %s239 = scalar_lea.sflag [#allocation3], %s238
        %s240 = sand.u32 %s159, 1
        %s241 = smul.addr %s240, 8
        %s242 = scalar_lea.vmem [#allocation2], %s241
        %p243 = scmp.lt.s32.totalorder %s20, 1
        %s244 = scalar_select %p243, %s20, 1
        %s245 = smul.addr %s244, 8
        %s246 = scalar_lea.vmem %s0, %s245
        %v247 = vld [vmem:[%s246] sm:$0xff]
        %v248 = vld [vmem:[%s1] sm:$0xff]
        %v249 = vld [vmem:[%s1 + $0x8] sm:$0xff]
        %v250 = vld [vmem:[%s1 + $0x10] sm:$0xff]
        %v251 = vld [vmem:[%s1 + $0x18] sm:$0xff]
        %v252 = vld [vmem:[%s1 + $0x20] sm:$0xff]
        %v253 = vld [vmem:[%s1 + $0x28] sm:$0xff]
        %v254 = vld [vmem:[%s1 + $0x30] sm:$0xff]
        %v255 = vld [vmem:[%s1 + $0x38] sm:$0xff]
        %v256 = vld [vmem:[%s1 + $0x40] sm:$0xff]
        %v257 = vld [vmem:[%s1 + $0x48] sm:$0xff]
        %v258 = vld [vmem:[%s1 + $0x50] sm:$0xff]
        %v259 = vld [vmem:[%s1 + $0x58] sm:$0xff]
        %v260 = vld [vmem:[%s1 + $0x60] sm:$0xff]
        %v261 = vld [vmem:[%s1 + $0x68] sm:$0xff]
        %v262 = vld [vmem:[%s1 + $0x70] sm:$0xff]
        %v263 = vld [vmem:[%s1 + $0x78] sm:$0xff]
        %v264 = vld [vmem:[%s1 + $0x80] sm:$0xff]
        %v265 = vld [vmem:[%s1 + $0x88] sm:$0xff]
        %v266 = vld [vmem:[%s1 + $0x90] sm:$0xff]
        %v267 = vld [vmem:[%s1 + $0x98] sm:$0xff]
        %v268 = vld [vmem:[%s1 + $0xa0] sm:$0xff]
        %v269 = vld [vmem:[%s1 + $0xa8] sm:$0xff]
        %v270 = vld [vmem:[%s1 + $0xb0] sm:$0xff]
        %v271 = vld [vmem:[%s1 + $0xb8] sm:$0xff]
        %v272 = vld [vmem:[%s1 + $0xc0] sm:$0xff]
        %v273 = vld [vmem:[%s1 + $0xc8] sm:$0xff]
        %v274 = vld [vmem:[%s1 + $0xd0] sm:$0xff]
        %v275 = vld [vmem:[%s1 + $0xd8] sm:$0xff]
        %v276 = vld [vmem:[%s1 + $0xe0] sm:$0xff]
        %v277 = vld [vmem:[%s1 + $0xe8] sm:$0xff]
        %v278 = vld [vmem:[%s1 + $0xf0] sm:$0xff]
        %v279 = vld [vmem:[%s1 + $0xf8] sm:$0xff]
        %v280 = vld [vmem:[%s1 + $0x100] sm:$0xff]
        %v281 = vld [vmem:[%s1 + $0x108] sm:$0xff]
        %v282 = vld [vmem:[%s1 + $0x110] sm:$0xff]
        %v283 = vld [vmem:[%s1 + $0x118] sm:$0xff]
        %v284 = vld [vmem:[%s1 + $0x120] sm:$0xff]
        %v285 = vld [vmem:[%s1 + $0x128] sm:$0xff]
        %v286 = vld [vmem:[%s1 + $0x130] sm:$0xff]
        %v287 = vld [vmem:[%s1 + $0x138] sm:$0xff]
        %v288 = vld [vmem:[%s1 + $0x140] sm:$0xff]
        %v289 = vld [vmem:[%s1 + $0x148] sm:$0xff]
        %v290 = vld [vmem:[%s1 + $0x150] sm:$0xff]
        %v291 = vld [vmem:[%s1 + $0x158] sm:$0xff]
        %v292 = vld [vmem:[%s1 + $0x160] sm:$0xff]
        %v293 = vld [vmem:[%s1 + $0x168] sm:$0xff]
        %v294 = vld [vmem:[%s1 + $0x170] sm:$0xff]
        %v295 = vld [vmem:[%s1 + $0x178] sm:$0xff]
        %v296 = vld [vmem:[%s1 + $0x180] sm:$0xff]
        %v297 = vld [vmem:[%s1 + $0x188] sm:$0xff]
        %v298 = vld [vmem:[%s1 + $0x190] sm:$0xff]
        %v299 = vld [vmem:[%s1 + $0x198] sm:$0xff]
        %v300 = vld [vmem:[%s1 + $0x1a0] sm:$0xff]
        %v301 = vld [vmem:[%s1 + $0x1a8] sm:$0xff]
        %v302 = vld [vmem:[%s1 + $0x1b0] sm:$0xff]
        %v303 = vld [vmem:[%s1 + $0x1b8] sm:$0xff]
        %v304 = vld [vmem:[%s1 + $0x1c0] sm:$0xff]
        %v305 = vld [vmem:[%s1 + $0x1c8] sm:$0xff]
        %v306 = vld [vmem:[%s1 + $0x1d0] sm:$0xff]
        %v307 = vld [vmem:[%s1 + $0x1d8] sm:$0xff]
        %v308 = vld [vmem:[%s1 + $0x1e0] sm:$0xff]
        %v309 = vld [vmem:[%s1 + $0x1e8] sm:$0xff]
        %v310 = vld [vmem:[%s1 + $0x1f0] sm:$0xff]
        %v311 = vld [vmem:[%s1 + $0x1f8] sm:$0xff]
        %v312 = vld [vmem:[%s1 + $0x200] sm:$0xff]
        %v313 = vld [vmem:[%s1 + $0x208] sm:$0xff]
        %v314 = vld [vmem:[%s1 + $0x210] sm:$0xff]
        %v315 = vld [vmem:[%s1 + $0x218] sm:$0xff]
        %v316 = vld [vmem:[%s1 + $0x220] sm:$0xff]
        %v317 = vld [vmem:[%s1 + $0x228] sm:$0xff]
        %v318 = vld [vmem:[%s1 + $0x230] sm:$0xff]
        %v319 = vld [vmem:[%s1 + $0x238] sm:$0xff]
        %v320 = vld [vmem:[%s1 + $0x240] sm:$0xff]
        %v321 = vld [vmem:[%s1 + $0x248] sm:$0xff]
        %v322 = vld [vmem:[%s1 + $0x250] sm:$0xff]
        %v323 = vld [vmem:[%s1 + $0x258] sm:$0xff]
        %v324 = vld [vmem:[%s1 + $0x260] sm:$0xff]
        %v325 = vld [vmem:[%s1 + $0x268] sm:$0xff]
        %v326 = vld [vmem:[%s1 + $0x270] sm:$0xff]
        %v327 = vld [vmem:[%s1 + $0x278] sm:$0xff]
        %v328 = vld [vmem:[%s1 + $0x280] sm:$0xff]
        %v329 = vld [vmem:[%s1 + $0x288] sm:$0xff]
        %v330 = vld [vmem:[%s1 + $0x290] sm:$0xff]
        %v331 = vld [vmem:[%s1 + $0x298] sm:$0xff]
        %v332 = vld [vmem:[%s1 + $0x2a0] sm:$0xff]
        %v333 = vld [vmem:[%s1 + $0x2a8] sm:$0xff]
        %v334 = vld [vmem:[%s1 + $0x2b0] sm:$0xff]
        %v335 = vld [vmem:[%s1 + $0x2b8] sm:$0xff]
        %v336 = vld [vmem:[%s1 + $0x2c0] sm:$0xff]
        %v337 = vld [vmem:[%s1 + $0x2c8] sm:$0xff]
        %v338 = vld [vmem:[%s1 + $0x2d0] sm:$0xff]
        %v339 = vld [vmem:[%s1 + $0x2d8] sm:$0xff]
        %v340 = vld [vmem:[%s1 + $0x2e0] sm:$0xff]
        %v341 = vld [vmem:[%s1 + $0x2e8] sm:$0xff]
        %v342 = vld [vmem:[%s1 + $0x2f0] sm:$0xff]
        %v343 = vld [vmem:[%s1 + $0x2f8] sm:$0xff]
        %v344 = vld [vmem:[%s1 + $0x300] sm:$0xff]
        %v345 = vld [vmem:[%s1 + $0x308] sm:$0xff]
        %v346 = vld [vmem:[%s1 + $0x310] sm:$0xff]
        %v347 = vld [vmem:[%s1 + $0x318] sm:$0xff]
        %v348 = vld [vmem:[%s1 + $0x320] sm:$0xff]
        %v349 = vld [vmem:[%s1 + $0x328] sm:$0xff]
        %v350 = vld [vmem:[%s1 + $0x330] sm:$0xff]
        %v351 = vld [vmem:[%s1 + $0x338] sm:$0xff]
        %v352 = vld [vmem:[%s1 + $0x340] sm:$0xff]
        %v353 = vld [vmem:[%s1 + $0x348] sm:$0xff]
        %v354 = vld [vmem:[%s1 + $0x350] sm:$0xff]
        %v355 = vld [vmem:[%s1 + $0x358] sm:$0xff]
        %v356 = vld [vmem:[%s1 + $0x360] sm:$0xff]
        %v357 = vld [vmem:[%s1 + $0x368] sm:$0xff]
        %v358 = vld [vmem:[%s1 + $0x370] sm:$0xff]
        %v359 = vld [vmem:[%s1 + $0x378] sm:$0xff]
        %v360 = vld [vmem:[%s1 + $0x380] sm:$0xff]
        %v361 = vld [vmem:[%s1 + $0x388] sm:$0xff]
        %v362 = vld [vmem:[%s1 + $0x390] sm:$0xff]
        %v363 = vld [vmem:[%s1 + $0x398] sm:$0xff]
        %v364 = vld [vmem:[%s1 + $0x3a0] sm:$0xff]
        %v365 = vld [vmem:[%s1 + $0x3a8] sm:$0xff]
        %v366 = vld [vmem:[%s1 + $0x3b0] sm:$0xff]
        %v367 = vld [vmem:[%s1 + $0x3b8] sm:$0xff]
        %v368 = vld [vmem:[%s1 + $0x3c0] sm:$0xff]
        %v369 = vld [vmem:[%s1 + $0x3c8] sm:$0xff]
        %v370 = vld [vmem:[%s1 + $0x3d0] sm:$0xff]
        %v371 = vld [vmem:[%s1 + $0x3d8] sm:$0xff]
        %v372 = vld [vmem:[%s1 + $0x3e0] sm:$0xff]
        %v373 = vld [vmem:[%s1 + $0x3e8] sm:$0xff]
        %v374 = vld [vmem:[%s1 + $0x3f0] sm:$0xff]
        %v375 = vld [vmem:[%s1 + $0x3f8] sm:$0xff]
        %376 = vmatprep.subr.mxu0 0.0
        %377 = vmatpush1.msra.mxu0 %v263
        %378 = vmatprep.subr.mxu0 0.0
        %379 = vmatpush1.msra.mxu0 %v262
        %380 = vmatprep.subr.mxu0 0.0
        %381 = vmatpush1.msra.mxu0 %v261
        %382 = vmatprep.subr.mxu0 0.0
        %383 = vmatpush1.msra.mxu0 %v260
        %384 = vmatprep.subr.mxu0 0.0
        %385 = vmatpush1.msra.mxu0 %v259
        %386 = vmatprep.subr.mxu0 0.0
        %387 = vmatpush1.msra.mxu0 %v258
        %388 = vmatprep.subr.mxu0 0.0
        %389 = vmatpush1.msra.mxu0 %v257
        %390 = vmatprep.subr.mxu0 0.0
        %391 = vmatpush1.msra.mxu0 %v256
        %392 = vmatprep.subr.mxu0 0.0
        %393 = vmatpush1.msra.mxu0 %v255
        %394 = vmatprep.subr.mxu0 0.0
        %395 = vmatpush1.msra.mxu0 %v254
        %396 = vmatprep.subr.mxu0 0.0
        %397 = vmatpush1.msra.mxu0 %v253
        %398 = vmatprep.subr.mxu0 0.0
        %399 = vmatpush1.msra.mxu0 %v252
        %400 = vmatprep.subr.mxu0 0.0
        %401 = vmatpush1.msra.mxu0 %v251
        %402 = vmatprep.subr.mxu0 0.0
        %403 = vmatpush1.msra.mxu0 %v250
        %404 = vmatprep.subr.mxu0 0.0
        %405 = vmatpush1.msra.mxu0 %v249
        %406 = vmatprep.subr.mxu0 0.0
        %407 = vmatpush1.msra.mxu0 %v248
        %408 = vmatprep.subr.mxu0 0.0
        %409 = vmatpush2.msra.mxu0 0.0
        %410 = vmatprep.subr.mxu0 0.0
        %411 = vmatpush2.msra.mxu0 0.0
        %412 = vmatprep.subr.mxu0 0.0
        %413 = vmatpush2.msra.mxu0 0.0
        %414 = vmatprep.subr.mxu0 0.0
        %415 = vmatpush2.msra.mxu0 0.0
        %416 = vmatprep.subr.mxu0 0.0
        %417 = vmatpush2.msra.mxu0 0.0
        %418 = vmatprep.subr.mxu0 0.0
        %419 = vmatpush2.msra.mxu0 0.0
        %420 = vmatprep.subr.mxu0 0.0
        %421 = vmatpush2.msra.mxu0 0.0
        %422 = vmatprep.subr.mxu0 0.0
        %423 = vmatpush2.msra.mxu0 0.0
        %424 = vmatprep.subr.mxu0 0.0
        %425 = vmatpush2.msra.mxu0 0.0
        %426 = vmatprep.subr.mxu0 0.0
        %427 = vmatpush2.msra.mxu0 0.0
        %428 = vmatprep.subr.mxu0 0.0
        %429 = vmatpush2.msra.mxu0 0.0
        %430 = vmatprep.subr.mxu0 0.0
        %431 = vmatpush2.msra.mxu0 0.0
        %432 = vmatprep.subr.mxu0 0.0
        %433 = vmatpush2.msra.mxu0 0.0
        %434 = vmatprep.subr.mxu0 0.0
        %435 = vmatpush2.msra.mxu0 0.0
        %436 = vmatprep.subr.mxu0 0.0
        %437 = vmatpush2.msra.mxu0 0.0
        %438 = vmatprep.subr.mxu0 0.0
        %439 = vmatpush2.msra.mxu0 0.0
        %440 = vmatprep.mubr.f32.mxu0 0.0
        %441 = vmatmul.mubr.f32.gmra.mxu0 %v247
        %v442 = vpop.f32.mrf.mxu0
        %v443 = vadd.f32 0.0, %v442
        %v444 = vpop.f32.mrf.mxu0
        %445 = vdwg.mxu0
        %446 = vmatprep.subr.mxu0 0.0
        %447 = vmatpush1.msra.mxu0 %v279
        %448 = vmatprep.subr.mxu0 0.0
        %449 = vmatpush1.msra.mxu0 %v278
        %450 = vmatprep.subr.mxu0 0.0
        %451 = vmatpush1.msra.mxu0 %v277
        %452 = vmatprep.subr.mxu0 0.0
        %453 = vmatpush1.msra.mxu0 %v276
        %454 = vmatprep.subr.mxu0 0.0
        %455 = vmatpush1.msra.mxu0 %v275
        %456 = vmatprep.subr.mxu0 0.0
        %457 = vmatpush1.msra.mxu0 %v274
        %458 = vmatprep.subr.mxu0 0.0
        %459 = vmatpush1.msra.mxu0 %v273
        %460 = vmatprep.subr.mxu0 0.0
        %461 = vmatpush1.msra.mxu0 %v272
        %462 = vmatprep.subr.mxu0 0.0
        %463 = vmatpush1.msra.mxu0 %v271
        %464 = vmatprep.subr.mxu0 0.0
        %465 = vmatpush1.msra.mxu0 %v270
        %466 = vmatprep.subr.mxu0 0.0
        %467 = vmatpush1.msra.mxu0 %v269
        %468 = vmatprep.subr.mxu0 0.0
        %469 = vmatpush1.msra.mxu0 %v268
        %470 = vmatprep.subr.mxu0 0.0
        %471 = vmatpush1.msra.mxu0 %v267
        %472 = vmatprep.subr.mxu0 0.0
        %473 = vmatpush1.msra.mxu0 %v266
        %474 = vmatprep.subr.mxu0 0.0
        %475 = vmatpush1.msra.mxu0 %v265
        %476 = vmatprep.subr.mxu0 0.0
        %477 = vmatpush1.msra.mxu0 %v264
        %478 = vmatprep.subr.mxu0 0.0
        %479 = vmatpush2.msra.mxu0 0.0
        %480 = vmatprep.subr.mxu0 0.0
        %481 = vmatpush2.msra.mxu0 0.0
        %482 = vmatprep.subr.mxu0 0.0
        %483 = vmatpush2.msra.mxu0 0.0
        %484 = vmatprep.subr.mxu0 0.0
        %485 = vmatpush2.msra.mxu0 0.0
        %486 = vmatprep.subr.mxu0 0.0
        %487 = vmatpush2.msra.mxu0 0.0
        %488 = vmatprep.subr.mxu0 0.0
        %489 = vmatpush2.msra.mxu0 0.0
        %490 = vmatprep.subr.mxu0 0.0
        %491 = vmatpush2.msra.mxu0 0.0
        %492 = vmatprep.subr.mxu0 0.0
        %493 = vmatpush2.msra.mxu0 0.0
        %494 = vmatprep.subr.mxu0 0.0
        %495 = vmatpush2.msra.mxu0 0.0
        %496 = vmatprep.subr.mxu0 0.0
        %497 = vmatpush2.msra.mxu0 0.0
        %498 = vmatprep.subr.mxu0 0.0
        %499 = vmatpush2.msra.mxu0 0.0
        %500 = vmatprep.subr.mxu0 0.0
        %501 = vmatpush2.msra.mxu0 0.0
        %502 = vmatprep.subr.mxu0 0.0
        %503 = vmatpush2.msra.mxu0 0.0
        %504 = vmatprep.subr.mxu0 0.0
        %505 = vmatpush2.msra.mxu0 0.0
        %506 = vmatprep.subr.mxu0 0.0
        %507 = vmatpush2.msra.mxu0 0.0
        %508 = vmatprep.subr.mxu0 0.0
        %509 = vmatpush2.msra.mxu0 0.0
        %510 = vmatprep.mubr.f32.mxu0 0.0
        %511 = vmatmul.mubr.f32.gmra.mxu0 %v247
        %v512 = vpop.f32.mrf.mxu0
        %v513 = vadd.f32 0.0, %v512
        %v514 = vpop.f32.mrf.mxu0
        %515 = vdwg.mxu0
        %516 = vmatprep.subr.mxu0 0.0
        %517 = vmatpush1.msra.mxu0 %v295
        %518 = vmatprep.subr.mxu0 0.0
        %519 = vmatpush1.msra.mxu0 %v294
        %520 = vmatprep.subr.mxu0 0.0
        %521 = vmatpush1.msra.mxu0 %v293
        %522 = vmatprep.subr.mxu0 0.0
        %523 = vmatpush1.msra.mxu0 %v292
        %524 = vmatprep.subr.mxu0 0.0
        %525 = vmatpush1.msra.mxu0 %v291
        %526 = vmatprep.subr.mxu0 0.0
        %527 = vmatpush1.msra.mxu0 %v290
        %528 = vmatprep.subr.mxu0 0.0
        %529 = vmatpush1.msra.mxu0 %v289
        %530 = vmatprep.subr.mxu0 0.0
        %531 = vmatpush1.msra.mxu0 %v288
        %532 = vmatprep.subr.mxu0 0.0
        %533 = vmatpush1.msra.mxu0 %v287
        %534 = vmatprep.subr.mxu0 0.0
        %535 = vmatpush1.msra.mxu0 %v286
        %536 = vmatprep.subr.mxu0 0.0
        %537 = vmatpush1.msra.mxu0 %v285
        %538 = vmatprep.subr.mxu0 0.0
        %539 = vmatpush1.msra.mxu0 %v284
        %540 = vmatprep.subr.mxu0 0.0
        %541 = vmatpush1.msra.mxu0 %v283
        %542 = vmatprep.subr.mxu0 0.0
        %543 = vmatpush1.msra.mxu0 %v282
        %544 = vmatprep.subr.mxu0 0.0
        %545 = vmatpush1.msra.mxu0 %v281
        %546 = vmatprep.subr.mxu0 0.0
        %547 = vmatpush1.msra.mxu0 %v280
        %548 = vmatprep.subr.mxu0 0.0
        %549 = vmatpush2.msra.mxu0 0.0
        %550 = vmatprep.subr.mxu0 0.0
        %551 = vmatpush2.msra.mxu0 0.0
        %552 = vmatprep.subr.mxu0 0.0
        %553 = vmatpush2.msra.mxu0 0.0
        %554 = vmatprep.subr.mxu0 0.0
        %555 = vmatpush2.msra.mxu0 0.0
        %556 = vmatprep.subr.mxu0 0.0
        %557 = vmatpush2.msra.mxu0 0.0
        %558 = vmatprep.subr.mxu0 0.0
        %559 = vmatpush2.msra.mxu0 0.0
        %560 = vmatprep.subr.mxu0 0.0
        %561 = vmatpush2.msra.mxu0 0.0
        %562 = vmatprep.subr.mxu0 0.0
        %563 = vmatpush2.msra.mxu0 0.0
        %564 = vmatprep.subr.mxu0 0.0
        %565 = vmatpush2.msra.mxu0 0.0
        %566 = vmatprep.subr.mxu0 0.0
        %567 = vmatpush2.msra.mxu0 0.0
        %568 = vmatprep.subr.mxu0 0.0
        %569 = vmatpush2.msra.mxu0 0.0
        %570 = vmatprep.subr.mxu0 0.0
        %571 = vmatpush2.msra.mxu0 0.0
        %572 = vmatprep.subr.mxu0 0.0
        %573 = vmatpush2.msra.mxu0 0.0
        %574 = vmatprep.subr.mxu0 0.0
        %575 = vmatpush2.msra.mxu0 0.0
        %576 = vmatprep.subr.mxu0 0.0
        %577 = vmatpush2.msra.mxu0 0.0
        %578 = vmatprep.subr.mxu0 0.0
        %579 = vmatpush2.msra.mxu0 0.0
        %580 = vmatprep.mubr.f32.mxu0 0.0
        %581 = vmatmul.mubr.f32.gmra.mxu0 %v247
        %v582 = vpop.f32.mrf.mxu0
        %v583 = vadd.f32 0.0, %v582
        %v584 = vpop.f32.mrf.mxu0
        %585 = vdwg.mxu0
        %586 = vmatprep.subr.mxu0 0.0
        %587 = vmatpush1.msra.mxu0 %v311
        %588 = vmatprep.subr.mxu0 0.0
        %589 = vmatpush1.msra.mxu0 %v310
        %590 = vmatprep.subr.mxu0 0.0
        %591 = vmatpush1.msra.mxu0 %v309
        %592 = vmatprep.subr.mxu0 0.0
        %593 = vmatpush1.msra.mxu0 %v308
        %594 = vmatprep.subr.mxu0 0.0
        %595 = vmatpush1.msra.mxu0 %v307
        %596 = vmatprep.subr.mxu0 0.0
        %597 = vmatpush1.msra.mxu0 %v306
        %598 = vmatprep.subr.mxu0 0.0
        %599 = vmatpush1.msra.mxu0 %v305
        %600 = vmatprep.subr.mxu0 0.0
        %601 = vmatpush1.msra.mxu0 %v304
        %602 = vmatprep.subr.mxu0 0.0
        %603 = vmatpush1.msra.mxu0 %v303
        %604 = vmatprep.subr.mxu0 0.0
        %605 = vmatpush1.msra.mxu0 %v302
        %606 = vmatprep.subr.mxu0 0.0
        %607 = vmatpush1.msra.mxu0 %v301
        %608 = vmatprep.subr.mxu0 0.0
        %609 = vmatpush1.msra.mxu0 %v300
        %610 = vmatprep.subr.mxu0 0.0
        %611 = vmatpush1.msra.mxu0 %v299
        %612 = vmatprep.subr.mxu0 0.0
        %613 = vmatpush1.msra.mxu0 %v298
        %614 = vmatprep.subr.mxu0 0.0
        %615 = vmatpush1.msra.mxu0 %v297
        %616 = vmatprep.subr.mxu0 0.0
        %617 = vmatpush1.msra.mxu0 %v296
        %618 = vmatprep.subr.mxu0 0.0
        %619 = vmatpush2.msra.mxu0 0.0
        %620 = vmatprep.subr.mxu0 0.0
        %621 = vmatpush2.msra.mxu0 0.0
        %622 = vmatprep.subr.mxu0 0.0
        %623 = vmatpush2.msra.mxu0 0.0
        %624 = vmatprep.subr.mxu0 0.0
        %625 = vmatpush2.msra.mxu0 0.0
        %626 = vmatprep.subr.mxu0 0.0
        %627 = vmatpush2.msra.mxu0 0.0
        %628 = vmatprep.subr.mxu0 0.0
        %629 = vmatpush2.msra.mxu0 0.0
        %630 = vmatprep.subr.mxu0 0.0
        %631 = vmatpush2.msra.mxu0 0.0
        %632 = vmatprep.subr.mxu0 0.0
        %633 = vmatpush2.msra.mxu0 0.0
        %634 = vmatprep.subr.mxu0 0.0
        %635 = vmatpush2.msra.mxu0 0.0
        %636 = vmatprep.subr.mxu0 0.0
        %637 = vmatpush2.msra.mxu0 0.0
        %638 = vmatprep.subr.mxu0 0.0
        %639 = vmatpush2.msra.mxu0 0.0
        %640 = vmatprep.subr.mxu0 0.0
        %641 = vmatpush2.msra.mxu0 0.0
        %642 = vmatprep.subr.mxu0 0.0
        %643 = vmatpush2.msra.mxu0 0.0
        %644 = vmatprep.subr.mxu0 0.0
        %645 = vmatpush2.msra.mxu0 0.0
        %646 = vmatprep.subr.mxu0 0.0
        %647 = vmatpush2.msra.mxu0 0.0
        %648 = vmatprep.subr.mxu0 0.0
        %649 = vmatpush2.msra.mxu0 0.0
        %650 = vmatprep.mubr.f32.mxu0 0.0
        %651 = vmatmul.mubr.f32.gmra.mxu0 %v247
        %v652 = vpop.f32.mrf.mxu0
        %v653 = vadd.f32 0.0, %v652
        %v654 = vpop.f32.mrf.mxu0
        %655 = vdwg.mxu0
        %656 = vmatprep.subr.mxu0 0.0
        %657 = vmatpush1.msra.mxu0 %v327
        %658 = vmatprep.subr.mxu0 0.0
        %659 = vmatpush1.msra.mxu0 %v326
        %660 = vmatprep.subr.mxu0 0.0
        %661 = vmatpush1.msra.mxu0 %v325
        %662 = vmatprep.subr.mxu0 0.0
        %663 = vmatpush1.msra.mxu0 %v324
        %664 = vmatprep.subr.mxu0 0.0
        %665 = vmatpush1.msra.mxu0 %v323
        %666 = vmatprep.subr.mxu0 0.0
        %667 = vmatpush1.msra.mxu0 %v322
        %668 = vmatprep.subr.mxu0 0.0
        %669 = vmatpush1.msra.mxu0 %v321
        %670 = vmatprep.subr.mxu0 0.0
        %671 = vmatpush1.msra.mxu0 %v320
        %672 = vmatprep.subr.mxu0 0.0
        %673 = vmatpush1.msra.mxu0 %v319
        %674 = vmatprep.subr.mxu0 0.0
        %675 = vmatpush1.msra.mxu0 %v318
        %676 = vmatprep.subr.mxu0 0.0
        %677 = vmatpush1.msra.mxu0 %v317
        %678 = vmatprep.subr.mxu0 0.0
        %679 = vmatpush1.msra.mxu0 %v316
        %680 = vmatprep.subr.mxu0 0.0
        %681 = vmatpush1.msra.mxu0 %v315
        %682 = vmatprep.subr.mxu0 0.0
        %683 = vmatpush1.msra.mxu0 %v314
        %684 = vmatprep.subr.mxu0 0.0
        %685 = vmatpush1.msra.mxu0 %v313
        %686 = vmatprep.subr.mxu0 0.0
        %687 = vmatpush1.msra.mxu0 %v312
        %688 = vmatprep.subr.mxu0 0.0
        %689 = vmatpush2.msra.mxu0 0.0
        %690 = vmatprep.subr.mxu0 0.0
        %691 = vmatpush2.msra.mxu0 0.0
        %692 = vmatprep.subr.mxu0 0.0
        %693 = vmatpush2.msra.mxu0 0.0
        %694 = vmatprep.subr.mxu0 0.0
        %695 = vmatpush2.msra.mxu0 0.0
        %696 = vmatprep.subr.mxu0 0.0
        %697 = vmatpush2.msra.mxu0 0.0
        %698 = vmatprep.subr.mxu0 0.0
        %699 = vmatpush2.msra.mxu0 0.0
        %700 = vmatprep.subr.mxu0 0.0
        %701 = vmatpush2.msra.mxu0 0.0
        %702 = vmatprep.subr.mxu0 0.0
        %703 = vmatpush2.msra.mxu0 0.0
        %704 = vmatprep.subr.mxu0 0.0
        %705 = vmatpush2.msra.mxu0 0.0
        %706 = vmatprep.subr.mxu0 0.0
        %707 = vmatpush2.msra.mxu0 0.0
        %708 = vmatprep.subr.mxu0 0.0
        %709 = vmatpush2.msra.mxu0 0.0
        %710 = vmatprep.subr.mxu0 0.0
        %711 = vmatpush2.msra.mxu0 0.0
        %712 = vmatprep.subr.mxu0 0.0
        %713 = vmatpush2.msra.mxu0 0.0
        %714 = vmatprep.subr.mxu0 0.0
        %715 = vmatpush2.msra.mxu0 0.0
        %716 = vmatprep.subr.mxu0 0.0
        %717 = vmatpush2.msra.mxu0 0.0
        %718 = vmatprep.subr.mxu0 0.0
        %719 = vmatpush2.msra.mxu0 0.0
        %720 = vmatprep.mubr.f32.mxu0 0.0
        %721 = vmatmul.mubr.f32.gmra.mxu0 %v247
        %v722 = vpop.f32.mrf.mxu0
        %v723 = vadd.f32 0.0, %v722
        %v724 = vpop.f32.mrf.mxu0
        %725 = vdwg.mxu0
        %726 = vmatprep.subr.mxu0 0.0
        %727 = vmatpush1.msra.mxu0 %v343
        %728 = vmatprep.subr.mxu0 0.0
        %729 = vmatpush1.msra.mxu0 %v342
        %730 = vmatprep.subr.mxu0 0.0
        %731 = vmatpush1.msra.mxu0 %v341
        %732 = vmatprep.subr.mxu0 0.0
        %733 = vmatpush1.msra.mxu0 %v340
        %734 = vmatprep.subr.mxu0 0.0
        %735 = vmatpush1.msra.mxu0 %v339
        %736 = vmatprep.subr.mxu0 0.0
        %737 = vmatpush1.msra.mxu0 %v338
        %738 = vmatprep.subr.mxu0 0.0
        %739 = vmatpush1.msra.mxu0 %v337
        %740 = vmatprep.subr.mxu0 0.0
        %741 = vmatpush1.msra.mxu0 %v336
        %742 = vmatprep.subr.mxu0 0.0
        %743 = vmatpush1.msra.mxu0 %v335
        %744 = vmatprep.subr.mxu0 0.0
        %745 = vmatpush1.msra.mxu0 %v334
        %746 = vmatprep.subr.mxu0 0.0
        %747 = vmatpush1.msra.mxu0 %v333
        %748 = vmatprep.subr.mxu0 0.0
        %749 = vmatpush1.msra.mxu0 %v332
        %750 = vmatprep.subr.mxu0 0.0
        %751 = vmatpush1.msra.mxu0 %v331
        %752 = vmatprep.subr.mxu0 0.0
        %753 = vmatpush1.msra.mxu0 %v330
        %754 = vmatprep.subr.mxu0 0.0
        %755 = vmatpush1.msra.mxu0 %v329
        %756 = vmatprep.subr.mxu0 0.0
        %757 = vmatpush1.msra.mxu0 %v328
        %758 = vmatprep.subr.mxu0 0.0
        %759 = vmatpush2.msra.mxu0 0.0
        %760 = vmatprep.subr.mxu0 0.0
        %761 = vmatpush2.msra.mxu0 0.0
        %762 = vmatprep.subr.mxu0 0.0
        %763 = vmatpush2.msra.mxu0 0.0
        %764 = vmatprep.subr.mxu0 0.0
        %765 = vmatpush2.msra.mxu0 0.0
        %766 = vmatprep.subr.mxu0 0.0
        %767 = vmatpush2.msra.mxu0 0.0
        %768 = vmatprep.subr.mxu0 0.0
        %769 = vmatpush2.msra.mxu0 0.0
        %770 = vmatprep.subr.mxu0 0.0
        %771 = vmatpush2.msra.mxu0 0.0
        %772 = vmatprep.subr.mxu0 0.0
        %773 = vmatpush2.msra.mxu0 0.0
        %774 = vmatprep.subr.mxu0 0.0
        %775 = vmatpush2.msra.mxu0 0.0
        %776 = vmatprep.subr.mxu0 0.0
        %777 = vmatpush2.msra.mxu0 0.0
        %778 = vmatprep.subr.mxu0 0.0
        %779 = vmatpush2.msra.mxu0 0.0
        %780 = vmatprep.subr.mxu0 0.0
        %781 = vmatpush2.msra.mxu0 0.0
        %782 = vmatprep.subr.mxu0 0.0
        %783 = vmatpush2.msra.mxu0 0.0
        %784 = vmatprep.subr.mxu0 0.0
        %785 = vmatpush2.msra.mxu0 0.0
        %786 = vmatprep.subr.mxu0 0.0
        %787 = vmatpush2.msra.mxu0 0.0
        %788 = vmatprep.subr.mxu0 0.0
        %789 = vmatpush2.msra.mxu0 0.0
        %790 = vmatprep.mubr.f32.mxu0 0.0
        %791 = vmatmul.mubr.f32.gmra.mxu0 %v247
        %v792 = vpop.f32.mrf.mxu0
        %v793 = vadd.f32 0.0, %v792
        %v794 = vpop.f32.mrf.mxu0
        %795 = vdwg.mxu0
        %796 = vmatprep.subr.mxu0 0.0
        %797 = vmatpush1.msra.mxu0 %v359
        %798 = vmatprep.subr.mxu0 0.0
        %799 = vmatpush1.msra.mxu0 %v358
        %800 = vmatprep.subr.mxu0 0.0
        %801 = vmatpush1.msra.mxu0 %v357
        %802 = vmatprep.subr.mxu0 0.0
        %803 = vmatpush1.msra.mxu0 %v356
        %804 = vmatprep.subr.mxu0 0.0
        %805 = vmatpush1.msra.mxu0 %v355
        %806 = vmatprep.subr.mxu0 0.0
        %807 = vmatpush1.msra.mxu0 %v354
        %808 = vmatprep.subr.mxu0 0.0
        %809 = vmatpush1.msra.mxu0 %v353
        %810 = vmatprep.subr.mxu0 0.0
        %811 = vmatpush1.msra.mxu0 %v352
        %812 = vmatprep.subr.mxu0 0.0
        %813 = vmatpush1.msra.mxu0 %v351
        %814 = vmatprep.subr.mxu0 0.0
        %815 = vmatpush1.msra.mxu0 %v350
        %816 = vmatprep.subr.mxu0 0.0
        %817 = vmatpush1.msra.mxu0 %v349
        %818 = vmatprep.subr.mxu0 0.0
        %819 = vmatpush1.msra.mxu0 %v348
        %820 = vmatprep.subr.mxu0 0.0
        %821 = vmatpush1.msra.mxu0 %v347
        %822 = vmatprep.subr.mxu0 0.0
        %823 = vmatpush1.msra.mxu0 %v346
        %824 = vmatprep.subr.mxu0 0.0
        %825 = vmatpush1.msra.mxu0 %v345
        %826 = vmatprep.subr.mxu0 0.0
        %827 = vmatpush1.msra.mxu0 %v344
        %828 = vmatprep.subr.mxu0 0.0
        %829 = vmatpush2.msra.mxu0 0.0
        %830 = vmatprep.subr.mxu0 0.0
        %831 = vmatpush2.msra.mxu0 0.0
        %832 = vmatprep.subr.mxu0 0.0
        %833 = vmatpush2.msra.mxu0 0.0
        %834 = vmatprep.subr.mxu0 0.0
        %835 = vmatpush2.msra.mxu0 0.0
        %836 = vmatprep.subr.mxu0 0.0
        %837 = vmatpush2.msra.mxu0 0.0
        %838 = vmatprep.subr.mxu0 0.0
        %839 = vmatpush2.msra.mxu0 0.0
        %840 = vmatprep.subr.mxu0 0.0
        %841 = vmatpush2.msra.mxu0 0.0
        %842 = vmatprep.subr.mxu0 0.0
        %843 = vmatpush2.msra.mxu0 0.0
        %844 = vmatprep.subr.mxu0 0.0
        %845 = vmatpush2.msra.mxu0 0.0
        %846 = vmatprep.subr.mxu0 0.0
        %847 = vmatpush2.msra.mxu0 0.0
        %848 = vmatprep.subr.mxu0 0.0
        %849 = vmatpush2.msra.mxu0 0.0
        %850 = vmatprep.subr.mxu0 0.0
        %851 = vmatpush2.msra.mxu0 0.0
        %852 = vmatprep.subr.mxu0 0.0
        %853 = vmatpush2.msra.mxu0 0.0
        %854 = vmatprep.subr.mxu0 0.0
        %855 = vmatpush2.msra.mxu0 0.0
        %856 = vmatprep.subr.mxu0 0.0
        %857 = vmatpush2.msra.mxu0 0.0
        %858 = vmatprep.subr.mxu0 0.0
        %859 = vmatpush2.msra.mxu0 0.0
        %860 = vmatprep.mubr.f32.mxu0 0.0
        %861 = vmatmul.mubr.f32.gmra.mxu0 %v247
        %v862 = vpop.f32.mrf.mxu0
        %v863 = vadd.f32 0.0, %v862
        %v864 = vpop.f32.mrf.mxu0
        %865 = vdwg.mxu0
        %866 = vmatprep.subr.mxu0 0.0
        %867 = vmatpush1.msra.mxu0 %v375
        %868 = vmatprep.subr.mxu0 0.0
        %869 = vmatpush1.msra.mxu0 %v374
        %870 = vmatprep.subr.mxu0 0.0
        %871 = vmatpush1.msra.mxu0 %v373
        %872 = vmatprep.subr.mxu0 0.0
        %873 = vmatpush1.msra.mxu0 %v372
        %874 = vmatprep.subr.mxu0 0.0
        %875 = vmatpush1.msra.mxu0 %v371
        %876 = vmatprep.subr.mxu0 0.0
        %877 = vmatpush1.msra.mxu0 %v370
        %878 = vmatprep.subr.mxu0 0.0
        %879 = vmatpush1.msra.mxu0 %v369
        %880 = vmatprep.subr.mxu0 0.0
        %881 = vmatpush1.msra.mxu0 %v368
        %882 = vmatprep.subr.mxu0 0.0
        %883 = vmatpush1.msra.mxu0 %v367
        %884 = vmatprep.subr.mxu0 0.0
        %885 = vmatpush1.msra.mxu0 %v366
        %886 = vmatprep.subr.mxu0 0.0
        %887 = vmatpush1.msra.mxu0 %v365
        %888 = vmatprep.subr.mxu0 0.0
        %889 = vmatpush1.msra.mxu0 %v364
        %890 = vmatprep.subr.mxu0 0.0
        %891 = vmatpush1.msra.mxu0 %v363
        %892 = vmatprep.subr.mxu0 0.0
        %893 = vmatpush1.msra.mxu0 %v362
        %894 = vmatprep.subr.mxu0 0.0
        %895 = vmatpush1.msra.mxu0 %v361
        %896 = vmatprep.subr.mxu0 0.0
        %897 = vmatpush1.msra.mxu0 %v360
        %898 = vmatprep.subr.mxu0 0.0
        %899 = vmatpush2.msra.mxu0 0.0
        %900 = vmatprep.subr.mxu0 0.0
        %901 = vmatpush2.msra.mxu0 0.0
        %902 = vmatprep.subr.mxu0 0.0
        %903 = vmatpush2.msra.mxu0 0.0
        %904 = vmatprep.subr.mxu0 0.0
        %905 = vmatpush2.msra.mxu0 0.0
        %906 = vmatprep.subr.mxu0 0.0
        %907 = vmatpush2.msra.mxu0 0.0
        %908 = vmatprep.subr.mxu0 0.0
        %909 = vmatpush2.msra.mxu0 0.0
        %910 = vmatprep.subr.mxu0 0.0
        %911 = vmatpush2.msra.mxu0 0.0
        %912 = vmatprep.subr.mxu0 0.0
        %913 = vmatpush2.msra.mxu0 0.0
        %914 = vmatprep.subr.mxu0 0.0
        %915 = vmatpush2.msra.mxu0 0.0
        %916 = vmatprep.subr.mxu0 0.0
        %917 = vmatpush2.msra.mxu0 0.0
        %918 = vmatprep.subr.mxu0 0.0
        %919 = vmatpush2.msra.mxu0 0.0
        %920 = vmatprep.subr.mxu0 0.0
        %921 = vmatpush2.msra.mxu0 0.0
        %922 = vmatprep.subr.mxu0 0.0
        %923 = vmatpush2.msra.mxu0 0.0
        %924 = vmatprep.subr.mxu0 0.0
        %925 = vmatpush2.msra.mxu0 0.0
        %926 = vmatprep.subr.mxu0 0.0
        %927 = vmatpush2.msra.mxu0 0.0
        %928 = vmatprep.subr.mxu0 0.0
        %929 = vmatpush2.msra.mxu0 0.0
        %930 = vmatprep.mubr.f32.mxu0 0.0
        %931 = vmatmul.mubr.f32.gmra.mxu0 %v247
        %v932 = vpop.f32.mrf.mxu0
        %v933 = vadd.f32 0.0, %v932
        %v934 = vpop.f32.mrf.mxu0
        %935 = vdwg.mxu0
        %v936 = vmul.f32 %v443, 0.25
        %v937 = vmul.f32 %v513, 0.25
        %v938 = vmul.f32 %v583, 0.25
        %v939 = vmul.f32 %v653, 0.25
        %v940 = vmul.f32 %v723, 0.25
        %v941 = vmul.f32 %v793, 0.25
        %v942 = vmul.f32 %v863, 0.25
        %v943 = vmul.f32 %v933, 0.25
        %v944 = vld [vmem:[%s2] sm:$0xff]
        %v945 = vld [vmem:[%s2 + $0x8] sm:$0xff]
        %v946 = vld [vmem:[%s2 + $0x10] sm:$0xff]
        %v947 = vld [vmem:[%s2 + $0x18] sm:$0xff]
        %v948 = vld [vmem:[%s2 + $0x20] sm:$0xff]
        %v949 = vld [vmem:[%s2 + $0x28] sm:$0xff]
        %v950 = vld [vmem:[%s2 + $0x30] sm:$0xff]
        %v951 = vld [vmem:[%s2 + $0x38] sm:$0xff]
        %v952 = vld [vmem:[%s2 + $0x40] sm:$0xff]
        %v953 = vld [vmem:[%s2 + $0x48] sm:$0xff]
        %v954 = vld [vmem:[%s2 + $0x50] sm:$0xff]
        %v955 = vld [vmem:[%s2 + $0x58] sm:$0xff]
        %v956 = vld [vmem:[%s2 + $0x60] sm:$0xff]
        %v957 = vld [vmem:[%s2 + $0x68] sm:$0xff]
        %v958 = vld [vmem:[%s2 + $0x70] sm:$0xff]
        %v959 = vld [vmem:[%s2 + $0x78] sm:$0xff]
        %v960 = vld [vmem:[%s2 + $0x80] sm:$0xff]
        %v961 = vld [vmem:[%s2 + $0x88] sm:$0xff]
        %v962 = vld [vmem:[%s2 + $0x90] sm:$0xff]
        %v963 = vld [vmem:[%s2 + $0x98] sm:$0xff]
        %v964 = vld [vmem:[%s2 + $0xa0] sm:$0xff]
        %v965 = vld [vmem:[%s2 + $0xa8] sm:$0xff]
        %v966 = vld [vmem:[%s2 + $0xb0] sm:$0xff]
        %v967 = vld [vmem:[%s2 + $0xb8] sm:$0xff]
        %v968 = vld [vmem:[%s2 + $0xc0] sm:$0xff]
        %v969 = vld [vmem:[%s2 + $0xc8] sm:$0xff]
        %v970 = vld [vmem:[%s2 + $0xd0] sm:$0xff]
        %v971 = vld [vmem:[%s2 + $0xd8] sm:$0xff]
        %v972 = vld [vmem:[%s2 + $0xe0] sm:$0xff]
        %v973 = vld [vmem:[%s2 + $0xe8] sm:$0xff]
        %v974 = vld [vmem:[%s2 + $0xf0] sm:$0xff]
        %v975 = vld [vmem:[%s2 + $0xf8] sm:$0xff]
        %v976 = vld [vmem:[%s2 + $0x100] sm:$0xff]
        %v977 = vld [vmem:[%s2 + $0x108] sm:$0xff]
        %v978 = vld [vmem:[%s2 + $0x110] sm:$0xff]
        %v979 = vld [vmem:[%s2 + $0x118] sm:$0xff]
        %v980 = vld [vmem:[%s2 + $0x120] sm:$0xff]
        %v981 = vld [vmem:[%s2 + $0x128] sm:$0xff]
        %v982 = vld [vmem:[%s2 + $0x130] sm:$0xff]
        %v983 = vld [vmem:[%s2 + $0x138] sm:$0xff]
        %v984 = vld [vmem:[%s2 + $0x140] sm:$0xff]
        %v985 = vld [vmem:[%s2 + $0x148] sm:$0xff]
        %v986 = vld [vmem:[%s2 + $0x150] sm:$0xff]
        %v987 = vld [vmem:[%s2 + $0x158] sm:$0xff]
        %v988 = vld [vmem:[%s2 + $0x160] sm:$0xff]
        %v989 = vld [vmem:[%s2 + $0x168] sm:$0xff]
        %v990 = vld [vmem:[%s2 + $0x170] sm:$0xff]
        %v991 = vld [vmem:[%s2 + $0x178] sm:$0xff]
        %v992 = vld [vmem:[%s2 + $0x180] sm:$0xff]
        %v993 = vld [vmem:[%s2 + $0x188] sm:$0xff]
        %v994 = vld [vmem:[%s2 + $0x190] sm:$0xff]
        %v995 = vld [vmem:[%s2 + $0x198] sm:$0xff]
        %v996 = vld [vmem:[%s2 + $0x1a0] sm:$0xff]
        %v997 = vld [vmem:[%s2 + $0x1a8] sm:$0xff]
        %v998 = vld [vmem:[%s2 + $0x1b0] sm:$0xff]
        %v999 = vld [vmem:[%s2 + $0x1b8] sm:$0xff]
        %v1000 = vld [vmem:[%s2 + $0x1c0] sm:$0xff]
        %v1001 = vld [vmem:[%s2 + $0x1c8] sm:$0xff]
        %v1002 = vld [vmem:[%s2 + $0x1d0] sm:$0xff]
        %v1003 = vld [vmem:[%s2 + $0x1d8] sm:$0xff]
        %v1004 = vld [vmem:[%s2 + $0x1e0] sm:$0xff]
        %v1005 = vld [vmem:[%s2 + $0x1e8] sm:$0xff]
        %v1006 = vld [vmem:[%s2 + $0x1f0] sm:$0xff]
        %v1007 = vld [vmem:[%s2 + $0x1f8] sm:$0xff]
        %v1008 = vld [vmem:[%s2 + $0x200] sm:$0xff]
        %v1009 = vld [vmem:[%s2 + $0x208] sm:$0xff]
        %v1010 = vld [vmem:[%s2 + $0x210] sm:$0xff]
        %v1011 = vld [vmem:[%s2 + $0x218] sm:$0xff]
        %v1012 = vld [vmem:[%s2 + $0x220] sm:$0xff]
        %v1013 = vld [vmem:[%s2 + $0x228] sm:$0xff]
        %v1014 = vld [vmem:[%s2 + $0x230] sm:$0xff]
        %v1015 = vld [vmem:[%s2 + $0x238] sm:$0xff]
        %v1016 = vld [vmem:[%s2 + $0x240] sm:$0xff]
        %v1017 = vld [vmem:[%s2 + $0x248] sm:$0xff]
        %v1018 = vld [vmem:[%s2 + $0x250] sm:$0xff]
        %v1019 = vld [vmem:[%s2 + $0x258] sm:$0xff]
        %v1020 = vld [vmem:[%s2 + $0x260] sm:$0xff]
        %v1021 = vld [vmem:[%s2 + $0x268] sm:$0xff]
        %v1022 = vld [vmem:[%s2 + $0x270] sm:$0xff]
        %v1023 = vld [vmem:[%s2 + $0x278] sm:$0xff]
        %v1024 = vld [vmem:[%s2 + $0x280] sm:$0xff]
        %v1025 = vld [vmem:[%s2 + $0x288] sm:$0xff]
        %v1026 = vld [vmem:[%s2 + $0x290] sm:$0xff]
        %v1027 = vld [vmem:[%s2 + $0x298] sm:$0xff]
        %v1028 = vld [vmem:[%s2 + $0x2a0] sm:$0xff]
        %v1029 = vld [vmem:[%s2 + $0x2a8] sm:$0xff]
        %v1030 = vld [vmem:[%s2 + $0x2b0] sm:$0xff]
        %v1031 = vld [vmem:[%s2 + $0x2b8] sm:$0xff]
        %v1032 = vld [vmem:[%s2 + $0x2c0] sm:$0xff]
        %v1033 = vld [vmem:[%s2 + $0x2c8] sm:$0xff]
        %v1034 = vld [vmem:[%s2 + $0x2d0] sm:$0xff]
        %v1035 = vld [vmem:[%s2 + $0x2d8] sm:$0xff]
        %v1036 = vld [vmem:[%s2 + $0x2e0] sm:$0xff]
        %v1037 = vld [vmem:[%s2 + $0x2e8] sm:$0xff]
        %v1038 = vld [vmem:[%s2 + $0x2f0] sm:$0xff]
        %v1039 = vld [vmem:[%s2 + $0x2f8] sm:$0xff]
        %v1040 = vld [vmem:[%s2 + $0x300] sm:$0xff]
        %v1041 = vld [vmem:[%s2 + $0x308] sm:$0xff]
        %v1042 = vld [vmem:[%s2 + $0x310] sm:$0xff]
        %v1043 = vld [vmem:[%s2 + $0x318] sm:$0xff]
        %v1044 = vld [vmem:[%s2 + $0x320] sm:$0xff]
        %v1045 = vld [vmem:[%s2 + $0x328] sm:$0xff]
        %v1046 = vld [vmem:[%s2 + $0x330] sm:$0xff]
        %v1047 = vld [vmem:[%s2 + $0x338] sm:$0xff]
        %v1048 = vld [vmem:[%s2 + $0x340] sm:$0xff]
        %v1049 = vld [vmem:[%s2 + $0x348] sm:$0xff]
        %v1050 = vld [vmem:[%s2 + $0x350] sm:$0xff]
        %v1051 = vld [vmem:[%s2 + $0x358] sm:$0xff]
        %v1052 = vld [vmem:[%s2 + $0x360] sm:$0xff]
        %v1053 = vld [vmem:[%s2 + $0x368] sm:$0xff]
        %v1054 = vld [vmem:[%s2 + $0x370] sm:$0xff]
        %v1055 = vld [vmem:[%s2 + $0x378] sm:$0xff]
        %v1056 = vld [vmem:[%s2 + $0x380] sm:$0xff]
        %v1057 = vld [vmem:[%s2 + $0x388] sm:$0xff]
        %v1058 = vld [vmem:[%s2 + $0x390] sm:$0xff]
        %v1059 = vld [vmem:[%s2 + $0x398] sm:$0xff]
        %v1060 = vld [vmem:[%s2 + $0x3a0] sm:$0xff]
        %v1061 = vld [vmem:[%s2 + $0x3a8] sm:$0xff]
        %v1062 = vld [vmem:[%s2 + $0x3b0] sm:$0xff]
        %v1063 = vld [vmem:[%s2 + $0x3b8] sm:$0xff]
        %v1064 = vld [vmem:[%s2 + $0x3c0] sm:$0xff]
        %v1065 = vld [vmem:[%s2 + $0x3c8] sm:$0xff]
        %v1066 = vld [vmem:[%s2 + $0x3d0] sm:$0xff]
        %v1067 = vld [vmem:[%s2 + $0x3d8] sm:$0xff]
        %v1068 = vld [vmem:[%s2 + $0x3e0] sm:$0xff]
        %v1069 = vld [vmem:[%s2 + $0x3e8] sm:$0xff]
        %v1070 = vld [vmem:[%s2 + $0x3f0] sm:$0xff]
        %v1071 = vld [vmem:[%s2 + $0x3f8] sm:$0xff]
        %1072 = vmatprep.subr.mxu0 0.0
        %1073 = vmatpush1.msra.mxu0 %v959
        %1074 = vmatprep.subr.mxu0 0.0
        %1075 = vmatpush1.msra.mxu0 %v958
        %1076 = vmatprep.subr.mxu0 0.0
        %1077 = vmatpush1.msra.mxu0 %v957
        %1078 = vmatprep.subr.mxu0 0.0
        %1079 = vmatpush1.msra.mxu0 %v956
        %1080 = vmatprep.subr.mxu0 0.0
        %1081 = vmatpush1.msra.mxu0 %v955
        %1082 = vmatprep.subr.mxu0 0.0
        %1083 = vmatpush1.msra.mxu0 %v954
        %1084 = vmatprep.subr.mxu0 0.0
        %1085 = vmatpush1.msra.mxu0 %v953
        %1086 = vmatprep.subr.mxu0 0.0
        %1087 = vmatpush1.msra.mxu0 %v952
        %1088 = vmatprep.subr.mxu0 0.0
        %1089 = vmatpush1.msra.mxu0 %v951
        %1090 = vmatprep.subr.mxu0 0.0
        %1091 = vmatpush1.msra.mxu0 %v950
        %1092 = vmatprep.subr.mxu0 0.0
        %1093 = vmatpush1.msra.mxu0 %v949
        %1094 = vmatprep.subr.mxu0 0.0
        %1095 = vmatpush1.msra.mxu0 %v948
        %1096 = vmatprep.subr.mxu0 0.0
        %1097 = vmatpush1.msra.mxu0 %v947
        %1098 = vmatprep.subr.mxu0 0.0
        %1099 = vmatpush1.msra.mxu0 %v946
        %1100 = vmatprep.subr.mxu0 0.0
        %1101 = vmatpush1.msra.mxu0 %v945
        %1102 = vmatprep.subr.mxu0 0.0
        %1103 = vmatpush1.msra.mxu0 %v944
        %1104 = vmatprep.subr.mxu0 0.0
        %1105 = vmatpush2.msra.mxu0 0.0
        %1106 = vmatprep.subr.mxu0 0.0
        %1107 = vmatpush2.msra.mxu0 0.0
        %1108 = vmatprep.subr.mxu0 0.0
        %1109 = vmatpush2.msra.mxu0 0.0
        %1110 = vmatprep.subr.mxu0 0.0
        %1111 = vmatpush2.msra.mxu0 0.0
        %1112 = vmatprep.subr.mxu0 0.0
        %1113 = vmatpush2.msra.mxu0 0.0
        %1114 = vmatprep.subr.mxu0 0.0
        %1115 = vmatpush2.msra.mxu0 0.0
        %1116 = vmatprep.subr.mxu0 0.0
        %1117 = vmatpush2.msra.mxu0 0.0
        %1118 = vmatprep.subr.mxu0 0.0
        %1119 = vmatpush2.msra.mxu0 0.0
        %1120 = vmatprep.subr.mxu0 0.0
        %1121 = vmatpush2.msra.mxu0 0.0
        %1122 = vmatprep.subr.mxu0 0.0
        %1123 = vmatpush2.msra.mxu0 0.0
        %1124 = vmatprep.subr.mxu0 0.0
        %1125 = vmatpush2.msra.mxu0 0.0
        %1126 = vmatprep.subr.mxu0 0.0
        %1127 = vmatpush2.msra.mxu0 0.0
        %1128 = vmatprep.subr.mxu0 0.0
        %1129 = vmatpush2.msra.mxu0 0.0
        %1130 = vmatprep.subr.mxu0 0.0
        %1131 = vmatpush2.msra.mxu0 0.0
        %1132 = vmatprep.subr.mxu0 0.0
        %1133 = vmatpush2.msra.mxu0 0.0
        %1134 = vmatprep.subr.mxu0 0.0
        %1135 = vmatpush2.msra.mxu0 0.0
        %1136 = vmatprep.mubr.f32.mxu0 0.0
        %1137 = vmatmul.mubr.f32.gmra.mxu0 %v247
        %v1138 = vpop.f32.mrf.mxu0
        %v1139 = vadd.f32 0.0, %v1138
        %v1140 = vpop.f32.mrf.mxu0
        %1141 = vdwg.mxu0
        %1142 = vmatprep.subr.mxu0 0.0
        %1143 = vmatpush1.msra.mxu0 %v975
        %1144 = vmatprep.subr.mxu0 0.0
        %1145 = vmatpush1.msra.mxu0 %v974
        %1146 = vmatprep.subr.mxu0 0.0
        %1147 = vmatpush1.msra.mxu0 %v973
        %1148 = vmatprep.subr.mxu0 0.0
        %1149 = vmatpush1.msra.mxu0 %v972
        %1150 = vmatprep.subr.mxu0 0.0
        %1151 = vmatpush1.msra.mxu0 %v971
        %1152 = vmatprep.subr.mxu0 0.0
        %1153 = vmatpush1.msra.mxu0 %v970
        %1154 = vmatprep.subr.mxu0 0.0
        %1155 = vmatpush1.msra.mxu0 %v969
        %1156 = vmatprep.subr.mxu0 0.0
        %1157 = vmatpush1.msra.mxu0 %v968
        %1158 = vmatprep.subr.mxu0 0.0
        %1159 = vmatpush1.msra.mxu0 %v967
        %1160 = vmatprep.subr.mxu0 0.0
        %1161 = vmatpush1.msra.mxu0 %v966
        %1162 = vmatprep.subr.mxu0 0.0
        %1163 = vmatpush1.msra.mxu0 %v965
        %1164 = vmatprep.subr.mxu0 0.0
        %1165 = vmatpush1.msra.mxu0 %v964
        %1166 = vmatprep.subr.mxu0 0.0
        %1167 = vmatpush1.msra.mxu0 %v963
        %1168 = vmatprep.subr.mxu0 0.0
        %1169 = vmatpush1.msra.mxu0 %v962
        %1170 = vmatprep.subr.mxu0 0.0
        %1171 = vmatpush1.msra.mxu0 %v961
        %1172 = vmatprep.subr.mxu0 0.0
        %1173 = vmatpush1.msra.mxu0 %v960
        %1174 = vmatprep.subr.mxu0 0.0
        %1175 = vmatpush2.msra.mxu0 0.0
        %1176 = vmatprep.subr.mxu0 0.0
        %1177 = vmatpush2.msra.mxu0 0.0
        %1178 = vmatprep.subr.mxu0 0.0
        %1179 = vmatpush2.msra.mxu0 0.0
        %1180 = vmatprep.subr.mxu0 0.0
        %1181 = vmatpush2.msra.mxu0 0.0
        %1182 = vmatprep.subr.mxu0 0.0
        %1183 = vmatpush2.msra.mxu0 0.0
        %1184 = vmatprep.subr.mxu0 0.0
        %1185 = vmatpush2.msra.mxu0 0.0
        %1186 = vmatprep.subr.mxu0 0.0
        %1187 = vmatpush2.msra.mxu0 0.0
        %1188 = vmatprep.subr.mxu0 0.0
        %1189 = vmatpush2.msra.mxu0 0.0
        %1190 = vmatprep.subr.mxu0 0.0
        %1191 = vmatpush2.msra.mxu0 0.0
        %1192 = vmatprep.subr.mxu0 0.0
        %1193 = vmatpush2.msra.mxu0 0.0
        %1194 = vmatprep.subr.mxu0 0.0
        %1195 = vmatpush2.msra.mxu0 0.0
        %1196 = vmatprep.subr.mxu0 0.0
        %1197 = vmatpush2.msra.mxu0 0.0
        %1198 = vmatprep.subr.mxu0 0.0
        %1199 = vmatpush2.msra.mxu0 0.0
        %1200 = vmatprep.subr.mxu0 0.0
        %1201 = vmatpush2.msra.mxu0 0.0
        %1202 = vmatprep.subr.mxu0 0.0
        %1203 = vmatpush2.msra.mxu0 0.0
        %1204 = vmatprep.subr.mxu0 0.0
        %1205 = vmatpush2.msra.mxu0 0.0
        %1206 = vmatprep.mubr.f32.mxu0 0.0
        %1207 = vmatmul.mubr.f32.gmra.mxu0 %v247
        %v1208 = vpop.f32.mrf.mxu0
        %v1209 = vadd.f32 0.0, %v1208
        %v1210 = vpop.f32.mrf.mxu0
        %1211 = vdwg.mxu0
        %1212 = vmatprep.subr.mxu0 0.0
        %1213 = vmatpush1.msra.mxu0 %v991
        %1214 = vmatprep.subr.mxu0 0.0
        %1215 = vmatpush1.msra.mxu0 %v990
        %1216 = vmatprep.subr.mxu0 0.0
        %1217 = vmatpush1.msra.mxu0 %v989
        %1218 = vmatprep.subr.mxu0 0.0
        %1219 = vmatpush1.msra.mxu0 %v988
        %1220 = vmatprep.subr.mxu0 0.0
        %1221 = vmatpush1.msra.mxu0 %v987
        %1222 = vmatprep.subr.mxu0 0.0
        %1223 = vmatpush1.msra.mxu0 %v986
        %1224 = vmatprep.subr.mxu0 0.0
        %1225 = vmatpush1.msra.mxu0 %v985
        %1226 = vmatprep.subr.mxu0 0.0
        %1227 = vmatpush1.msra.mxu0 %v984
        %1228 = vmatprep.subr.mxu0 0.0
        %1229 = vmatpush1.msra.mxu0 %v983
        %1230 = vmatprep.subr.mxu0 0.0
        %1231 = vmatpush1.msra.mxu0 %v982
        %1232 = vmatprep.subr.mxu0 0.0
        %1233 = vmatpush1.msra.mxu0 %v981
        %1234 = vmatprep.subr.mxu0 0.0
        %1235 = vmatpush1.msra.mxu0 %v980
        %1236 = vmatprep.subr.mxu0 0.0
        %1237 = vmatpush1.msra.mxu0 %v979
        %1238 = vmatprep.subr.mxu0 0.0
        %1239 = vmatpush1.msra.mxu0 %v978
        %1240 = vmatprep.subr.mxu0 0.0
        %1241 = vmatpush1.msra.mxu0 %v977
        %1242 = vmatprep.subr.mxu0 0.0
        %1243 = vmatpush1.msra.mxu0 %v976
        %1244 = vmatprep.subr.mxu0 0.0
        %1245 = vmatpush2.msra.mxu0 0.0
        %1246 = vmatprep.subr.mxu0 0.0
        %1247 = vmatpush2.msra.mxu0 0.0
        %1248 = vmatprep.subr.mxu0 0.0
        %1249 = vmatpush2.msra.mxu0 0.0
        %1250 = vmatprep.subr.mxu0 0.0
        %1251 = vmatpush2.msra.mxu0 0.0
        %1252 = vmatprep.subr.mxu0 0.0
        %1253 = vmatpush2.msra.mxu0 0.0
        %1254 = vmatprep.subr.mxu0 0.0
        %1255 = vmatpush2.msra.mxu0 0.0
        %1256 = vmatprep.subr.mxu0 0.0
        %1257 = vmatpush2.msra.mxu0 0.0
        %1258 = vmatprep.subr.mxu0 0.0
        %1259 = vmatpush2.msra.mxu0 0.0
        %1260 = vmatprep.subr.mxu0 0.0
        %1261 = vmatpush2.msra.mxu0 0.0
        %1262 = vmatprep.subr.mxu0 0.0
        %1263 = vmatpush2.msra.mxu0 0.0
        %1264 = vmatprep.subr.mxu0 0.0
        %1265 = vmatpush2.msra.mxu0 0.0
        %1266 = vmatprep.subr.mxu0 0.0
        %1267 = vmatpush2.msra.mxu0 0.0
        %1268 = vmatprep.subr.mxu0 0.0
        %1269 = vmatpush2.msra.mxu0 0.0
        %1270 = vmatprep.subr.mxu0 0.0
        %1271 = vmatpush2.msra.mxu0 0.0
        %1272 = vmatprep.subr.mxu0 0.0
        %1273 = vmatpush2.msra.mxu0 0.0
        %1274 = vmatprep.subr.mxu0 0.0
        %1275 = vmatpush2.msra.mxu0 0.0
        %1276 = vmatprep.mubr.f32.mxu0 0.0
        %1277 = vmatmul.mubr.f32.gmra.mxu0 %v247
        %v1278 = vpop.f32.mrf.mxu0
        %v1279 = vadd.f32 0.0, %v1278
        %v1280 = vpop.f32.mrf.mxu0
        %1281 = vdwg.mxu0
        %1282 = vmatprep.subr.mxu0 0.0
        %1283 = vmatpush1.msra.mxu0 %v1007
        %1284 = vmatprep.subr.mxu0 0.0
        %1285 = vmatpush1.msra.mxu0 %v1006
        %1286 = vmatprep.subr.mxu0 0.0
        %1287 = vmatpush1.msra.mxu0 %v1005
        %1288 = vmatprep.subr.mxu0 0.0
        %1289 = vmatpush1.msra.mxu0 %v1004
        %1290 = vmatprep.subr.mxu0 0.0
        %1291 = vmatpush1.msra.mxu0 %v1003
        %1292 = vmatprep.subr.mxu0 0.0
        %1293 = vmatpush1.msra.mxu0 %v1002
        %1294 = vmatprep.subr.mxu0 0.0
        %1295 = vmatpush1.msra.mxu0 %v1001
        %1296 = vmatprep.subr.mxu0 0.0
        %1297 = vmatpush1.msra.mxu0 %v1000
        %1298 = vmatprep.subr.mxu0 0.0
        %1299 = vmatpush1.msra.mxu0 %v999
        %1300 = vmatprep.subr.mxu0 0.0
        %1301 = vmatpush1.msra.mxu0 %v998
        %1302 = vmatprep.subr.mxu0 0.0
        %1303 = vmatpush1.msra.mxu0 %v997
        %1304 = vmatprep.subr.mxu0 0.0
        %1305 = vmatpush1.msra.mxu0 %v996
        %1306 = vmatprep.subr.mxu0 0.0
        %1307 = vmatpush1.msra.mxu0 %v995
        %1308 = vmatprep.subr.mxu0 0.0
        %1309 = vmatpush1.msra.mxu0 %v994
        %1310 = vmatprep.subr.mxu0 0.0
        %1311 = vmatpush1.msra.mxu0 %v993
        %1312 = vmatprep.subr.mxu0 0.0
        %1313 = vmatpush1.msra.mxu0 %v992
        %1314 = vmatprep.subr.mxu0 0.0
        %1315 = vmatpush2.msra.mxu0 0.0
        %1316 = vmatprep.subr.mxu0 0.0
        %1317 = vmatpush2.msra.mxu0 0.0
        %1318 = vmatprep.subr.mxu0 0.0
        %1319 = vmatpush2.msra.mxu0 0.0
        %1320 = vmatprep.subr.mxu0 0.0
        %1321 = vmatpush2.msra.mxu0 0.0
        %1322 = vmatprep.subr.mxu0 0.0
        %1323 = vmatpush2.msra.mxu0 0.0
        %1324 = vmatprep.subr.mxu0 0.0
        %1325 = vmatpush2.msra.mxu0 0.0
        %1326 = vmatprep.subr.mxu0 0.0
        %1327 = vmatpush2.msra.mxu0 0.0
        %1328 = vmatprep.subr.mxu0 0.0
        %1329 = vmatpush2.msra.mxu0 0.0
        %1330 = vmatprep.subr.mxu0 0.0
        %1331 = vmatpush2.msra.mxu0 0.0
        %1332 = vmatprep.subr.mxu0 0.0
        %1333 = vmatpush2.msra.mxu0 0.0
        %1334 = vmatprep.subr.mxu0 0.0
        %1335 = vmatpush2.msra.mxu0 0.0
        %1336 = vmatprep.subr.mxu0 0.0
        %1337 = vmatpush2.msra.mxu0 0.0
        %1338 = vmatprep.subr.mxu0 0.0
        %1339 = vmatpush2.msra.mxu0 0.0
        %1340 = vmatprep.subr.mxu0 0.0
        %1341 = vmatpush2.msra.mxu0 0.0
        %1342 = vmatprep.subr.mxu0 0.0
        %1343 = vmatpush2.msra.mxu0 0.0
        %1344 = vmatprep.subr.mxu0 0.0
        %1345 = vmatpush2.msra.mxu0 0.0
        %1346 = vmatprep.mubr.f32.mxu0 0.0
        %1347 = vmatmul.mubr.f32.gmra.mxu0 %v247
        %v1348 = vpop.f32.mrf.mxu0
        %v1349 = vadd.f32 0.0, %v1348
        %v1350 = vpop.f32.mrf.mxu0
        %1351 = vdwg.mxu0
        %1352 = vmatprep.subr.mxu0 0.0
        %1353 = vmatpush1.msra.mxu0 %v1023
        %1354 = vmatprep.subr.mxu0 0.0
        %1355 = vmatpush1.msra.mxu0 %v1022
        %1356 = vmatprep.subr.mxu0 0.0
        %1357 = vmatpush1.msra.mxu0 %v1021
        %1358 = vmatprep.subr.mxu0 0.0
        %1359 = vmatpush1.msra.mxu0 %v1020
        %1360 = vmatprep.subr.mxu0 0.0
        %1361 = vmatpush1.msra.mxu0 %v1019
        %1362 = vmatprep.subr.mxu0 0.0
        %1363 = vmatpush1.msra.mxu0 %v1018
        %1364 = vmatprep.subr.mxu0 0.0
        %1365 = vmatpush1.msra.mxu0 %v1017
        %1366 = vmatprep.subr.mxu0 0.0
        %1367 = vmatpush1.msra.mxu0 %v1016
        %1368 = vmatprep.subr.mxu0 0.0
        %1369 = vmatpush1.msra.mxu0 %v1015
        %1370 = vmatprep.subr.mxu0 0.0
        %1371 = vmatpush1.msra.mxu0 %v1014
        %1372 = vmatprep.subr.mxu0 0.0
        %1373 = vmatpush1.msra.mxu0 %v1013
        %1374 = vmatprep.subr.mxu0 0.0
        %1375 = vmatpush1.msra.mxu0 %v1012
        %1376 = vmatprep.subr.mxu0 0.0
        %1377 = vmatpush1.msra.mxu0 %v1011
        %1378 = vmatprep.subr.mxu0 0.0
        %1379 = vmatpush1.msra.mxu0 %v1010
        %1380 = vmatprep.subr.mxu0 0.0
        %1381 = vmatpush1.msra.mxu0 %v1009
        %1382 = vmatprep.subr.mxu0 0.0
        %1383 = vmatpush1.msra.mxu0 %v1008
        %1384 = vmatprep.subr.mxu0 0.0
        %1385 = vmatpush2.msra.mxu0 0.0
        %1386 = vmatprep.subr.mxu0 0.0
        %1387 = vmatpush2.msra.mxu0 0.0
        %1388 = vmatprep.subr.mxu0 0.0
        %1389 = vmatpush2.msra.mxu0 0.0
        %1390 = vmatprep.subr.mxu0 0.0
        %1391 = vmatpush2.msra.mxu0 0.0
        %1392 = vmatprep.subr.mxu0 0.0
        %1393 = vmatpush2.msra.mxu0 0.0
        %1394 = vmatprep.subr.mxu0 0.0
        %1395 = vmatpush2.msra.mxu0 0.0
        %1396 = vmatprep.subr.mxu0 0.0
        %1397 = vmatpush2.msra.mxu0 0.0
        %1398 = vmatprep.subr.mxu0 0.0
        %1399 = vmatpush2.msra.mxu0 0.0
        %1400 = vmatprep.subr.mxu0 0.0
        %1401 = vmatpush2.msra.mxu0 0.0
        %1402 = vmatprep.subr.mxu0 0.0
        %1403 = vmatpush2.msra.mxu0 0.0
        %1404 = vmatprep.subr.mxu0 0.0
        %1405 = vmatpush2.msra.mxu0 0.0
        %1406 = vmatprep.subr.mxu0 0.0
        %1407 = vmatpush2.msra.mxu0 0.0
        %1408 = vmatprep.subr.mxu0 0.0
        %1409 = vmatpush2.msra.mxu0 0.0
        %1410 = vmatprep.subr.mxu0 0.0
        %1411 = vmatpush2.msra.mxu0 0.0
        %1412 = vmatprep.subr.mxu0 0.0
        %1413 = vmatpush2.msra.mxu0 0.0
        %1414 = vmatprep.subr.mxu0 0.0
        %1415 = vmatpush2.msra.mxu0 0.0
        %1416 = vmatprep.mubr.f32.mxu0 0.0
        %1417 = vmatmul.mubr.f32.gmra.mxu0 %v247
        %v1418 = vpop.f32.mrf.mxu0
        %v1419 = vadd.f32 0.0, %v1418
        %v1420 = vpop.f32.mrf.mxu0
        %1421 = vdwg.mxu0
        %1422 = vmatprep.subr.mxu0 0.0
        %1423 = vmatpush1.msra.mxu0 %v1039
        %1424 = vmatprep.subr.mxu0 0.0
        %1425 = vmatpush1.msra.mxu0 %v1038
        %1426 = vmatprep.subr.mxu0 0.0
        %1427 = vmatpush1.msra.mxu0 %v1037
        %1428 = vmatprep.subr.mxu0 0.0
        %1429 = vmatpush1.msra.mxu0 %v1036
        %1430 = vmatprep.subr.mxu0 0.0
        %1431 = vmatpush1.msra.mxu0 %v1035
        %1432 = vmatprep.subr.mxu0 0.0
        %1433 = vmatpush1.msra.mxu0 %v1034
        %1434 = vmatprep.subr.mxu0 0.0
        %1435 = vmatpush1.msra.mxu0 %v1033
        %1436 = vmatprep.subr.mxu0 0.0
        %1437 = vmatpush1.msra.mxu0 %v1032
        %1438 = vmatprep.subr.mxu0 0.0
        %1439 = vmatpush1.msra.mxu0 %v1031
        %1440 = vmatprep.subr.mxu0 0.0
        %1441 = vmatpush1.msra.mxu0 %v1030
        %1442 = vmatprep.subr.mxu0 0.0
        %1443 = vmatpush1.msra.mxu0 %v1029
        %1444 = vmatprep.subr.mxu0 0.0
        %1445 = vmatpush1.msra.mxu0 %v1028
        %1446 = vmatprep.subr.mxu0 0.0
        %1447 = vmatpush1.msra.mxu0 %v1027
        %1448 = vmatprep.subr.mxu0 0.0
        %1449 = vmatpush1.msra.mxu0 %v1026
        %1450 = vmatprep.subr.mxu0 0.0
        %1451 = vmatpush1.msra.mxu0 %v1025
        %1452 = vmatprep.subr.mxu0 0.0
        %1453 = vmatpush1.msra.mxu0 %v1024
        %1454 = vmatprep.subr.mxu0 0.0
        %1455 = vmatpush2.msra.mxu0 0.0
        %1456 = vmatprep.subr.mxu0 0.0
        %1457 = vmatpush2.msra.mxu0 0.0
        %1458 = vmatprep.subr.mxu0 0.0
        %1459 = vmatpush2.msra.mxu0 0.0
        %1460 = vmatprep.subr.mxu0 0.0
        %1461 = vmatpush2.msra.mxu0 0.0
        %1462 = vmatprep.subr.mxu0 0.0
        %1463 = vmatpush2.msra.mxu0 0.0
        %1464 = vmatprep.subr.mxu0 0.0
        %1465 = vmatpush2.msra.mxu0 0.0
        %1466 = vmatprep.subr.mxu0 0.0
        %1467 = vmatpush2.msra.mxu0 0.0
        %1468 = vmatprep.subr.mxu0 0.0
        %1469 = vmatpush2.msra.mxu0 0.0
        %1470 = vmatprep.subr.mxu0 0.0
        %1471 = vmatpush2.msra.mxu0 0.0
        %1472 = vmatprep.subr.mxu0 0.0
        %1473 = vmatpush2.msra.mxu0 0.0
        %1474 = vmatprep.subr.mxu0 0.0
        %1475 = vmatpush2.msra.mxu0 0.0
        %1476 = vmatprep.subr.mxu0 0.0
        %1477 = vmatpush2.msra.mxu0 0.0
        %1478 = vmatprep.subr.mxu0 0.0
        %1479 = vmatpush2.msra.mxu0 0.0
        %1480 = vmatprep.subr.mxu0 0.0
        %1481 = vmatpush2.msra.mxu0 0.0
        %1482 = vmatprep.subr.mxu0 0.0
        %1483 = vmatpush2.msra.mxu0 0.0
        %1484 = vmatprep.subr.mxu0 0.0
        %1485 = vmatpush2.msra.mxu0 0.0
        %1486 = vmatprep.mubr.f32.mxu0 0.0
        %1487 = vmatmul.mubr.f32.gmra.mxu0 %v247
        %v1488 = vpop.f32.mrf.mxu0
        %v1489 = vadd.f32 0.0, %v1488
        %v1490 = vpop.f32.mrf.mxu0
        %1491 = vdwg.mxu0
        %1492 = vmatprep.subr.mxu0 0.0
        %1493 = vmatpush1.msra.mxu0 %v1055
        %1494 = vmatprep.subr.mxu0 0.0
        %1495 = vmatpush1.msra.mxu0 %v1054
        %1496 = vmatprep.subr.mxu0 0.0
        %1497 = vmatpush1.msra.mxu0 %v1053
        %1498 = vmatprep.subr.mxu0 0.0
        %1499 = vmatpush1.msra.mxu0 %v1052
        %1500 = vmatprep.subr.mxu0 0.0
        %1501 = vmatpush1.msra.mxu0 %v1051
        %1502 = vmatprep.subr.mxu0 0.0
        %1503 = vmatpush1.msra.mxu0 %v1050
        %1504 = vmatprep.subr.mxu0 0.0
        %1505 = vmatpush1.msra.mxu0 %v1049
        %1506 = vmatprep.subr.mxu0 0.0
        %1507 = vmatpush1.msra.mxu0 %v1048
        %1508 = vmatprep.subr.mxu0 0.0
        %1509 = vmatpush1.msra.mxu0 %v1047
        %1510 = vmatprep.subr.mxu0 0.0
        %1511 = vmatpush1.msra.mxu0 %v1046
        %1512 = vmatprep.subr.mxu0 0.0
        %1513 = vmatpush1.msra.mxu0 %v1045
        %1514 = vmatprep.subr.mxu0 0.0
        %1515 = vmatpush1.msra.mxu0 %v1044
        %1516 = vmatprep.subr.mxu0 0.0
        %1517 = vmatpush1.msra.mxu0 %v1043
        %1518 = vmatprep.subr.mxu0 0.0
        %1519 = vmatpush1.msra.mxu0 %v1042
        %1520 = vmatprep.subr.mxu0 0.0
        %1521 = vmatpush1.msra.mxu0 %v1041
        %1522 = vmatprep.subr.mxu0 0.0
        %1523 = vmatpush1.msra.mxu0 %v1040
        %1524 = vmatprep.subr.mxu0 0.0
        %1525 = vmatpush2.msra.mxu0 0.0
        %1526 = vmatprep.subr.mxu0 0.0
        %1527 = vmatpush2.msra.mxu0 0.0
        %1528 = vmatprep.subr.mxu0 0.0
        %1529 = vmatpush2.msra.mxu0 0.0
        %1530 = vmatprep.subr.mxu0 0.0
        %1531 = vmatpush2.msra.mxu0 0.0
        %1532 = vmatprep.subr.mxu0 0.0
        %1533 = vmatpush2.msra.mxu0 0.0
        %1534 = vmatprep.subr.mxu0 0.0
        %1535 = vmatpush2.msra.mxu0 0.0
        %1536 = vmatprep.subr.mxu0 0.0
        %1537 = vmatpush2.msra.mxu0 0.0
        %1538 = vmatprep.subr.mxu0 0.0
        %1539 = vmatpush2.msra.mxu0 0.0
        %1540 = vmatprep.subr.mxu0 0.0
        %1541 = vmatpush2.msra.mxu0 0.0
        %1542 = vmatprep.subr.mxu0 0.0
        %1543 = vmatpush2.msra.mxu0 0.0
        %1544 = vmatprep.subr.mxu0 0.0
        %1545 = vmatpush2.msra.mxu0 0.0
        %1546 = vmatprep.subr.mxu0 0.0
        %1547 = vmatpush2.msra.mxu0 0.0
        %1548 = vmatprep.subr.mxu0 0.0
        %1549 = vmatpush2.msra.mxu0 0.0
        %1550 = vmatprep.subr.mxu0 0.0
        %1551 = vmatpush2.msra.mxu0 0.0
        %1552 = vmatprep.subr.mxu0 0.0
        %1553 = vmatpush2.msra.mxu0 0.0
        %1554 = vmatprep.subr.mxu0 0.0
        %1555 = vmatpush2.msra.mxu0 0.0
        %1556 = vmatprep.mubr.f32.mxu0 0.0
        %1557 = vmatmul.mubr.f32.gmra.mxu0 %v247
        %v1558 = vpop.f32.mrf.mxu0
        %v1559 = vadd.f32 0.0, %v1558
        %v1560 = vpop.f32.mrf.mxu0
        %1561 = vdwg.mxu0
        %1562 = vmatprep.subr.mxu0 0.0
        %1563 = vmatpush1.msra.mxu0 %v1071
        %1564 = vmatprep.subr.mxu0 0.0
        %1565 = vmatpush1.msra.mxu0 %v1070
        %1566 = vmatprep.subr.mxu0 0.0
        %1567 = vmatpush1.msra.mxu0 %v1069
        %1568 = vmatprep.subr.mxu0 0.0
        %1569 = vmatpush1.msra.mxu0 %v1068
        %1570 = vmatprep.subr.mxu0 0.0
        %1571 = vmatpush1.msra.mxu0 %v1067
        %1572 = vmatprep.subr.mxu0 0.0
        %1573 = vmatpush1.msra.mxu0 %v1066
        %1574 = vmatprep.subr.mxu0 0.0
        %1575 = vmatpush1.msra.mxu0 %v1065
        %1576 = vmatprep.subr.mxu0 0.0
        %1577 = vmatpush1.msra.mxu0 %v1064
        %1578 = vmatprep.subr.mxu0 0.0
        %1579 = vmatpush1.msra.mxu0 %v1063
        %1580 = vmatprep.subr.mxu0 0.0
        %1581 = vmatpush1.msra.mxu0 %v1062
        %1582 = vmatprep.subr.mxu0 0.0
        %1583 = vmatpush1.msra.mxu0 %v1061
        %1584 = vmatprep.subr.mxu0 0.0
        %1585 = vmatpush1.msra.mxu0 %v1060
        %1586 = vmatprep.subr.mxu0 0.0
        %1587 = vmatpush1.msra.mxu0 %v1059
        %1588 = vmatprep.subr.mxu0 0.0
        %1589 = vmatpush1.msra.mxu0 %v1058
        %1590 = vmatprep.subr.mxu0 0.0
        %1591 = vmatpush1.msra.mxu0 %v1057
        %1592 = vmatprep.subr.mxu0 0.0
        %1593 = vmatpush1.msra.mxu0 %v1056
        %1594 = vmatprep.subr.mxu0 0.0
        %1595 = vmatpush2.msra.mxu0 0.0
        %1596 = vmatprep.subr.mxu0 0.0
        %1597 = vmatpush2.msra.mxu0 0.0
        %1598 = vmatprep.subr.mxu0 0.0
        %1599 = vmatpush2.msra.mxu0 0.0
        %1600 = vmatprep.subr.mxu0 0.0
        %1601 = vmatpush2.msra.mxu0 0.0
        %1602 = vmatprep.subr.mxu0 0.0
        %1603 = vmatpush2.msra.mxu0 0.0
        %1604 = vmatprep.subr.mxu0 0.0
        %1605 = vmatpush2.msra.mxu0 0.0
        %1606 = vmatprep.subr.mxu0 0.0
        %1607 = vmatpush2.msra.mxu0 0.0
        %1608 = vmatprep.subr.mxu0 0.0
        %1609 = vmatpush2.msra.mxu0 0.0
        %1610 = vmatprep.subr.mxu0 0.0
        %1611 = vmatpush2.msra.mxu0 0.0
        %1612 = vmatprep.subr.mxu0 0.0
        %1613 = vmatpush2.msra.mxu0 0.0
        %1614 = vmatprep.subr.mxu0 0.0
        %1615 = vmatpush2.msra.mxu0 0.0
        %1616 = vmatprep.subr.mxu0 0.0
        %1617 = vmatpush2.msra.mxu0 0.0
        %1618 = vmatprep.subr.mxu0 0.0
        %1619 = vmatpush2.msra.mxu0 0.0
        %1620 = vmatprep.subr.mxu0 0.0
        %1621 = vmatpush2.msra.mxu0 0.0
        %1622 = vmatprep.subr.mxu0 0.0
        %1623 = vmatpush2.msra.mxu0 0.0
        %1624 = vmatprep.subr.mxu0 0.0
        %1625 = vmatpush2.msra.mxu0 0.0
        %1626 = vmatprep.mubr.f32.mxu0 0.0
        %1627 = vmatmul.mubr.f32.gmra.mxu0 %v247
        %v1628 = vpop.f32.mrf.mxu0
        %v1629 = vadd.f32 0.0, %v1628
        %v1630 = vpop.f32.mrf.mxu0
        %1631 = vdwg.mxu0
        %v1632 = vld [vmem:[%s3] sm:$0xff]
        %v1633 = vld [vmem:[%s3 + $0x8] sm:$0xff]
        %v1634 = vld [vmem:[%s3 + $0x10] sm:$0xff]
        %v1635 = vld [vmem:[%s3 + $0x18] sm:$0xff]
        %v1636 = vld [vmem:[%s3 + $0x20] sm:$0xff]
        %v1637 = vld [vmem:[%s3 + $0x28] sm:$0xff]
        %v1638 = vld [vmem:[%s3 + $0x30] sm:$0xff]
        %v1639 = vld [vmem:[%s3 + $0x38] sm:$0xff]
        %v1640 = vld [vmem:[%s3 + $0x40] sm:$0xff]
        %v1641 = vld [vmem:[%s3 + $0x48] sm:$0xff]
        %v1642 = vld [vmem:[%s3 + $0x50] sm:$0xff]
        %v1643 = vld [vmem:[%s3 + $0x58] sm:$0xff]
        %v1644 = vld [vmem:[%s3 + $0x60] sm:$0xff]
        %v1645 = vld [vmem:[%s3 + $0x68] sm:$0xff]
        %v1646 = vld [vmem:[%s3 + $0x70] sm:$0xff]
        %v1647 = vld [vmem:[%s3 + $0x78] sm:$0xff]
        %v1648 = vld [vmem:[%s3 + $0x80] sm:$0xff]
        %v1649 = vld [vmem:[%s3 + $0x88] sm:$0xff]
        %v1650 = vld [vmem:[%s3 + $0x90] sm:$0xff]
        %v1651 = vld [vmem:[%s3 + $0x98] sm:$0xff]
        %v1652 = vld [vmem:[%s3 + $0xa0] sm:$0xff]
        %v1653 = vld [vmem:[%s3 + $0xa8] sm:$0xff]
        %v1654 = vld [vmem:[%s3 + $0xb0] sm:$0xff]
        %v1655 = vld [vmem:[%s3 + $0xb8] sm:$0xff]
        %v1656 = vld [vmem:[%s3 + $0xc0] sm:$0xff]
        %v1657 = vld [vmem:[%s3 + $0xc8] sm:$0xff]
        %v1658 = vld [vmem:[%s3 + $0xd0] sm:$0xff]
        %v1659 = vld [vmem:[%s3 + $0xd8] sm:$0xff]
        %v1660 = vld [vmem:[%s3 + $0xe0] sm:$0xff]
        %v1661 = vld [vmem:[%s3 + $0xe8] sm:$0xff]
        %v1662 = vld [vmem:[%s3 + $0xf0] sm:$0xff]
        %v1663 = vld [vmem:[%s3 + $0xf8] sm:$0xff]
        %v1664 = vld [vmem:[%s3 + $0x100] sm:$0xff]
        %v1665 = vld [vmem:[%s3 + $0x108] sm:$0xff]
        %v1666 = vld [vmem:[%s3 + $0x110] sm:$0xff]
        %v1667 = vld [vmem:[%s3 + $0x118] sm:$0xff]
        %v1668 = vld [vmem:[%s3 + $0x120] sm:$0xff]
        %v1669 = vld [vmem:[%s3 + $0x128] sm:$0xff]
        %v1670 = vld [vmem:[%s3 + $0x130] sm:$0xff]
        %v1671 = vld [vmem:[%s3 + $0x138] sm:$0xff]
        %v1672 = vld [vmem:[%s3 + $0x140] sm:$0xff]
        %v1673 = vld [vmem:[%s3 + $0x148] sm:$0xff]
        %v1674 = vld [vmem:[%s3 + $0x150] sm:$0xff]
        %v1675 = vld [vmem:[%s3 + $0x158] sm:$0xff]
        %v1676 = vld [vmem:[%s3 + $0x160] sm:$0xff]
        %v1677 = vld [vmem:[%s3 + $0x168] sm:$0xff]
        %v1678 = vld [vmem:[%s3 + $0x170] sm:$0xff]
        %v1679 = vld [vmem:[%s3 + $0x178] sm:$0xff]
        %v1680 = vld [vmem:[%s3 + $0x180] sm:$0xff]
        %v1681 = vld [vmem:[%s3 + $0x188] sm:$0xff]
        %v1682 = vld [vmem:[%s3 + $0x190] sm:$0xff]
        %v1683 = vld [vmem:[%s3 + $0x198] sm:$0xff]
        %v1684 = vld [vmem:[%s3 + $0x1a0] sm:$0xff]
        %v1685 = vld [vmem:[%s3 + $0x1a8] sm:$0xff]
        %v1686 = vld [vmem:[%s3 + $0x1b0] sm:$0xff]
        %v1687 = vld [vmem:[%s3 + $0x1b8] sm:$0xff]
        %v1688 = vld [vmem:[%s3 + $0x1c0] sm:$0xff]
        %v1689 = vld [vmem:[%s3 + $0x1c8] sm:$0xff]
        %v1690 = vld [vmem:[%s3 + $0x1d0] sm:$0xff]
        %v1691 = vld [vmem:[%s3 + $0x1d8] sm:$0xff]
        %v1692 = vld [vmem:[%s3 + $0x1e0] sm:$0xff]
        %v1693 = vld [vmem:[%s3 + $0x1e8] sm:$0xff]
        %v1694 = vld [vmem:[%s3 + $0x1f0] sm:$0xff]
        %v1695 = vld [vmem:[%s3 + $0x1f8] sm:$0xff]
        %v1696 = vld [vmem:[%s3 + $0x200] sm:$0xff]
        %v1697 = vld [vmem:[%s3 + $0x208] sm:$0xff]
        %v1698 = vld [vmem:[%s3 + $0x210] sm:$0xff]
        %v1699 = vld [vmem:[%s3 + $0x218] sm:$0xff]
        %v1700 = vld [vmem:[%s3 + $0x220] sm:$0xff]
        %v1701 = vld [vmem:[%s3 + $0x228] sm:$0xff]
        %v1702 = vld [vmem:[%s3 + $0x230] sm:$0xff]
        %v1703 = vld [vmem:[%s3 + $0x238] sm:$0xff]
        %v1704 = vld [vmem:[%s3 + $0x240] sm:$0xff]
        %v1705 = vld [vmem:[%s3 + $0x248] sm:$0xff]
        %v1706 = vld [vmem:[%s3 + $0x250] sm:$0xff]
        %v1707 = vld [vmem:[%s3 + $0x258] sm:$0xff]
        %v1708 = vld [vmem:[%s3 + $0x260] sm:$0xff]
        %v1709 = vld [vmem:[%s3 + $0x268] sm:$0xff]
        %v1710 = vld [vmem:[%s3 + $0x270] sm:$0xff]
        %v1711 = vld [vmem:[%s3 + $0x278] sm:$0xff]
        %v1712 = vld [vmem:[%s3 + $0x280] sm:$0xff]
        %v1713 = vld [vmem:[%s3 + $0x288] sm:$0xff]
        %v1714 = vld [vmem:[%s3 + $0x290] sm:$0xff]
        %v1715 = vld [vmem:[%s3 + $0x298] sm:$0xff]
        %v1716 = vld [vmem:[%s3 + $0x2a0] sm:$0xff]
        %v1717 = vld [vmem:[%s3 + $0x2a8] sm:$0xff]
        %v1718 = vld [vmem:[%s3 + $0x2b0] sm:$0xff]
        %v1719 = vld [vmem:[%s3 + $0x2b8] sm:$0xff]
        %v1720 = vld [vmem:[%s3 + $0x2c0] sm:$0xff]
        %v1721 = vld [vmem:[%s3 + $0x2c8] sm:$0xff]
        %v1722 = vld [vmem:[%s3 + $0x2d0] sm:$0xff]
        %v1723 = vld [vmem:[%s3 + $0x2d8] sm:$0xff]
        %v1724 = vld [vmem:[%s3 + $0x2e0] sm:$0xff]
        %v1725 = vld [vmem:[%s3 + $0x2e8] sm:$0xff]
        %v1726 = vld [vmem:[%s3 + $0x2f0] sm:$0xff]
        %v1727 = vld [vmem:[%s3 + $0x2f8] sm:$0xff]
        %v1728 = vld [vmem:[%s3 + $0x300] sm:$0xff]
        %v1729 = vld [vmem:[%s3 + $0x308] sm:$0xff]
        %v1730 = vld [vmem:[%s3 + $0x310] sm:$0xff]
        %v1731 = vld [vmem:[%s3 + $0x318] sm:$0xff]
        %v1732 = vld [vmem:[%s3 + $0x320] sm:$0xff]
        %v1733 = vld [vmem:[%s3 + $0x328] sm:$0xff]
        %v1734 = vld [vmem:[%s3 + $0x330] sm:$0xff]
        %v1735 = vld [vmem:[%s3 + $0x338] sm:$0xff]
        %v1736 = vld [vmem:[%s3 + $0x340] sm:$0xff]
        %v1737 = vld [vmem:[%s3 + $0x348] sm:$0xff]
        %v1738 = vld [vmem:[%s3 + $0x350] sm:$0xff]
        %v1739 = vld [vmem:[%s3 + $0x358] sm:$0xff]
        %v1740 = vld [vmem:[%s3 + $0x360] sm:$0xff]
        %v1741 = vld [vmem:[%s3 + $0x368] sm:$0xff]
        %v1742 = vld [vmem:[%s3 + $0x370] sm:$0xff]
        %v1743 = vld [vmem:[%s3 + $0x378] sm:$0xff]
        %v1744 = vld [vmem:[%s3 + $0x380] sm:$0xff]
        %v1745 = vld [vmem:[%s3 + $0x388] sm:$0xff]
        %v1746 = vld [vmem:[%s3 + $0x390] sm:$0xff]
        %v1747 = vld [vmem:[%s3 + $0x398] sm:$0xff]
        %v1748 = vld [vmem:[%s3 + $0x3a0] sm:$0xff]
        %v1749 = vld [vmem:[%s3 + $0x3a8] sm:$0xff]
        %v1750 = vld [vmem:[%s3 + $0x3b0] sm:$0xff]
        %v1751 = vld [vmem:[%s3 + $0x3b8] sm:$0xff]
        %v1752 = vld [vmem:[%s3 + $0x3c0] sm:$0xff]
        %v1753 = vld [vmem:[%s3 + $0x3c8] sm:$0xff]
        %v1754 = vld [vmem:[%s3 + $0x3d0] sm:$0xff]
        %v1755 = vld [vmem:[%s3 + $0x3d8] sm:$0xff]
        %v1756 = vld [vmem:[%s3 + $0x3e0] sm:$0xff]
        %v1757 = vld [vmem:[%s3 + $0x3e8] sm:$0xff]
        %v1758 = vld [vmem:[%s3 + $0x3f0] sm:$0xff]
        %v1759 = vld [vmem:[%s3 + $0x3f8] sm:$0xff]
        %1760 = vmatprep.subr.mxu0 0.0
        %1761 = vmatpush1.msra.mxu0 %v1647
        %1762 = vmatprep.subr.mxu0 0.0
        %1763 = vmatpush1.msra.mxu0 %v1646
        %1764 = vmatprep.subr.mxu0 0.0
        %1765 = vmatpush1.msra.mxu0 %v1645
        %1766 = vmatprep.subr.mxu0 0.0
        %1767 = vmatpush1.msra.mxu0 %v1644
        %1768 = vmatprep.subr.mxu0 0.0
        %1769 = vmatpush1.msra.mxu0 %v1643
        %1770 = vmatprep.subr.mxu0 0.0
        %1771 = vmatpush1.msra.mxu0 %v1642
        %1772 = vmatprep.subr.mxu0 0.0
        %1773 = vmatpush1.msra.mxu0 %v1641
        %1774 = vmatprep.subr.mxu0 0.0
        %1775 = vmatpush1.msra.mxu0 %v1640
        %1776 = vmatprep.subr.mxu0 0.0
        %1777 = vmatpush1.msra.mxu0 %v1639
        %1778 = vmatprep.subr.mxu0 0.0
        %1779 = vmatpush1.msra.mxu0 %v1638
        %1780 = vmatprep.subr.mxu0 0.0
        %1781 = vmatpush1.msra.mxu0 %v1637
        %1782 = vmatprep.subr.mxu0 0.0
        %1783 = vmatpush1.msra.mxu0 %v1636
        %1784 = vmatprep.subr.mxu0 0.0
        %1785 = vmatpush1.msra.mxu0 %v1635
        %1786 = vmatprep.subr.mxu0 0.0
        %1787 = vmatpush1.msra.mxu0 %v1634
        %1788 = vmatprep.subr.mxu0 0.0
        %1789 = vmatpush1.msra.mxu0 %v1633
        %1790 = vmatprep.subr.mxu0 0.0
        %1791 = vmatpush1.msra.mxu0 %v1632
        %1792 = vmatprep.subr.mxu0 0.0
        %1793 = vmatpush2.msra.mxu0 0.0
        %1794 = vmatprep.subr.mxu0 0.0
        %1795 = vmatpush2.msra.mxu0 0.0
        %1796 = vmatprep.subr.mxu0 0.0
        %1797 = vmatpush2.msra.mxu0 0.0
        %1798 = vmatprep.subr.mxu0 0.0
        %1799 = vmatpush2.msra.mxu0 0.0
        %1800 = vmatprep.subr.mxu0 0.0
        %1801 = vmatpush2.msra.mxu0 0.0
        %1802 = vmatprep.subr.mxu0 0.0
        %1803 = vmatpush2.msra.mxu0 0.0
        %1804 = vmatprep.subr.mxu0 0.0
        %1805 = vmatpush2.msra.mxu0 0.0
        %1806 = vmatprep.subr.mxu0 0.0
        %1807 = vmatpush2.msra.mxu0 0.0
        %1808 = vmatprep.subr.mxu0 0.0
        %1809 = vmatpush2.msra.mxu0 0.0
        %1810 = vmatprep.subr.mxu0 0.0
        %1811 = vmatpush2.msra.mxu0 0.0
        %1812 = vmatprep.subr.mxu0 0.0
        %1813 = vmatpush2.msra.mxu0 0.0
        %1814 = vmatprep.subr.mxu0 0.0
        %1815 = vmatpush2.msra.mxu0 0.0
        %1816 = vmatprep.subr.mxu0 0.0
        %1817 = vmatpush2.msra.mxu0 0.0
        %1818 = vmatprep.subr.mxu0 0.0
        %1819 = vmatpush2.msra.mxu0 0.0
        %1820 = vmatprep.subr.mxu0 0.0
        %1821 = vmatpush2.msra.mxu0 0.0
        %1822 = vmatprep.subr.mxu0 0.0
        %1823 = vmatpush2.msra.mxu0 0.0
        %1824 = vmatprep.mubr.f32.mxu0 0.0
        %1825 = vmatmul.mubr.f32.gmra.mxu0 %v247
        %v1826 = vpop.f32.mrf.mxu0
        %v1827 = vadd.f32 0.0, %v1826
        %v1828 = vpop.f32.mrf.mxu0
        %1829 = vdwg.mxu0
        %1830 = vmatprep.subr.mxu0 0.0
        %1831 = vmatpush1.msra.mxu0 %v1663
        %1832 = vmatprep.subr.mxu0 0.0
        %1833 = vmatpush1.msra.mxu0 %v1662
        %1834 = vmatprep.subr.mxu0 0.0
        %1835 = vmatpush1.msra.mxu0 %v1661
        %1836 = vmatprep.subr.mxu0 0.0
        %1837 = vmatpush1.msra.mxu0 %v1660
        %1838 = vmatprep.subr.mxu0 0.0
        %1839 = vmatpush1.msra.mxu0 %v1659
        %1840 = vmatprep.subr.mxu0 0.0
        %1841 = vmatpush1.msra.mxu0 %v1658
        %1842 = vmatprep.subr.mxu0 0.0
        %1843 = vmatpush1.msra.mxu0 %v1657
        %1844 = vmatprep.subr.mxu0 0.0
        %1845 = vmatpush1.msra.mxu0 %v1656
        %1846 = vmatprep.subr.mxu0 0.0
        %1847 = vmatpush1.msra.mxu0 %v1655
        %1848 = vmatprep.subr.mxu0 0.0
        %1849 = vmatpush1.msra.mxu0 %v1654
        %1850 = vmatprep.subr.mxu0 0.0
        %1851 = vmatpush1.msra.mxu0 %v1653
        %1852 = vmatprep.subr.mxu0 0.0
        %1853 = vmatpush1.msra.mxu0 %v1652
        %1854 = vmatprep.subr.mxu0 0.0
        %1855 = vmatpush1.msra.mxu0 %v1651
        %1856 = vmatprep.subr.mxu0 0.0
        %1857 = vmatpush1.msra.mxu0 %v1650
        %1858 = vmatprep.subr.mxu0 0.0
        %1859 = vmatpush1.msra.mxu0 %v1649
        %1860 = vmatprep.subr.mxu0 0.0
        %1861 = vmatpush1.msra.mxu0 %v1648
        %1862 = vmatprep.subr.mxu0 0.0
        %1863 = vmatpush2.msra.mxu0 0.0
        %1864 = vmatprep.subr.mxu0 0.0
        %1865 = vmatpush2.msra.mxu0 0.0
        %1866 = vmatprep.subr.mxu0 0.0
        %1867 = vmatpush2.msra.mxu0 0.0
        %1868 = vmatprep.subr.mxu0 0.0
        %1869 = vmatpush2.msra.mxu0 0.0
        %1870 = vmatprep.subr.mxu0 0.0
        %1871 = vmatpush2.msra.mxu0 0.0
        %1872 = vmatprep.subr.mxu0 0.0
        %1873 = vmatpush2.msra.mxu0 0.0
        %1874 = vmatprep.subr.mxu0 0.0
        %1875 = vmatpush2.msra.mxu0 0.0
        %1876 = vmatprep.subr.mxu0 0.0
        %1877 = vmatpush2.msra.mxu0 0.0
        %1878 = vmatprep.subr.mxu0 0.0
        %1879 = vmatpush2.msra.mxu0 0.0
        %1880 = vmatprep.subr.mxu0 0.0
        %1881 = vmatpush2.msra.mxu0 0.0
        %1882 = vmatprep.subr.mxu0 0.0
        %1883 = vmatpush2.msra.mxu0 0.0
        %1884 = vmatprep.subr.mxu0 0.0
        %1885 = vmatpush2.msra.mxu0 0.0
        %1886 = vmatprep.subr.mxu0 0.0
        %1887 = vmatpush2.msra.mxu0 0.0
        %1888 = vmatprep.subr.mxu0 0.0
        %1889 = vmatpush2.msra.mxu0 0.0
        %1890 = vmatprep.subr.mxu0 0.0
        %1891 = vmatpush2.msra.mxu0 0.0
        %1892 = vmatprep.subr.mxu0 0.0
        %1893 = vmatpush2.msra.mxu0 0.0
        %1894 = vmatprep.mubr.f32.mxu0 0.0
        %1895 = vmatmul.mubr.f32.gmra.mxu0 %v247
        %v1896 = vpop.f32.mrf.mxu0
        %v1897 = vadd.f32 0.0, %v1896
        %v1898 = vpop.f32.mrf.mxu0
        %1899 = vdwg.mxu0
        %1900 = vmatprep.subr.mxu0 0.0
        %1901 = vmatpush1.msra.mxu0 %v1679
        %1902 = vmatprep.subr.mxu0 0.0
        %1903 = vmatpush1.msra.mxu0 %v1678
        %1904 = vmatprep.subr.mxu0 0.0
        %1905 = vmatpush1.msra.mxu0 %v1677
        %1906 = vmatprep.subr.mxu0 0.0
        %1907 = vmatpush1.msra.mxu0 %v1676
        %1908 = vmatprep.subr.mxu0 0.0
        %1909 = vmatpush1.msra.mxu0 %v1675
        %1910 = vmatprep.subr.mxu0 0.0
        %1911 = vmatpush1.msra.mxu0 %v1674
        %1912 = vmatprep.subr.mxu0 0.0
        %1913 = vmatpush1.msra.mxu0 %v1673
        %1914 = vmatprep.subr.mxu0 0.0
        %1915 = vmatpush1.msra.mxu0 %v1672
        %1916 = vmatprep.subr.mxu0 0.0
        %1917 = vmatpush1.msra.mxu0 %v1671
        %1918 = vmatprep.subr.mxu0 0.0
        %1919 = vmatpush1.msra.mxu0 %v1670
        %1920 = vmatprep.subr.mxu0 0.0
        %1921 = vmatpush1.msra.mxu0 %v1669
        %1922 = vmatprep.subr.mxu0 0.0
        %1923 = vmatpush1.msra.mxu0 %v1668
        %1924 = vmatprep.subr.mxu0 0.0
        %1925 = vmatpush1.msra.mxu0 %v1667
        %1926 = vmatprep.subr.mxu0 0.0
        %1927 = vmatpush1.msra.mxu0 %v1666
        %1928 = vmatprep.subr.mxu0 0.0
        %1929 = vmatpush1.msra.mxu0 %v1665
        %1930 = vmatprep.subr.mxu0 0.0
        %1931 = vmatpush1.msra.mxu0 %v1664
        %1932 = vmatprep.subr.mxu0 0.0
        %1933 = vmatpush2.msra.mxu0 0.0
        %1934 = vmatprep.subr.mxu0 0.0
        %1935 = vmatpush2.msra.mxu0 0.0
        %1936 = vmatprep.subr.mxu0 0.0
        %1937 = vmatpush2.msra.mxu0 0.0
        %1938 = vmatprep.subr.mxu0 0.0
        %1939 = vmatpush2.msra.mxu0 0.0
        %1940 = vmatprep.subr.mxu0 0.0
        %1941 = vmatpush2.msra.mxu0 0.0
        %1942 = vmatprep.subr.mxu0 0.0
        %1943 = vmatpush2.msra.mxu0 0.0
        %1944 = vmatprep.subr.mxu0 0.0
        %1945 = vmatpush2.msra.mxu0 0.0
        %1946 = vmatprep.subr.mxu0 0.0
        %1947 = vmatpush2.msra.mxu0 0.0
        %1948 = vmatprep.subr.mxu0 0.0
        %1949 = vmatpush2.msra.mxu0 0.0
        %1950 = vmatprep.subr.mxu0 0.0
        %1951 = vmatpush2.msra.mxu0 0.0
        %1952 = vmatprep.subr.mxu0 0.0
        %1953 = vmatpush2.msra.mxu0 0.0
        %1954 = vmatprep.subr.mxu0 0.0
        %1955 = vmatpush2.msra.mxu0 0.0
        %1956 = vmatprep.subr.mxu0 0.0
        %1957 = vmatpush2.msra.mxu0 0.0
        %1958 = vmatprep.subr.mxu0 0.0
        %1959 = vmatpush2.msra.mxu0 0.0
        %1960 = vmatprep.subr.mxu0 0.0
        %1961 = vmatpush2.msra.mxu0 0.0
        %1962 = vmatprep.subr.mxu0 0.0
        %1963 = vmatpush2.msra.mxu0 0.0
        %1964 = vmatprep.mubr.f32.mxu0 0.0
        %1965 = vmatmul.mubr.f32.gmra.mxu0 %v247
        %v1966 = vpop.f32.mrf.mxu0
        %v1967 = vadd.f32 0.0, %v1966
        %v1968 = vpop.f32.mrf.mxu0
        %1969 = vdwg.mxu0
        %1970 = vmatprep.subr.mxu0 0.0
        %1971 = vmatpush1.msra.mxu0 %v1695
        %1972 = vmatprep.subr.mxu0 0.0
        %1973 = vmatpush1.msra.mxu0 %v1694
        %1974 = vmatprep.subr.mxu0 0.0
        %1975 = vmatpush1.msra.mxu0 %v1693
        %1976 = vmatprep.subr.mxu0 0.0
        %1977 = vmatpush1.msra.mxu0 %v1692
        %1978 = vmatprep.subr.mxu0 0.0
        %1979 = vmatpush1.msra.mxu0 %v1691
        %1980 = vmatprep.subr.mxu0 0.0
        %1981 = vmatpush1.msra.mxu0 %v1690
        %1982 = vmatprep.subr.mxu0 0.0
        %1983 = vmatpush1.msra.mxu0 %v1689
        %1984 = vmatprep.subr.mxu0 0.0
        %1985 = vmatpush1.msra.mxu0 %v1688
        %1986 = vmatprep.subr.mxu0 0.0
        %1987 = vmatpush1.msra.mxu0 %v1687
        %1988 = vmatprep.subr.mxu0 0.0
        %1989 = vmatpush1.msra.mxu0 %v1686
        %1990 = vmatprep.subr.mxu0 0.0
        %1991 = vmatpush1.msra.mxu0 %v1685
        %1992 = vmatprep.subr.mxu0 0.0
        %1993 = vmatpush1.msra.mxu0 %v1684
        %1994 = vmatprep.subr.mxu0 0.0
        %1995 = vmatpush1.msra.mxu0 %v1683
        %1996 = vmatprep.subr.mxu0 0.0
        %1997 = vmatpush1.msra.mxu0 %v1682
        %1998 = vmatprep.subr.mxu0 0.0
        %1999 = vmatpush1.msra.mxu0 %v1681
        %2000 = vmatprep.subr.mxu0 0.0
        %2001 = vmatpush1.msra.mxu0 %v1680
        %2002 = vmatprep.subr.mxu0 0.0
        %2003 = vmatpush2.msra.mxu0 0.0
        %2004 = vmatprep.subr.mxu0 0.0
        %2005 = vmatpush2.msra.mxu0 0.0
        %2006 = vmatprep.subr.mxu0 0.0
        %2007 = vmatpush2.msra.mxu0 0.0
        %2008 = vmatprep.subr.mxu0 0.0
        %2009 = vmatpush2.msra.mxu0 0.0
        %2010 = vmatprep.subr.mxu0 0.0
        %2011 = vmatpush2.msra.mxu0 0.0
        %2012 = vmatprep.subr.mxu0 0.0
        %2013 = vmatpush2.msra.mxu0 0.0
        %2014 = vmatprep.subr.mxu0 0.0
        %2015 = vmatpush2.msra.mxu0 0.0
        %2016 = vmatprep.subr.mxu0 0.0
        %2017 = vmatpush2.msra.mxu0 0.0
        %2018 = vmatprep.subr.mxu0 0.0
        %2019 = vmatpush2.msra.mxu0 0.0
        %2020 = vmatprep.subr.mxu0 0.0
        %2021 = vmatpush2.msra.mxu0 0.0
        %2022 = vmatprep.subr.mxu0 0.0
        %2023 = vmatpush2.msra.mxu0 0.0
        %2024 = vmatprep.subr.mxu0 0.0
        %2025 = vmatpush2.msra.mxu0 0.0
        %2026 = vmatprep.subr.mxu0 0.0
        %2027 = vmatpush2.msra.mxu0 0.0
        %2028 = vmatprep.subr.mxu0 0.0
        %2029 = vmatpush2.msra.mxu0 0.0
        %2030 = vmatprep.subr.mxu0 0.0
        %2031 = vmatpush2.msra.mxu0 0.0
        %2032 = vmatprep.subr.mxu0 0.0
        %2033 = vmatpush2.msra.mxu0 0.0
        %2034 = vmatprep.mubr.f32.mxu0 0.0
        %2035 = vmatmul.mubr.f32.gmra.mxu0 %v247
        %v2036 = vpop.f32.mrf.mxu0
        %v2037 = vadd.f32 0.0, %v2036
        %v2038 = vpop.f32.mrf.mxu0
        %2039 = vdwg.mxu0
        %2040 = vmatprep.subr.mxu0 0.0
        %2041 = vmatpush1.msra.mxu0 %v1711
        %2042 = vmatprep.subr.mxu0 0.0
        %2043 = vmatpush1.msra.mxu0 %v1710
        %2044 = vmatprep.subr.mxu0 0.0
        %2045 = vmatpush1.msra.mxu0 %v1709
        %2046 = vmatprep.subr.mxu0 0.0
        %2047 = vmatpush1.msra.mxu0 %v1708
        %2048 = vmatprep.subr.mxu0 0.0
        %2049 = vmatpush1.msra.mxu0 %v1707
        %2050 = vmatprep.subr.mxu0 0.0
        %2051 = vmatpush1.msra.mxu0 %v1706
        %2052 = vmatprep.subr.mxu0 0.0
        %2053 = vmatpush1.msra.mxu0 %v1705
        %2054 = vmatprep.subr.mxu0 0.0
        %2055 = vmatpush1.msra.mxu0 %v1704
        %2056 = vmatprep.subr.mxu0 0.0
        %2057 = vmatpush1.msra.mxu0 %v1703
        %2058 = vmatprep.subr.mxu0 0.0
        %2059 = vmatpush1.msra.mxu0 %v1702
        %2060 = vmatprep.subr.mxu0 0.0
        %2061 = vmatpush1.msra.mxu0 %v1701
        %2062 = vmatprep.subr.mxu0 0.0
        %2063 = vmatpush1.msra.mxu0 %v1700
        %2064 = vmatprep.subr.mxu0 0.0
        %2065 = vmatpush1.msra.mxu0 %v1699
        %2066 = vmatprep.subr.mxu0 0.0
        %2067 = vmatpush1.msra.mxu0 %v1698
        %2068 = vmatprep.subr.mxu0 0.0
        %2069 = vmatpush1.msra.mxu0 %v1697
        %2070 = vmatprep.subr.mxu0 0.0
        %2071 = vmatpush1.msra.mxu0 %v1696
        %2072 = vmatprep.subr.mxu0 0.0
        %2073 = vmatpush2.msra.mxu0 0.0
        %2074 = vmatprep.subr.mxu0 0.0
        %2075 = vmatpush2.msra.mxu0 0.0
        %2076 = vmatprep.subr.mxu0 0.0
        %2077 = vmatpush2.msra.mxu0 0.0
        %2078 = vmatprep.subr.mxu0 0.0
        %2079 = vmatpush2.msra.mxu0 0.0
        %2080 = vmatprep.subr.mxu0 0.0
        %2081 = vmatpush2.msra.mxu0 0.0
        %2082 = vmatprep.subr.mxu0 0.0
        %2083 = vmatpush2.msra.mxu0 0.0
        %2084 = vmatprep.subr.mxu0 0.0
        %2085 = vmatpush2.msra.mxu0 0.0
        %2086 = vmatprep.subr.mxu0 0.0
        %2087 = vmatpush2.msra.mxu0 0.0
        %2088 = vmatprep.subr.mxu0 0.0
        %2089 = vmatpush2.msra.mxu0 0.0
        %2090 = vmatprep.subr.mxu0 0.0
        %2091 = vmatpush2.msra.mxu0 0.0
        %2092 = vmatprep.subr.mxu0 0.0
        %2093 = vmatpush2.msra.mxu0 0.0
        %2094 = vmatprep.subr.mxu0 0.0
        %2095 = vmatpush2.msra.mxu0 0.0
        %2096 = vmatprep.subr.mxu0 0.0
        %2097 = vmatpush2.msra.mxu0 0.0
        %2098 = vmatprep.subr.mxu0 0.0
        %2099 = vmatpush2.msra.mxu0 0.0
        %2100 = vmatprep.subr.mxu0 0.0
        %2101 = vmatpush2.msra.mxu0 0.0
        %2102 = vmatprep.subr.mxu0 0.0
        %2103 = vmatpush2.msra.mxu0 0.0
        %2104 = vmatprep.mubr.f32.mxu0 0.0
        %2105 = vmatmul.mubr.f32.gmra.mxu0 %v247
        %v2106 = vpop.f32.mrf.mxu0
        %v2107 = vadd.f32 0.0, %v2106
        %v2108 = vpop.f32.mrf.mxu0
        %2109 = vdwg.mxu0
        %2110 = vmatprep.subr.mxu0 0.0
        %2111 = vmatpush1.msra.mxu0 %v1727
        %2112 = vmatprep.subr.mxu0 0.0
        %2113 = vmatpush1.msra.mxu0 %v1726
        %2114 = vmatprep.subr.mxu0 0.0
        %2115 = vmatpush1.msra.mxu0 %v1725
        %2116 = vmatprep.subr.mxu0 0.0
        %2117 = vmatpush1.msra.mxu0 %v1724
        %2118 = vmatprep.subr.mxu0 0.0
        %2119 = vmatpush1.msra.mxu0 %v1723
        %2120 = vmatprep.subr.mxu0 0.0
        %2121 = vmatpush1.msra.mxu0 %v1722
        %2122 = vmatprep.subr.mxu0 0.0
        %2123 = vmatpush1.msra.mxu0 %v1721
        %2124 = vmatprep.subr.mxu0 0.0
        %2125 = vmatpush1.msra.mxu0 %v1720
        %2126 = vmatprep.subr.mxu0 0.0
        %2127 = vmatpush1.msra.mxu0 %v1719
        %2128 = vmatprep.subr.mxu0 0.0
        %2129 = vmatpush1.msra.mxu0 %v1718
        %2130 = vmatprep.subr.mxu0 0.0
        %2131 = vmatpush1.msra.mxu0 %v1717
        %2132 = vmatprep.subr.mxu0 0.0
        %2133 = vmatpush1.msra.mxu0 %v1716
        %2134 = vmatprep.subr.mxu0 0.0
        %2135 = vmatpush1.msra.mxu0 %v1715
        %2136 = vmatprep.subr.mxu0 0.0
        %2137 = vmatpush1.msra.mxu0 %v1714
        %2138 = vmatprep.subr.mxu0 0.0
        %2139 = vmatpush1.msra.mxu0 %v1713
        %2140 = vmatprep.subr.mxu0 0.0
        %2141 = vmatpush1.msra.mxu0 %v1712
        %2142 = vmatprep.subr.mxu0 0.0
        %2143 = vmatpush2.msra.mxu0 0.0
        %2144 = vmatprep.subr.mxu0 0.0
        %2145 = vmatpush2.msra.mxu0 0.0
        %2146 = vmatprep.subr.mxu0 0.0
        %2147 = vmatpush2.msra.mxu0 0.0
        %2148 = vmatprep.subr.mxu0 0.0
        %2149 = vmatpush2.msra.mxu0 0.0
        %2150 = vmatprep.subr.mxu0 0.0
        %2151 = vmatpush2.msra.mxu0 0.0
        %2152 = vmatprep.subr.mxu0 0.0
        %2153 = vmatpush2.msra.mxu0 0.0
        %2154 = vmatprep.subr.mxu0 0.0
        %2155 = vmatpush2.msra.mxu0 0.0
        %2156 = vmatprep.subr.mxu0 0.0
        %2157 = vmatpush2.msra.mxu0 0.0
        %2158 = vmatprep.subr.mxu0 0.0
        %2159 = vmatpush2.msra.mxu0 0.0
        %2160 = vmatprep.subr.mxu0 0.0
        %2161 = vmatpush2.msra.mxu0 0.0
        %2162 = vmatprep.subr.mxu0 0.0
        %2163 = vmatpush2.msra.mxu0 0.0
        %2164 = vmatprep.subr.mxu0 0.0
        %2165 = vmatpush2.msra.mxu0 0.0
        %2166 = vmatprep.subr.mxu0 0.0
        %2167 = vmatpush2.msra.mxu0 0.0
        %2168 = vmatprep.subr.mxu0 0.0
        %2169 = vmatpush2.msra.mxu0 0.0
        %2170 = vmatprep.subr.mxu0 0.0
        %2171 = vmatpush2.msra.mxu0 0.0
        %2172 = vmatprep.subr.mxu0 0.0
        %2173 = vmatpush2.msra.mxu0 0.0
        %2174 = vmatprep.mubr.f32.mxu0 0.0
        %2175 = vmatmul.mubr.f32.gmra.mxu0 %v247
        %v2176 = vpop.f32.mrf.mxu0
        %v2177 = vadd.f32 0.0, %v2176
        %v2178 = vpop.f32.mrf.mxu0
        %2179 = vdwg.mxu0
        %2180 = vmatprep.subr.mxu0 0.0
        %2181 = vmatpush1.msra.mxu0 %v1743
        %2182 = vmatprep.subr.mxu0 0.0
        %2183 = vmatpush1.msra.mxu0 %v1742
        %2184 = vmatprep.subr.mxu0 0.0
        %2185 = vmatpush1.msra.mxu0 %v1741
        %2186 = vmatprep.subr.mxu0 0.0
        %2187 = vmatpush1.msra.mxu0 %v1740
        %2188 = vmatprep.subr.mxu0 0.0
        %2189 = vmatpush1.msra.mxu0 %v1739
        %2190 = vmatprep.subr.mxu0 0.0
        %2191 = vmatpush1.msra.mxu0 %v1738
        %2192 = vmatprep.subr.mxu0 0.0
        %2193 = vmatpush1.msra.mxu0 %v1737
        %2194 = vmatprep.subr.mxu0 0.0
        %2195 = vmatpush1.msra.mxu0 %v1736
        %2196 = vmatprep.subr.mxu0 0.0
        %2197 = vmatpush1.msra.mxu0 %v1735
        %2198 = vmatprep.subr.mxu0 0.0
        %2199 = vmatpush1.msra.mxu0 %v1734
        %2200 = vmatprep.subr.mxu0 0.0
        %2201 = vmatpush1.msra.mxu0 %v1733
        %2202 = vmatprep.subr.mxu0 0.0
        %2203 = vmatpush1.msra.mxu0 %v1732
        %2204 = vmatprep.subr.mxu0 0.0
        %2205 = vmatpush1.msra.mxu0 %v1731
        %2206 = vmatprep.subr.mxu0 0.0
        %2207 = vmatpush1.msra.mxu0 %v1730
        %2208 = vmatprep.subr.mxu0 0.0
        %2209 = vmatpush1.msra.mxu0 %v1729
        %2210 = vmatprep.subr.mxu0 0.0
        %2211 = vmatpush1.msra.mxu0 %v1728
        %2212 = vmatprep.subr.mxu0 0.0
        %2213 = vmatpush2.msra.mxu0 0.0
        %2214 = vmatprep.subr.mxu0 0.0
        %2215 = vmatpush2.msra.mxu0 0.0
        %2216 = vmatprep.subr.mxu0 0.0
        %2217 = vmatpush2.msra.mxu0 0.0
        %2218 = vmatprep.subr.mxu0 0.0
        %2219 = vmatpush2.msra.mxu0 0.0
        %2220 = vmatprep.subr.mxu0 0.0
        %2221 = vmatpush2.msra.mxu0 0.0
        %2222 = vmatprep.subr.mxu0 0.0
        %2223 = vmatpush2.msra.mxu0 0.0
        %2224 = vmatprep.subr.mxu0 0.0
        %2225 = vmatpush2.msra.mxu0 0.0
        %2226 = vmatprep.subr.mxu0 0.0
        %2227 = vmatpush2.msra.mxu0 0.0
        %2228 = vmatprep.subr.mxu0 0.0
        %2229 = vmatpush2.msra.mxu0 0.0
        %2230 = vmatprep.subr.mxu0 0.0
        %2231 = vmatpush2.msra.mxu0 0.0
        %2232 = vmatprep.subr.mxu0 0.0
        %2233 = vmatpush2.msra.mxu0 0.0
        %2234 = vmatprep.subr.mxu0 0.0
        %2235 = vmatpush2.msra.mxu0 0.0
        %2236 = vmatprep.subr.mxu0 0.0
        %2237 = vmatpush2.msra.mxu0 0.0
        %2238 = vmatprep.subr.mxu0 0.0
        %2239 = vmatpush2.msra.mxu0 0.0
        %2240 = vmatprep.subr.mxu0 0.0
        %2241 = vmatpush2.msra.mxu0 0.0
        %2242 = vmatprep.subr.mxu0 0.0
        %2243 = vmatpush2.msra.mxu0 0.0
        %2244 = vmatprep.mubr.f32.mxu0 0.0
        %2245 = vmatmul.mubr.f32.gmra.mxu0 %v247
        %v2246 = vpop.f32.mrf.mxu0
        %v2247 = vadd.f32 0.0, %v2246
        %v2248 = vpop.f32.mrf.mxu0
        %2249 = vdwg.mxu0
        %2250 = vmatprep.subr.mxu0 0.0
        %2251 = vmatpush1.msra.mxu0 %v1759
        %2252 = vmatprep.subr.mxu0 0.0
        %2253 = vmatpush1.msra.mxu0 %v1758
        %2254 = vmatprep.subr.mxu0 0.0
        %2255 = vmatpush1.msra.mxu0 %v1757
        %2256 = vmatprep.subr.mxu0 0.0
        %2257 = vmatpush1.msra.mxu0 %v1756
        %2258 = vmatprep.subr.mxu0 0.0
        %2259 = vmatpush1.msra.mxu0 %v1755
        %2260 = vmatprep.subr.mxu0 0.0
        %2261 = vmatpush1.msra.mxu0 %v1754
        %2262 = vmatprep.subr.mxu0 0.0
        %2263 = vmatpush1.msra.mxu0 %v1753
        %2264 = vmatprep.subr.mxu0 0.0
        %2265 = vmatpush1.msra.mxu0 %v1752
        %2266 = vmatprep.subr.mxu0 0.0
        %2267 = vmatpush1.msra.mxu0 %v1751
        %2268 = vmatprep.subr.mxu0 0.0
        %2269 = vmatpush1.msra.mxu0 %v1750
        %2270 = vmatprep.subr.mxu0 0.0
        %2271 = vmatpush1.msra.mxu0 %v1749
        %2272 = vmatprep.subr.mxu0 0.0
        %2273 = vmatpush1.msra.mxu0 %v1748
        %2274 = vmatprep.subr.mxu0 0.0
        %2275 = vmatpush1.msra.mxu0 %v1747
        %2276 = vmatprep.subr.mxu0 0.0
        %2277 = vmatpush1.msra.mxu0 %v1746
        %2278 = vmatprep.subr.mxu0 0.0
        %2279 = vmatpush1.msra.mxu0 %v1745
        %2280 = vmatprep.subr.mxu0 0.0
        %2281 = vmatpush1.msra.mxu0 %v1744
        %2282 = vmatprep.subr.mxu0 0.0
        %2283 = vmatpush2.msra.mxu0 0.0
        %2284 = vmatprep.subr.mxu0 0.0
        %2285 = vmatpush2.msra.mxu0 0.0
        %2286 = vmatprep.subr.mxu0 0.0
        %2287 = vmatpush2.msra.mxu0 0.0
        %2288 = vmatprep.subr.mxu0 0.0
        %2289 = vmatpush2.msra.mxu0 0.0
        %2290 = vmatprep.subr.mxu0 0.0
        %2291 = vmatpush2.msra.mxu0 0.0
        %2292 = vmatprep.subr.mxu0 0.0
        %2293 = vmatpush2.msra.mxu0 0.0
        %2294 = vmatprep.subr.mxu0 0.0
        %2295 = vmatpush2.msra.mxu0 0.0
        %2296 = vmatprep.subr.mxu0 0.0
        %2297 = vmatpush2.msra.mxu0 0.0
        %2298 = vmatprep.subr.mxu0 0.0
        %2299 = vmatpush2.msra.mxu0 0.0
        %2300 = vmatprep.subr.mxu0 0.0
        %2301 = vmatpush2.msra.mxu0 0.0
        %2302 = vmatprep.subr.mxu0 0.0
        %2303 = vmatpush2.msra.mxu0 0.0
        %2304 = vmatprep.subr.mxu0 0.0
        %2305 = vmatpush2.msra.mxu0 0.0
        %2306 = vmatprep.subr.mxu0 0.0
        %2307 = vmatpush2.msra.mxu0 0.0
        %2308 = vmatprep.subr.mxu0 0.0
        %2309 = vmatpush2.msra.mxu0 0.0
        %2310 = vmatprep.subr.mxu0 0.0
        %2311 = vmatpush2.msra.mxu0 0.0
        %2312 = vmatprep.subr.mxu0 0.0
        %2313 = vmatpush2.msra.mxu0 0.0
        %2314 = vmatprep.mubr.f32.mxu0 0.0
        %2315 = vmatmul.mubr.f32.gmra.mxu0 %v247
        %v2316 = vpop.f32.mrf.mxu0
        %v2317 = vadd.f32 0.0, %v2316
        %v2318 = vpop.f32.mrf.mxu0
        %2319 = vdwg.mxu0
        %v2320 = vlaneseq
        %v2321 = vshrl.u32 %v2320, 7
        %v2322 = vlaneseq
        %v2323 = vand.u32 %v2322, 127
        %vm2324 = vcmp.ge.s32.totalorder %v2321, %v2323
        %v2325 = vsel %vm2324, 0.0, -1e+30
        %vm2326 = vcmask 130048
        %v2328 = vsel %vm2326, %v936, 0
        %v2331 = vsel %vm2326, %v1139, 0
        %2333 = vmatprep.subr.mxu0 0.0
        %2334 = vmatpush1.xpose.msra.mxu0 0.0
        %2335 = vmatprep.subr.mxu0 0.0
        %2336 = vmatpush1.xpose.msra.mxu0 0.0
        %2337 = vmatprep.subr.mxu0 0.0
        %2338 = vmatpush1.xpose.msra.mxu0 0.0
        %2339 = vmatprep.subr.mxu0 0.0
        %2340 = vmatpush1.xpose.msra.mxu0 0.0
        %2341 = vmatprep.subr.mxu0 0.0
        %2342 = vmatpush1.xpose.msra.mxu0 0.0
        %2343 = vmatprep.subr.mxu0 0.0
        %2344 = vmatpush1.xpose.msra.mxu0 0.0
        %2345 = vmatprep.subr.mxu0 0.0
        %2346 = vmatpush1.xpose.msra.mxu0 0.0
        %2347 = vmatprep.subr.mxu0 0.0
        %2348 = vmatpush1.xpose.msra.mxu0 0.0
        %2349 = vmatprep.subr.mxu0 0.0
        %2350 = vmatpush1.xpose.msra.mxu0 0.0
        %2351 = vmatprep.subr.mxu0 0.0
        %2352 = vmatpush1.xpose.msra.mxu0 0.0
        %2353 = vmatprep.subr.mxu0 0.0
        %2354 = vmatpush1.xpose.msra.mxu0 0.0
        %2355 = vmatprep.subr.mxu0 0.0
        %2356 = vmatpush1.xpose.msra.mxu0 0.0
        %2357 = vmatprep.subr.mxu0 0.0
        %2358 = vmatpush1.xpose.msra.mxu0 0.0
        %2359 = vmatprep.subr.mxu0 0.0
        %2360 = vmatpush1.xpose.msra.mxu0 0.0
        %2361 = vmatprep.subr.mxu0 0.0
        %2362 = vmatpush1.xpose.msra.mxu0 0.0
        %2363 = vmatprep.subr.mxu0 0.0
        %2364 = vmatpush1.xpose.msra.mxu0 %v2331
        %2365 = vmatprep.subr.mxu0 0.0
        %2366 = vmatpush2.xpose.msra.mxu0 0.0
        %2367 = vmatprep.subr.mxu0 0.0
        %2368 = vmatpush2.xpose.msra.mxu0 0.0
        %2369 = vmatprep.subr.mxu0 0.0
        %2370 = vmatpush2.xpose.msra.mxu0 0.0
        %2371 = vmatprep.subr.mxu0 0.0
        %2372 = vmatpush2.xpose.msra.mxu0 0.0
        %2373 = vmatprep.subr.mxu0 0.0
        %2374 = vmatpush2.xpose.msra.mxu0 0.0
        %2375 = vmatprep.subr.mxu0 0.0
        %2376 = vmatpush2.xpose.msra.mxu0 0.0
        %2377 = vmatprep.subr.mxu0 0.0
        %2378 = vmatpush2.xpose.msra.mxu0 0.0
        %2379 = vmatprep.subr.mxu0 0.0
        %2380 = vmatpush2.xpose.msra.mxu0 0.0
        %2381 = vmatprep.subr.mxu0 0.0
        %2382 = vmatpush2.xpose.msra.mxu0 0.0
        %2383 = vmatprep.subr.mxu0 0.0
        %2384 = vmatpush2.xpose.msra.mxu0 0.0
        %2385 = vmatprep.subr.mxu0 0.0
        %2386 = vmatpush2.xpose.msra.mxu0 0.0
        %2387 = vmatprep.subr.mxu0 0.0
        %2388 = vmatpush2.xpose.msra.mxu0 0.0
        %2389 = vmatprep.subr.mxu0 0.0
        %2390 = vmatpush2.xpose.msra.mxu0 0.0
        %2391 = vmatprep.subr.mxu0 0.0
        %2392 = vmatpush2.xpose.msra.mxu0 0.0
        %2393 = vmatprep.subr.mxu0 0.0
        %2394 = vmatpush2.xpose.msra.mxu0 0.0
        %2395 = vmatprep.subr.mxu0 0.0
        %2396 = vmatpush2.xpose.msra.mxu0 0.0
        %2397 = vmatprep.mubr.f32.mxu0 0.0
        %2398 = vmatmul.mubr.f32.gmra.mxu0 %v2328
        %v2399 = vpop.f32.mrf.mxu0
        %v2400 = vadd.f32 %v2325, %v2399
        %v2401 = vpop.f32.mrf.mxu0
        %2402 = vdwg.mxu0
        %v2404 = vsel %vm2326, %v937, 0
        %v2407 = vsel %vm2326, %v1209, 0
        %2409 = vmatprep.subr.mxu0 0.0
        %2410 = vmatpush1.xpose.msra.mxu0 0.0
        %2411 = vmatprep.subr.mxu0 0.0
        %2412 = vmatpush1.xpose.msra.mxu0 0.0
        %2413 = vmatprep.subr.mxu0 0.0
        %2414 = vmatpush1.xpose.msra.mxu0 0.0
        %2415 = vmatprep.subr.mxu0 0.0
        %2416 = vmatpush1.xpose.msra.mxu0 0.0
        %2417 = vmatprep.subr.mxu0 0.0
        %2418 = vmatpush1.xpose.msra.mxu0 0.0
        %2419 = vmatprep.subr.mxu0 0.0
        %2420 = vmatpush1.xpose.msra.mxu0 0.0
        %2421 = vmatprep.subr.mxu0 0.0
        %2422 = vmatpush1.xpose.msra.mxu0 0.0
        %2423 = vmatprep.subr.mxu0 0.0
        %2424 = vmatpush1.xpose.msra.mxu0 0.0
        %2425 = vmatprep.subr.mxu0 0.0
        %2426 = vmatpush1.xpose.msra.mxu0 0.0
        %2427 = vmatprep.subr.mxu0 0.0
        %2428 = vmatpush1.xpose.msra.mxu0 0.0
        %2429 = vmatprep.subr.mxu0 0.0
        %2430 = vmatpush1.xpose.msra.mxu0 0.0
        %2431 = vmatprep.subr.mxu0 0.0
        %2432 = vmatpush1.xpose.msra.mxu0 0.0
        %2433 = vmatprep.subr.mxu0 0.0
        %2434 = vmatpush1.xpose.msra.mxu0 0.0
        %2435 = vmatprep.subr.mxu0 0.0
        %2436 = vmatpush1.xpose.msra.mxu0 0.0
        %2437 = vmatprep.subr.mxu0 0.0
        %2438 = vmatpush1.xpose.msra.mxu0 0.0
        %2439 = vmatprep.subr.mxu0 0.0
        %2440 = vmatpush1.xpose.msra.mxu0 %v2407
        %2441 = vmatprep.subr.mxu0 0.0
        %2442 = vmatpush2.xpose.msra.mxu0 0.0
        %2443 = vmatprep.subr.mxu0 0.0
        %2444 = vmatpush2.xpose.msra.mxu0 0.0
        %2445 = vmatprep.subr.mxu0 0.0
        %2446 = vmatpush2.xpose.msra.mxu0 0.0
        %2447 = vmatprep.subr.mxu0 0.0
        %2448 = vmatpush2.xpose.msra.mxu0 0.0
        %2449 = vmatprep.subr.mxu0 0.0
        %2450 = vmatpush2.xpose.msra.mxu0 0.0
        %2451 = vmatprep.subr.mxu0 0.0
        %2452 = vmatpush2.xpose.msra.mxu0 0.0
        %2453 = vmatprep.subr.mxu0 0.0
        %2454 = vmatpush2.xpose.msra.mxu0 0.0
        %2455 = vmatprep.subr.mxu0 0.0
        %2456 = vmatpush2.xpose.msra.mxu0 0.0
        %2457 = vmatprep.subr.mxu0 0.0
        %2458 = vmatpush2.xpose.msra.mxu0 0.0
        %2459 = vmatprep.subr.mxu0 0.0
        %2460 = vmatpush2.xpose.msra.mxu0 0.0
        %2461 = vmatprep.subr.mxu0 0.0
        %2462 = vmatpush2.xpose.msra.mxu0 0.0
        %2463 = vmatprep.subr.mxu0 0.0
        %2464 = vmatpush2.xpose.msra.mxu0 0.0
        %2465 = vmatprep.subr.mxu0 0.0
        %2466 = vmatpush2.xpose.msra.mxu0 0.0
        %2467 = vmatprep.subr.mxu0 0.0
        %2468 = vmatpush2.xpose.msra.mxu0 0.0
        %2469 = vmatprep.subr.mxu0 0.0
        %2470 = vmatpush2.xpose.msra.mxu0 0.0
        %2471 = vmatprep.subr.mxu0 0.0
        %2472 = vmatpush2.xpose.msra.mxu0 0.0
        %2473 = vmatprep.mubr.f32.mxu0 0.0
        %2474 = vmatmul.mubr.f32.gmra.mxu0 %v2404
        %v2475 = vpop.f32.mrf.mxu0
        %v2476 = vadd.f32 %v2325, %v2475
        %v2477 = vpop.f32.mrf.mxu0
        %2478 = vdwg.mxu0
        %v2480 = vsel %vm2326, %v938, 0
        %v2483 = vsel %vm2326, %v1279, 0
        %2485 = vmatprep.subr.mxu0 0.0
        %2486 = vmatpush1.xpose.msra.mxu0 0.0
        %2487 = vmatprep.subr.mxu0 0.0
        %2488 = vmatpush1.xpose.msra.mxu0 0.0
        %2489 = vmatprep.subr.mxu0 0.0
        %2490 = vmatpush1.xpose.msra.mxu0 0.0
        %2491 = vmatprep.subr.mxu0 0.0
        %2492 = vmatpush1.xpose.msra.mxu0 0.0
        %2493 = vmatprep.subr.mxu0 0.0
        %2494 = vmatpush1.xpose.msra.mxu0 0.0
        %2495 = vmatprep.subr.mxu0 0.0
        %2496 = vmatpush1.xpose.msra.mxu0 0.0
        %2497 = vmatprep.subr.mxu0 0.0
        %2498 = vmatpush1.xpose.msra.mxu0 0.0
        %2499 = vmatprep.subr.mxu0 0.0
        %2500 = vmatpush1.xpose.msra.mxu0 0.0
        %2501 = vmatprep.subr.mxu0 0.0
        %2502 = vmatpush1.xpose.msra.mxu0 0.0
        %2503 = vmatprep.subr.mxu0 0.0
        %2504 = vmatpush1.xpose.msra.mxu0 0.0
        %2505 = vmatprep.subr.mxu0 0.0
        %2506 = vmatpush1.xpose.msra.mxu0 0.0
        %2507 = vmatprep.subr.mxu0 0.0
        %2508 = vmatpush1.xpose.msra.mxu0 0.0
        %2509 = vmatprep.subr.mxu0 0.0
        %2510 = vmatpush1.xpose.msra.mxu0 0.0
        %2511 = vmatprep.subr.mxu0 0.0
        %2512 = vmatpush1.xpose.msra.mxu0 0.0
        %2513 = vmatprep.subr.mxu0 0.0
        %2514 = vmatpush1.xpose.msra.mxu0 0.0
        %2515 = vmatprep.subr.mxu0 0.0
        %2516 = vmatpush1.xpose.msra.mxu0 %v2483
        %2517 = vmatprep.subr.mxu0 0.0
        %2518 = vmatpush2.xpose.msra.mxu0 0.0
        %2519 = vmatprep.subr.mxu0 0.0
        %2520 = vmatpush2.xpose.msra.mxu0 0.0
        %2521 = vmatprep.subr.mxu0 0.0
        %2522 = vmatpush2.xpose.msra.mxu0 0.0
        %2523 = vmatprep.subr.mxu0 0.0
        %2524 = vmatpush2.xpose.msra.mxu0 0.0
        %2525 = vmatprep.subr.mxu0 0.0
        %2526 = vmatpush2.xpose.msra.mxu0 0.0
        %2527 = vmatprep.subr.mxu0 0.0
        %2528 = vmatpush2.xpose.msra.mxu0 0.0
        %2529 = vmatprep.subr.mxu0 0.0
        %2530 = vmatpush2.xpose.msra.mxu0 0.0
        %2531 = vmatprep.subr.mxu0 0.0
        %2532 = vmatpush2.xpose.msra.mxu0 0.0
        %2533 = vmatprep.subr.mxu0 0.0
        %2534 = vmatpush2.xpose.msra.mxu0 0.0
        %2535 = vmatprep.subr.mxu0 0.0
        %2536 = vmatpush2.xpose.msra.mxu0 0.0
        %2537 = vmatprep.subr.mxu0 0.0
        %2538 = vmatpush2.xpose.msra.mxu0 0.0
        %2539 = vmatprep.subr.mxu0 0.0
        %2540 = vmatpush2.xpose.msra.mxu0 0.0
        %2541 = vmatprep.subr.mxu0 0.0
        %2542 = vmatpush2.xpose.msra.mxu0 0.0
        %2543 = vmatprep.subr.mxu0 0.0
        %2544 = vmatpush2.xpose.msra.mxu0 0.0
        %2545 = vmatprep.subr.mxu0 0.0
        %2546 = vmatpush2.xpose.msra.mxu0 0.0
        %2547 = vmatprep.subr.mxu0 0.0
        %2548 = vmatpush2.xpose.msra.mxu0 0.0
        %2549 = vmatprep.mubr.f32.mxu0 0.0
        %2550 = vmatmul.mubr.f32.gmra.mxu0 %v2480
        %v2551 = vpop.f32.mrf.mxu0
        %v2552 = vadd.f32 %v2325, %v2551
        %v2553 = vpop.f32.mrf.mxu0
        %2554 = vdwg.mxu0
        %v2556 = vsel %vm2326, %v939, 0
        %v2559 = vsel %vm2326, %v1349, 0
        %2561 = vmatprep.subr.mxu0 0.0
        %2562 = vmatpush1.xpose.msra.mxu0 0.0
        %2563 = vmatprep.subr.mxu0 0.0
        %2564 = vmatpush1.xpose.msra.mxu0 0.0
        %2565 = vmatprep.subr.mxu0 0.0
        %2566 = vmatpush1.xpose.msra.mxu0 0.0
        %2567 = vmatprep.subr.mxu0 0.0
        %2568 = vmatpush1.xpose.msra.mxu0 0.0
        %2569 = vmatprep.subr.mxu0 0.0
        %2570 = vmatpush1.xpose.msra.mxu0 0.0
        %2571 = vmatprep.subr.mxu0 0.0
        %2572 = vmatpush1.xpose.msra.mxu0 0.0
        %2573 = vmatprep.subr.mxu0 0.0
        %2574 = vmatpush1.xpose.msra.mxu0 0.0
        %2575 = vmatprep.subr.mxu0 0.0
        %2576 = vmatpush1.xpose.msra.mxu0 0.0
        %2577 = vmatprep.subr.mxu0 0.0
        %2578 = vmatpush1.xpose.msra.mxu0 0.0
        %2579 = vmatprep.subr.mxu0 0.0
        %2580 = vmatpush1.xpose.msra.mxu0 0.0
        %2581 = vmatprep.subr.mxu0 0.0
        %2582 = vmatpush1.xpose.msra.mxu0 0.0
        %2583 = vmatprep.subr.mxu0 0.0
        %2584 = vmatpush1.xpose.msra.mxu0 0.0
        %2585 = vmatprep.subr.mxu0 0.0
        %2586 = vmatpush1.xpose.msra.mxu0 0.0
        %2587 = vmatprep.subr.mxu0 0.0
        %2588 = vmatpush1.xpose.msra.mxu0 0.0
        %2589 = vmatprep.subr.mxu0 0.0
        %2590 = vmatpush1.xpose.msra.mxu0 0.0
        %2591 = vmatprep.subr.mxu0 0.0
        %2592 = vmatpush1.xpose.msra.mxu0 %v2559
        %2593 = vmatprep.subr.mxu0 0.0
        %2594 = vmatpush2.xpose.msra.mxu0 0.0
        %2595 = vmatprep.subr.mxu0 0.0
        %2596 = vmatpush2.xpose.msra.mxu0 0.0
        %2597 = vmatprep.subr.mxu0 0.0
        %2598 = vmatpush2.xpose.msra.mxu0 0.0
        %2599 = vmatprep.subr.mxu0 0.0
        %2600 = vmatpush2.xpose.msra.mxu0 0.0
        %2601 = vmatprep.subr.mxu0 0.0
        %2602 = vmatpush2.xpose.msra.mxu0 0.0
        %2603 = vmatprep.subr.mxu0 0.0
        %2604 = vmatpush2.xpose.msra.mxu0 0.0
        %2605 = vmatprep.subr.mxu0 0.0
        %2606 = vmatpush2.xpose.msra.mxu0 0.0
        %2607 = vmatprep.subr.mxu0 0.0
        %2608 = vmatpush2.xpose.msra.mxu0 0.0
        %2609 = vmatprep.subr.mxu0 0.0
        %2610 = vmatpush2.xpose.msra.mxu0 0.0
        %2611 = vmatprep.subr.mxu0 0.0
        %2612 = vmatpush2.xpose.msra.mxu0 0.0
        %2613 = vmatprep.subr.mxu0 0.0
        %2614 = vmatpush2.xpose.msra.mxu0 0.0
        %2615 = vmatprep.subr.mxu0 0.0
        %2616 = vmatpush2.xpose.msra.mxu0 0.0
        %2617 = vmatprep.subr.mxu0 0.0
        %2618 = vmatpush2.xpose.msra.mxu0 0.0
        %2619 = vmatprep.subr.mxu0 0.0
        %2620 = vmatpush2.xpose.msra.mxu0 0.0
        %2621 = vmatprep.subr.mxu0 0.0
        %2622 = vmatpush2.xpose.msra.mxu0 0.0
        %2623 = vmatprep.subr.mxu0 0.0
        %2624 = vmatpush2.xpose.msra.mxu0 0.0
        %2625 = vmatprep.mubr.f32.mxu0 0.0
        %2626 = vmatmul.mubr.f32.gmra.mxu0 %v2556
        %v2627 = vpop.f32.mrf.mxu0
        %v2628 = vadd.f32 %v2325, %v2627
        %v2629 = vpop.f32.mrf.mxu0
        %2630 = vdwg.mxu0
        %v2632 = vsel %vm2326, %v940, 0
        %v2635 = vsel %vm2326, %v1419, 0
        %2637 = vmatprep.subr.mxu0 0.0
        %2638 = vmatpush1.xpose.msra.mxu0 0.0
        %2639 = vmatprep.subr.mxu0 0.0
        %2640 = vmatpush1.xpose.msra.mxu0 0.0
        %2641 = vmatprep.subr.mxu0 0.0
        %2642 = vmatpush1.xpose.msra.mxu0 0.0
        %2643 = vmatprep.subr.mxu0 0.0
        %2644 = vmatpush1.xpose.msra.mxu0 0.0
        %2645 = vmatprep.subr.mxu0 0.0
        %2646 = vmatpush1.xpose.msra.mxu0 0.0
        %2647 = vmatprep.subr.mxu0 0.0
        %2648 = vmatpush1.xpose.msra.mxu0 0.0
        %2649 = vmatprep.subr.mxu0 0.0
        %2650 = vmatpush1.xpose.msra.mxu0 0.0
        %2651 = vmatprep.subr.mxu0 0.0
        %2652 = vmatpush1.xpose.msra.mxu0 0.0
        %2653 = vmatprep.subr.mxu0 0.0
        %2654 = vmatpush1.xpose.msra.mxu0 0.0
        %2655 = vmatprep.subr.mxu0 0.0
        %2656 = vmatpush1.xpose.msra.mxu0 0.0
        %2657 = vmatprep.subr.mxu0 0.0
        %2658 = vmatpush1.xpose.msra.mxu0 0.0
        %2659 = vmatprep.subr.mxu0 0.0
        %2660 = vmatpush1.xpose.msra.mxu0 0.0
        %2661 = vmatprep.subr.mxu0 0.0
        %2662 = vmatpush1.xpose.msra.mxu0 0.0
        %2663 = vmatprep.subr.mxu0 0.0
        %2664 = vmatpush1.xpose.msra.mxu0 0.0
        %2665 = vmatprep.subr.mxu0 0.0
        %2666 = vmatpush1.xpose.msra.mxu0 0.0
        %2667 = vmatprep.subr.mxu0 0.0
        %2668 = vmatpush1.xpose.msra.mxu0 %v2635
        %2669 = vmatprep.subr.mxu0 0.0
        %2670 = vmatpush2.xpose.msra.mxu0 0.0
        %2671 = vmatprep.subr.mxu0 0.0
        %2672 = vmatpush2.xpose.msra.mxu0 0.0
        %2673 = vmatprep.subr.mxu0 0.0
        %2674 = vmatpush2.xpose.msra.mxu0 0.0
        %2675 = vmatprep.subr.mxu0 0.0
        %2676 = vmatpush2.xpose.msra.mxu0 0.0
        %2677 = vmatprep.subr.mxu0 0.0
        %2678 = vmatpush2.xpose.msra.mxu0 0.0
        %2679 = vmatprep.subr.mxu0 0.0
        %2680 = vmatpush2.xpose.msra.mxu0 0.0
        %2681 = vmatprep.subr.mxu0 0.0
        %2682 = vmatpush2.xpose.msra.mxu0 0.0
        %2683 = vmatprep.subr.mxu0 0.0
        %2684 = vmatpush2.xpose.msra.mxu0 0.0
        %2685 = vmatprep.subr.mxu0 0.0
        %2686 = vmatpush2.xpose.msra.mxu0 0.0
        %2687 = vmatprep.subr.mxu0 0.0
        %2688 = vmatpush2.xpose.msra.mxu0 0.0
        %2689 = vmatprep.subr.mxu0 0.0
        %2690 = vmatpush2.xpose.msra.mxu0 0.0
        %2691 = vmatprep.subr.mxu0 0.0
        %2692 = vmatpush2.xpose.msra.mxu0 0.0
        %2693 = vmatprep.subr.mxu0 0.0
        %2694 = vmatpush2.xpose.msra.mxu0 0.0
        %2695 = vmatprep.subr.mxu0 0.0
        %2696 = vmatpush2.xpose.msra.mxu0 0.0
        %2697 = vmatprep.subr.mxu0 0.0
        %2698 = vmatpush2.xpose.msra.mxu0 0.0
        %2699 = vmatprep.subr.mxu0 0.0
        %2700 = vmatpush2.xpose.msra.mxu0 0.0
        %2701 = vmatprep.mubr.f32.mxu0 0.0
        %2702 = vmatmul.mubr.f32.gmra.mxu0 %v2632
        %v2703 = vpop.f32.mrf.mxu0
        %v2704 = vadd.f32 %v2325, %v2703
        %v2705 = vpop.f32.mrf.mxu0
        %2706 = vdwg.mxu0
        %v2708 = vsel %vm2326, %v941, 0
        %v2711 = vsel %vm2326, %v1489, 0
        %2713 = vmatprep.subr.mxu0 0.0
        %2714 = vmatpush1.xpose.msra.mxu0 0.0
        %2715 = vmatprep.subr.mxu0 0.0
        %2716 = vmatpush1.xpose.msra.mxu0 0.0
        %2717 = vmatprep.subr.mxu0 0.0
        %2718 = vmatpush1.xpose.msra.mxu0 0.0
        %2719 = vmatprep.subr.mxu0 0.0
        %2720 = vmatpush1.xpose.msra.mxu0 0.0
        %2721 = vmatprep.subr.mxu0 0.0
        %2722 = vmatpush1.xpose.msra.mxu0 0.0
        %2723 = vmatprep.subr.mxu0 0.0
        %2724 = vmatpush1.xpose.msra.mxu0 0.0
        %2725 = vmatprep.subr.mxu0 0.0
        %2726 = vmatpush1.xpose.msra.mxu0 0.0
        %2727 = vmatprep.subr.mxu0 0.0
        %2728 = vmatpush1.xpose.msra.mxu0 0.0
        %2729 = vmatprep.subr.mxu0 0.0
        %2730 = vmatpush1.xpose.msra.mxu0 0.0
        %2731 = vmatprep.subr.mxu0 0.0
        %2732 = vmatpush1.xpose.msra.mxu0 0.0
        %2733 = vmatprep.subr.mxu0 0.0
        %2734 = vmatpush1.xpose.msra.mxu0 0.0
        %2735 = vmatprep.subr.mxu0 0.0
        %2736 = vmatpush1.xpose.msra.mxu0 0.0
        %2737 = vmatprep.subr.mxu0 0.0
        %2738 = vmatpush1.xpose.msra.mxu0 0.0
        %2739 = vmatprep.subr.mxu0 0.0
        %2740 = vmatpush1.xpose.msra.mxu0 0.0
        %2741 = vmatprep.subr.mxu0 0.0
        %2742 = vmatpush1.xpose.msra.mxu0 0.0
        %2743 = vmatprep.subr.mxu0 0.0
        %2744 = vmatpush1.xpose.msra.mxu0 %v2711
        %2745 = vmatprep.subr.mxu0 0.0
        %2746 = vmatpush2.xpose.msra.mxu0 0.0
        %2747 = vmatprep.subr.mxu0 0.0
        %2748 = vmatpush2.xpose.msra.mxu0 0.0
        %2749 = vmatprep.subr.mxu0 0.0
        %2750 = vmatpush2.xpose.msra.mxu0 0.0
        %2751 = vmatprep.subr.mxu0 0.0
        %2752 = vmatpush2.xpose.msra.mxu0 0.0
        %2753 = vmatprep.subr.mxu0 0.0
        %2754 = vmatpush2.xpose.msra.mxu0 0.0
        %2755 = vmatprep.subr.mxu0 0.0
        %2756 = vmatpush2.xpose.msra.mxu0 0.0
        %2757 = vmatprep.subr.mxu0 0.0
        %2758 = vmatpush2.xpose.msra.mxu0 0.0
        %2759 = vmatprep.subr.mxu0 0.0
        %2760 = vmatpush2.xpose.msra.mxu0 0.0
        %2761 = vmatprep.subr.mxu0 0.0
        %2762 = vmatpush2.xpose.msra.mxu0 0.0
        %2763 = vmatprep.subr.mxu0 0.0
        %2764 = vmatpush2.xpose.msra.mxu0 0.0
        %2765 = vmatprep.subr.mxu0 0.0
        %2766 = vmatpush2.xpose.msra.mxu0 0.0
        %2767 = vmatprep.subr.mxu0 0.0
        %2768 = vmatpush2.xpose.msra.mxu0 0.0
        %2769 = vmatprep.subr.mxu0 0.0
        %2770 = vmatpush2.xpose.msra.mxu0 0.0
        %2771 = vmatprep.subr.mxu0 0.0
        %2772 = vmatpush2.xpose.msra.mxu0 0.0
        %2773 = vmatprep.subr.mxu0 0.0
        %2774 = vmatpush2.xpose.msra.mxu0 0.0
        %2775 = vmatprep.subr.mxu0 0.0
        %2776 = vmatpush2.xpose.msra.mxu0 0.0
        %2777 = vmatprep.mubr.f32.mxu0 0.0
        %2778 = vmatmul.mubr.f32.gmra.mxu0 %v2708
        %v2779 = vpop.f32.mrf.mxu0
        %v2780 = vadd.f32 %v2325, %v2779
        %v2781 = vpop.f32.mrf.mxu0
        %2782 = vdwg.mxu0
        %v2784 = vsel %vm2326, %v942, 0
        %v2787 = vsel %vm2326, %v1559, 0
        %2789 = vmatprep.subr.mxu0 0.0
        %2790 = vmatpush1.xpose.msra.mxu0 0.0
        %2791 = vmatprep.subr.mxu0 0.0
        %2792 = vmatpush1.xpose.msra.mxu0 0.0
        %2793 = vmatprep.subr.mxu0 0.0
        %2794 = vmatpush1.xpose.msra.mxu0 0.0
        %2795 = vmatprep.subr.mxu0 0.0
        %2796 = vmatpush1.xpose.msra.mxu0 0.0
        %2797 = vmatprep.subr.mxu0 0.0
        %2798 = vmatpush1.xpose.msra.mxu0 0.0
        %2799 = vmatprep.subr.mxu0 0.0
        %2800 = vmatpush1.xpose.msra.mxu0 0.0
        %2801 = vmatprep.subr.mxu0 0.0
        %2802 = vmatpush1.xpose.msra.mxu0 0.0
        %2803 = vmatprep.subr.mxu0 0.0
        %2804 = vmatpush1.xpose.msra.mxu0 0.0
        %2805 = vmatprep.subr.mxu0 0.0
        %2806 = vmatpush1.xpose.msra.mxu0 0.0
        %2807 = vmatprep.subr.mxu0 0.0
        %2808 = vmatpush1.xpose.msra.mxu0 0.0
        %2809 = vmatprep.subr.mxu0 0.0
        %2810 = vmatpush1.xpose.msra.mxu0 0.0
        %2811 = vmatprep.subr.mxu0 0.0
        %2812 = vmatpush1.xpose.msra.mxu0 0.0
        %2813 = vmatprep.subr.mxu0 0.0
        %2814 = vmatpush1.xpose.msra.mxu0 0.0
        %2815 = vmatprep.subr.mxu0 0.0
        %2816 = vmatpush1.xpose.msra.mxu0 0.0
        %2817 = vmatprep.subr.mxu0 0.0
        %2818 = vmatpush1.xpose.msra.mxu0 0.0
        %2819 = vmatprep.subr.mxu0 0.0
        %2820 = vmatpush1.xpose.msra.mxu0 %v2787
        %2821 = vmatprep.subr.mxu0 0.0
        %2822 = vmatpush2.xpose.msra.mxu0 0.0
        %2823 = vmatprep.subr.mxu0 0.0
        %2824 = vmatpush2.xpose.msra.mxu0 0.0
        %2825 = vmatprep.subr.mxu0 0.0
        %2826 = vmatpush2.xpose.msra.mxu0 0.0
        %2827 = vmatprep.subr.mxu0 0.0
        %2828 = vmatpush2.xpose.msra.mxu0 0.0
        %2829 = vmatprep.subr.mxu0 0.0
        %2830 = vmatpush2.xpose.msra.mxu0 0.0
        %2831 = vmatprep.subr.mxu0 0.0
        %2832 = vmatpush2.xpose.msra.mxu0 0.0
        %2833 = vmatprep.subr.mxu0 0.0
        %2834 = vmatpush2.xpose.msra.mxu0 0.0
        %2835 = vmatprep.subr.mxu0 0.0
        %2836 = vmatpush2.xpose.msra.mxu0 0.0
        %2837 = vmatprep.subr.mxu0 0.0
        %2838 = vmatpush2.xpose.msra.mxu0 0.0
        %2839 = vmatprep.subr.mxu0 0.0
        %2840 = vmatpush2.xpose.msra.mxu0 0.0
        %2841 = vmatprep.subr.mxu0 0.0
        %2842 = vmatpush2.xpose.msra.mxu0 0.0
        %2843 = vmatprep.subr.mxu0 0.0
        %2844 = vmatpush2.xpose.msra.mxu0 0.0
        %2845 = vmatprep.subr.mxu0 0.0
        %2846 = vmatpush2.xpose.msra.mxu0 0.0
        %2847 = vmatprep.subr.mxu0 0.0
        %2848 = vmatpush2.xpose.msra.mxu0 0.0
        %2849 = vmatprep.subr.mxu0 0.0
        %2850 = vmatpush2.xpose.msra.mxu0 0.0
        %2851 = vmatprep.subr.mxu0 0.0
        %2852 = vmatpush2.xpose.msra.mxu0 0.0
        %2853 = vmatprep.mubr.f32.mxu0 0.0
        %2854 = vmatmul.mubr.f32.gmra.mxu0 %v2784
        %v2855 = vpop.f32.mrf.mxu0
        %v2856 = vadd.f32 %v2325, %v2855
        %v2857 = vpop.f32.mrf.mxu0
        %2858 = vdwg.mxu0
        %v2860 = vsel %vm2326, %v943, 0
        %v2863 = vsel %vm2326, %v1629, 0
        %2865 = vmatprep.subr.mxu0 0.0
        %2866 = vmatpush1.xpose.msra.mxu0 0.0
        %2867 = vmatprep.subr.mxu0 0.0
        %2868 = vmatpush1.xpose.msra.mxu0 0.0
        %2869 = vmatprep.subr.mxu0 0.0
        %2870 = vmatpush1.xpose.msra.mxu0 0.0
        %2871 = vmatprep.subr.mxu0 0.0
        %2872 = vmatpush1.xpose.msra.mxu0 0.0
        %2873 = vmatprep.subr.mxu0 0.0
        %2874 = vmatpush1.xpose.msra.mxu0 0.0
        %2875 = vmatprep.subr.mxu0 0.0
        %2876 = vmatpush1.xpose.msra.mxu0 0.0
        %2877 = vmatprep.subr.mxu0 0.0
        %2878 = vmatpush1.xpose.msra.mxu0 0.0
        %2879 = vmatprep.subr.mxu0 0.0
        %2880 = vmatpush1.xpose.msra.mxu0 0.0
        %2881 = vmatprep.subr.mxu0 0.0
        %2882 = vmatpush1.xpose.msra.mxu0 0.0
        %2883 = vmatprep.subr.mxu0 0.0
        %2884 = vmatpush1.xpose.msra.mxu0 0.0
        %2885 = vmatprep.subr.mxu0 0.0
        %2886 = vmatpush1.xpose.msra.mxu0 0.0
        %2887 = vmatprep.subr.mxu0 0.0
        %2888 = vmatpush1.xpose.msra.mxu0 0.0
        %2889 = vmatprep.subr.mxu0 0.0
        %2890 = vmatpush1.xpose.msra.mxu0 0.0
        %2891 = vmatprep.subr.mxu0 0.0
        %2892 = vmatpush1.xpose.msra.mxu0 0.0
        %2893 = vmatprep.subr.mxu0 0.0
        %2894 = vmatpush1.xpose.msra.mxu0 0.0
        %2895 = vmatprep.subr.mxu0 0.0
        %2896 = vmatpush1.xpose.msra.mxu0 %v2863
        %2897 = vmatprep.subr.mxu0 0.0
        %2898 = vmatpush2.xpose.msra.mxu0 0.0
        %2899 = vmatprep.subr.mxu0 0.0
        %2900 = vmatpush2.xpose.msra.mxu0 0.0
        %2901 = vmatprep.subr.mxu0 0.0
        %2902 = vmatpush2.xpose.msra.mxu0 0.0
        %2903 = vmatprep.subr.mxu0 0.0
        %2904 = vmatpush2.xpose.msra.mxu0 0.0
        %2905 = vmatprep.subr.mxu0 0.0
        %2906 = vmatpush2.xpose.msra.mxu0 0.0
        %2907 = vmatprep.subr.mxu0 0.0
        %2908 = vmatpush2.xpose.msra.mxu0 0.0
        %2909 = vmatprep.subr.mxu0 0.0
        %2910 = vmatpush2.xpose.msra.mxu0 0.0
        %2911 = vmatprep.subr.mxu0 0.0
        %2912 = vmatpush2.xpose.msra.mxu0 0.0
        %2913 = vmatprep.subr.mxu0 0.0
        %2914 = vmatpush2.xpose.msra.mxu0 0.0
        %2915 = vmatprep.subr.mxu0 0.0
        %2916 = vmatpush2.xpose.msra.mxu0 0.0
        %2917 = vmatprep.subr.mxu0 0.0
        %2918 = vmatpush2.xpose.msra.mxu0 0.0
        %2919 = vmatprep.subr.mxu0 0.0
        %2920 = vmatpush2.xpose.msra.mxu0 0.0
        %2921 = vmatprep.subr.mxu0 0.0
        %2922 = vmatpush2.xpose.msra.mxu0 0.0
        %2923 = vmatprep.subr.mxu0 0.0
        %2924 = vmatpush2.xpose.msra.mxu0 0.0
        %2925 = vmatprep.subr.mxu0 0.0
        %2926 = vmatpush2.xpose.msra.mxu0 0.0
        %2927 = vmatprep.subr.mxu0 0.0
        %2928 = vmatpush2.xpose.msra.mxu0 0.0
        %2929 = vmatprep.mubr.f32.mxu0 0.0
        %2930 = vmatmul.mubr.f32.gmra.mxu0 %v2860
        %v2931 = vpop.f32.mrf.mxu0
        %v2932 = vadd.f32 %v2325, %v2931
        %v2933 = vpop.f32.mrf.mxu0
        %2934 = vdwg.mxu0
        %vm2935 = vcmask 64512
        %v2936 = vsel %vm2935, %v2400, -inf
        %2937 = vmax.xlane.f32.xlu0 %v2936
        %v2938 = vpop.xlane.xlu0 %2937
        %v2939 = vsel %vm2935, %v2476, -inf
        %2940 = vmax.xlane.f32.xlu0 %v2939
        %v2941 = vpop.xlane.xlu0 %2940
        %v2942 = vsel %vm2935, %v2552, -inf
        %2943 = vmax.xlane.f32.xlu0 %v2942
        %v2944 = vpop.xlane.xlu0 %2943
        %v2945 = vsel %vm2935, %v2628, -inf
        %2946 = vmax.xlane.f32.xlu0 %v2945
        %v2947 = vpop.xlane.xlu0 %2946
        %v2948 = vsel %vm2935, %v2704, -inf
        %2949 = vmax.xlane.f32.xlu0 %v2948
        %v2950 = vpop.xlane.xlu0 %2949
        %v2951 = vsel %vm2935, %v2780, -inf
        %2952 = vmax.xlane.f32.xlu0 %v2951
        %v2953 = vpop.xlane.xlu0 %2952
        %v2954 = vsel %vm2935, %v2856, -inf
        %2955 = vmax.xlane.f32.xlu0 %v2954
        %v2956 = vpop.xlane.xlu0 %2955
        %v2957 = vsel %vm2935, %v2932, -inf
        %2958 = vmax.xlane.f32.xlu0 %v2957
        %v2959 = vpop.xlane.xlu0 %2958
        %v2960 = vsub.f32 %v2400, %v2938
        %v2961 = vsub.f32 %v2476, %v2941
        %v2962 = vsub.f32 %v2552, %v2944
        %v2963 = vsub.f32 %v2628, %v2947
        %v2964 = vsub.f32 %v2704, %v2950
        %v2965 = vsub.f32 %v2780, %v2953
        %v2966 = vsub.f32 %v2856, %v2956
        %v2967 = vsub.f32 %v2932, %v2959
        %v2968 = vmul.f32 %v2960, 1.442695
        %v2969 = vpow.pop %v2968
        %v2970 = vmul.f32 %v2961, 1.442695
        %v2971 = vpow.pop %v2970
        %v2972 = vmul.f32 %v2962, 1.442695
        %v2973 = vpow.pop %v2972
        %v2974 = vmul.f32 %v2963, 1.442695
        %v2975 = vpow.pop %v2974
        %v2976 = vmul.f32 %v2964, 1.442695
        %v2977 = vpow.pop %v2976
        %v2978 = vmul.f32 %v2965, 1.442695
        %v2979 = vpow.pop %v2978
        %v2980 = vmul.f32 %v2966, 1.442695
        %v2981 = vpow.pop %v2980
        %v2982 = vmul.f32 %v2967, 1.442695
        %v2983 = vpow.pop %v2982
        %v2984 = vsel %vm2935, %v2969, 0.0
        %2985 = vadd.xlane.f32.xlu0 %v2984
        %v2986 = vpop.xlane.xlu0 %2985
        %v2987 = vsel %vm2935, %v2971, 0.0
        %2988 = vadd.xlane.f32.xlu0 %v2987
        %v2989 = vpop.xlane.xlu0 %2988
        %v2990 = vsel %vm2935, %v2973, 0.0
        %2991 = vadd.xlane.f32.xlu0 %v2990
        %v2992 = vpop.xlane.xlu0 %2991
        %v2993 = vsel %vm2935, %v2975, 0.0
        %2994 = vadd.xlane.f32.xlu0 %v2993
        %v2995 = vpop.xlane.xlu0 %2994
        %v2996 = vsel %vm2935, %v2977, 0.0
        %2997 = vadd.xlane.f32.xlu0 %v2996
        %v2998 = vpop.xlane.xlu0 %2997
        %v2999 = vsel %vm2935, %v2979, 0.0
        %3000 = vadd.xlane.f32.xlu0 %v2999
        %v3001 = vpop.xlane.xlu0 %3000
        %v3002 = vsel %vm2935, %v2981, 0.0
        %3003 = vadd.xlane.f32.xlu0 %v3002
        %v3004 = vpop.xlane.xlu0 %3003
        %v3005 = vsel %vm2935, %v2983, 0.0
        %3006 = vadd.xlane.f32.xlu0 %v3005
        %v3007 = vpop.xlane.xlu0 %3006
        %v3008 = vrcp.pop %v2986
        %v3009 = vrcp.pop %v2989
        %v3010 = vrcp.pop %v2992
        %v3011 = vrcp.pop %v2995
        %v3012 = vrcp.pop %v2998
        %v3013 = vrcp.pop %v3001
        %v3014 = vrcp.pop %v3004
        %v3015 = vrcp.pop %v3007
        %v3017 = vsel %vm2935, %v2969, 0
        %3019 = vmatprep.subr.mxu0 0.0
        %3020 = vmatpush1.msra.mxu0 0.0
        %3021 = vmatprep.subr.mxu0 0.0
        %3022 = vmatpush1.msra.mxu0 0.0
        %3023 = vmatprep.subr.mxu0 0.0
        %3024 = vmatpush1.msra.mxu0 0.0
        %3025 = vmatprep.subr.mxu0 0.0
        %3026 = vmatpush1.msra.mxu0 0.0
        %3027 = vmatprep.subr.mxu0 0.0
        %3028 = vmatpush1.msra.mxu0 0.0
        %3029 = vmatprep.subr.mxu0 0.0
        %3030 = vmatpush1.msra.mxu0 0.0
        %3031 = vmatprep.subr.mxu0 0.0
        %3032 = vmatpush1.msra.mxu0 0.0
        %3033 = vmatprep.subr.mxu0 0.0
        %3034 = vmatpush1.msra.mxu0 0.0
        %3035 = vmatprep.subr.mxu0 0.0
        %3036 = vmatpush1.msra.mxu0 0.0
        %3037 = vmatprep.subr.mxu0 0.0
        %3038 = vmatpush1.msra.mxu0 0.0
        %3039 = vmatprep.subr.mxu0 0.0
        %3040 = vmatpush1.msra.mxu0 0.0
        %3041 = vmatprep.subr.mxu0 0.0
        %3042 = vmatpush1.msra.mxu0 0.0
        %3043 = vmatprep.subr.mxu0 0.0
        %3044 = vmatpush1.msra.mxu0 0.0
        %3045 = vmatprep.subr.mxu0 0.0
        %3046 = vmatpush1.msra.mxu0 0.0
        %3047 = vmatprep.subr.mxu0 0.0
        %3048 = vmatpush1.msra.mxu0 0.0
        %3049 = vmatprep.subr.mxu0 0.0
        %3050 = vmatpush1.msra.mxu0 %v1827
        %3051 = vmatprep.subr.mxu0 0.0
        %3052 = vmatpush2.msra.mxu0 0.0
        %3053 = vmatprep.subr.mxu0 0.0
        %3054 = vmatpush2.msra.mxu0 0.0
        %3055 = vmatprep.subr.mxu0 0.0
        %3056 = vmatpush2.msra.mxu0 0.0
        %3057 = vmatprep.subr.mxu0 0.0
        %3058 = vmatpush2.msra.mxu0 0.0
        %3059 = vmatprep.subr.mxu0 0.0
        %3060 = vmatpush2.msra.mxu0 0.0
        %3061 = vmatprep.subr.mxu0 0.0
        %3062 = vmatpush2.msra.mxu0 0.0
        %3063 = vmatprep.subr.mxu0 0.0
        %3064 = vmatpush2.msra.mxu0 0.0
        %3065 = vmatprep.subr.mxu0 0.0
        %3066 = vmatpush2.msra.mxu0 0.0
        %3067 = vmatprep.subr.mxu0 0.0
        %3068 = vmatpush2.msra.mxu0 0.0
        %3069 = vmatprep.subr.mxu0 0.0
        %3070 = vmatpush2.msra.mxu0 0.0
        %3071 = vmatprep.subr.mxu0 0.0
        %3072 = vmatpush2.msra.mxu0 0.0
        %3073 = vmatprep.subr.mxu0 0.0
        %3074 = vmatpush2.msra.mxu0 0.0
        %3075 = vmatprep.subr.mxu0 0.0
        %3076 = vmatpush2.msra.mxu0 0.0
        %3077 = vmatprep.subr.mxu0 0.0
        %3078 = vmatpush2.msra.mxu0 0.0
        %3079 = vmatprep.subr.mxu0 0.0
        %3080 = vmatpush2.msra.mxu0 0.0
        %3081 = vmatprep.subr.mxu0 0.0
        %3082 = vmatpush2.msra.mxu0 0.0
        %3083 = vmatprep.mubr.f32.mxu0 0.0
        %3084 = vmatmul.mubr.f32.gmra.mxu0 %v3017
        %v3085 = vpop.f32.mrf.mxu0
        %v3086 = vadd.f32 0.0, %v3085
        %v3087 = vpop.f32.mrf.mxu0
        %3088 = vdwg.mxu0
        %v3090 = vsel %vm2935, %v2971, 0
        %3092 = vmatprep.subr.mxu0 0.0
        %3093 = vmatpush1.msra.mxu0 0.0
        %3094 = vmatprep.subr.mxu0 0.0
        %3095 = vmatpush1.msra.mxu0 0.0
        %3096 = vmatprep.subr.mxu0 0.0
        %3097 = vmatpush1.msra.mxu0 0.0
        %3098 = vmatprep.subr.mxu0 0.0
        %3099 = vmatpush1.msra.mxu0 0.0
        %3100 = vmatprep.subr.mxu0 0.0
        %3101 = vmatpush1.msra.mxu0 0.0
        %3102 = vmatprep.subr.mxu0 0.0
        %3103 = vmatpush1.msra.mxu0 0.0
        %3104 = vmatprep.subr.mxu0 0.0
        %3105 = vmatpush1.msra.mxu0 0.0
        %3106 = vmatprep.subr.mxu0 0.0
        %3107 = vmatpush1.msra.mxu0 0.0
        %3108 = vmatprep.subr.mxu0 0.0
        %3109 = vmatpush1.msra.mxu0 0.0
        %3110 = vmatprep.subr.mxu0 0.0
        %3111 = vmatpush1.msra.mxu0 0.0
        %3112 = vmatprep.subr.mxu0 0.0
        %3113 = vmatpush1.msra.mxu0 0.0
        %3114 = vmatprep.subr.mxu0 0.0
        %3115 = vmatpush1.msra.mxu0 0.0
        %3116 = vmatprep.subr.mxu0 0.0
        %3117 = vmatpush1.msra.mxu0 0.0
        %3118 = vmatprep.subr.mxu0 0.0
        %3119 = vmatpush1.msra.mxu0 0.0
        %3120 = vmatprep.subr.mxu0 0.0
        %3121 = vmatpush1.msra.mxu0 0.0
        %3122 = vmatprep.subr.mxu0 0.0
        %3123 = vmatpush1.msra.mxu0 %v1897
        %3124 = vmatprep.subr.mxu0 0.0
        %3125 = vmatpush2.msra.mxu0 0.0
        %3126 = vmatprep.subr.mxu0 0.0
        %3127 = vmatpush2.msra.mxu0 0.0
        %3128 = vmatprep.subr.mxu0 0.0
        %3129 = vmatpush2.msra.mxu0 0.0
        %3130 = vmatprep.subr.mxu0 0.0
        %3131 = vmatpush2.msra.mxu0 0.0
        %3132 = vmatprep.subr.mxu0 0.0
        %3133 = vmatpush2.msra.mxu0 0.0
        %3134 = vmatprep.subr.mxu0 0.0
        %3135 = vmatpush2.msra.mxu0 0.0
        %3136 = vmatprep.subr.mxu0 0.0
        %3137 = vmatpush2.msra.mxu0 0.0
        %3138 = vmatprep.subr.mxu0 0.0
        %3139 = vmatpush2.msra.mxu0 0.0
        %3140 = vmatprep.subr.mxu0 0.0
        %3141 = vmatpush2.msra.mxu0 0.0
        %3142 = vmatprep.subr.mxu0 0.0
        %3143 = vmatpush2.msra.mxu0 0.0
        %3144 = vmatprep.subr.mxu0 0.0
        %3145 = vmatpush2.msra.mxu0 0.0
        %3146 = vmatprep.subr.mxu0 0.0
        %3147 = vmatpush2.msra.mxu0 0.0
        %3148 = vmatprep.subr.mxu0 0.0
        %3149 = vmatpush2.msra.mxu0 0.0
        %3150 = vmatprep.subr.mxu0 0.0
        %3151 = vmatpush2.msra.mxu0 0.0
        %3152 = vmatprep.subr.mxu0 0.0
        %3153 = vmatpush2.msra.mxu0 0.0
        %3154 = vmatprep.subr.mxu0 0.0
        %3155 = vmatpush2.msra.mxu0 0.0
        %3156 = vmatprep.mubr.f32.mxu0 0.0
        %3157 = vmatmul.mubr.f32.gmra.mxu0 %v3090
        %v3158 = vpop.f32.mrf.mxu0
        %v3159 = vadd.f32 0.0, %v3158
        %v3160 = vpop.f32.mrf.mxu0
        %3161 = vdwg.mxu0
        %v3163 = vsel %vm2935, %v2973, 0
        %3165 = vmatprep.subr.mxu0 0.0
        %3166 = vmatpush1.msra.mxu0 0.0
        %3167 = vmatprep.subr.mxu0 0.0
        %3168 = vmatpush1.msra.mxu0 0.0
        %3169 = vmatprep.subr.mxu0 0.0
        %3170 = vmatpush1.msra.mxu0 0.0
        %3171 = vmatprep.subr.mxu0 0.0
        %3172 = vmatpush1.msra.mxu0 0.0
        %3173 = vmatprep.subr.mxu0 0.0
        %3174 = vmatpush1.msra.mxu0 0.0
        %3175 = vmatprep.subr.mxu0 0.0
        %3176 = vmatpush1.msra.mxu0 0.0
        %3177 = vmatprep.subr.mxu0 0.0
        %3178 = vmatpush1.msra.mxu0 0.0
        %3179 = vmatprep.subr.mxu0 0.0
        %3180 = vmatpush1.msra.mxu0 0.0
        %3181 = vmatprep.subr.mxu0 0.0
        %3182 = vmatpush1.msra.mxu0 0.0
        %3183 = vmatprep.subr.mxu0 0.0
        %3184 = vmatpush1.msra.mxu0 0.0
        %3185 = vmatprep.subr.mxu0 0.0
        %3186 = vmatpush1.msra.mxu0 0.0
        %3187 = vmatprep.subr.mxu0 0.0
        %3188 = vmatpush1.msra.mxu0 0.0
        %3189 = vmatprep.subr.mxu0 0.0
        %3190 = vmatpush1.msra.mxu0 0.0
        %3191 = vmatprep.subr.mxu0 0.0
        %3192 = vmatpush1.msra.mxu0 0.0
        %3193 = vmatprep.subr.mxu0 0.0
        %3194 = vmatpush1.msra.mxu0 0.0
        %3195 = vmatprep.subr.mxu0 0.0
        %3196 = vmatpush1.msra.mxu0 %v1967
        %3197 = vmatprep.subr.mxu0 0.0
        %3198 = vmatpush2.msra.mxu0 0.0
        %3199 = vmatprep.subr.mxu0 0.0
        %3200 = vmatpush2.msra.mxu0 0.0
        %3201 = vmatprep.subr.mxu0 0.0
        %3202 = vmatpush2.msra.mxu0 0.0
        %3203 = vmatprep.subr.mxu0 0.0
        %3204 = vmatpush2.msra.mxu0 0.0
        %3205 = vmatprep.subr.mxu0 0.0
        %3206 = vmatpush2.msra.mxu0 0.0
        %3207 = vmatprep.subr.mxu0 0.0
        %3208 = vmatpush2.msra.mxu0 0.0
        %3209 = vmatprep.subr.mxu0 0.0
        %3210 = vmatpush2.msra.mxu0 0.0
        %3211 = vmatprep.subr.mxu0 0.0
        %3212 = vmatpush2.msra.mxu0 0.0
        %3213 = vmatprep.subr.mxu0 0.0
        %3214 = vmatpush2.msra.mxu0 0.0
        %3215 = vmatprep.subr.mxu0 0.0
        %3216 = vmatpush2.msra.mxu0 0.0
        %3217 = vmatprep.subr.mxu0 0.0
        %3218 = vmatpush2.msra.mxu0 0.0
        %3219 = vmatprep.subr.mxu0 0.0
        %3220 = vmatpush2.msra.mxu0 0.0
        %3221 = vmatprep.subr.mxu0 0.0
        %3222 = vmatpush2.msra.mxu0 0.0
        %3223 = vmatprep.subr.mxu0 0.0
        %3224 = vmatpush2.msra.mxu0 0.0
        %3225 = vmatprep.subr.mxu0 0.0
        %3226 = vmatpush2.msra.mxu0 0.0
        %3227 = vmatprep.subr.mxu0 0.0
        %3228 = vmatpush2.msra.mxu0 0.0
        %3229 = vmatprep.mubr.f32.mxu0 0.0
        %3230 = vmatmul.mubr.f32.gmra.mxu0 %v3163
        %v3231 = vpop.f32.mrf.mxu0
        %v3232 = vadd.f32 0.0, %v3231
        %v3233 = vpop.f32.mrf.mxu0
        %3234 = vdwg.mxu0
        %v3236 = vsel %vm2935, %v2975, 0
        %3238 = vmatprep.subr.mxu0 0.0
        %3239 = vmatpush1.msra.mxu0 0.0
        %3240 = vmatprep.subr.mxu0 0.0
        %3241 = vmatpush1.msra.mxu0 0.0
        %3242 = vmatprep.subr.mxu0 0.0
        %3243 = vmatpush1.msra.mxu0 0.0
        %3244 = vmatprep.subr.mxu0 0.0
        %3245 = vmatpush1.msra.mxu0 0.0
        %3246 = vmatprep.subr.mxu0 0.0
        %3247 = vmatpush1.msra.mxu0 0.0
        %3248 = vmatprep.subr.mxu0 0.0
        %3249 = vmatpush1.msra.mxu0 0.0
        %3250 = vmatprep.subr.mxu0 0.0
        %3251 = vmatpush1.msra.mxu0 0.0
        %3252 = vmatprep.subr.mxu0 0.0
        %3253 = vmatpush1.msra.mxu0 0.0
        %3254 = vmatprep.subr.mxu0 0.0
        %3255 = vmatpush1.msra.mxu0 0.0
        %3256 = vmatprep.subr.mxu0 0.0
        %3257 = vmatpush1.msra.mxu0 0.0
        %3258 = vmatprep.subr.mxu0 0.0
        %3259 = vmatpush1.msra.mxu0 0.0
        %3260 = vmatprep.subr.mxu0 0.0
        %3261 = vmatpush1.msra.mxu0 0.0
        %3262 = vmatprep.subr.mxu0 0.0
        %3263 = vmatpush1.msra.mxu0 0.0
        %3264 = vmatprep.subr.mxu0 0.0
        %3265 = vmatpush1.msra.mxu0 0.0
        %3266 = vmatprep.subr.mxu0 0.0
        %3267 = vmatpush1.msra.mxu0 0.0
        %3268 = vmatprep.subr.mxu0 0.0
        %3269 = vmatpush1.msra.mxu0 %v2037
        %3270 = vmatprep.subr.mxu0 0.0
        %3271 = vmatpush2.msra.mxu0 0.0
        %3272 = vmatprep.subr.mxu0 0.0
        %3273 = vmatpush2.msra.mxu0 0.0
        %3274 = vmatprep.subr.mxu0 0.0
        %3275 = vmatpush2.msra.mxu0 0.0
        %3276 = vmatprep.subr.mxu0 0.0
        %3277 = vmatpush2.msra.mxu0 0.0
        %3278 = vmatprep.subr.mxu0 0.0
        %3279 = vmatpush2.msra.mxu0 0.0
        %3280 = vmatprep.subr.mxu0 0.0
        %3281 = vmatpush2.msra.mxu0 0.0
        %3282 = vmatprep.subr.mxu0 0.0
        %3283 = vmatpush2.msra.mxu0 0.0
        %3284 = vmatprep.subr.mxu0 0.0
        %3285 = vmatpush2.msra.mxu0 0.0
        %3286 = vmatprep.subr.mxu0 0.0
        %3287 = vmatpush2.msra.mxu0 0.0
        %3288 = vmatprep.subr.mxu0 0.0
        %3289 = vmatpush2.msra.mxu0 0.0
        %3290 = vmatprep.subr.mxu0 0.0
        %3291 = vmatpush2.msra.mxu0 0.0
        %3292 = vmatprep.subr.mxu0 0.0
        %3293 = vmatpush2.msra.mxu0 0.0
        %3294 = vmatprep.subr.mxu0 0.0
        %3295 = vmatpush2.msra.mxu0 0.0
        %3296 = vmatprep.subr.mxu0 0.0
        %3297 = vmatpush2.msra.mxu0 0.0
        %3298 = vmatprep.subr.mxu0 0.0
        %3299 = vmatpush2.msra.mxu0 0.0
        %3300 = vmatprep.subr.mxu0 0.0
        %3301 = vmatpush2.msra.mxu0 0.0
        %3302 = vmatprep.mubr.f32.mxu0 0.0
        %3303 = vmatmul.mubr.f32.gmra.mxu0 %v3236
        %v3304 = vpop.f32.mrf.mxu0
        %v3305 = vadd.f32 0.0, %v3304
        %v3306 = vpop.f32.mrf.mxu0
        %3307 = vdwg.mxu0
        %v3309 = vsel %vm2935, %v2977, 0
        %3311 = vmatprep.subr.mxu0 0.0
        %3312 = vmatpush1.msra.mxu0 0.0
        %3313 = vmatprep.subr.mxu0 0.0
        %3314 = vmatpush1.msra.mxu0 0.0
        %3315 = vmatprep.subr.mxu0 0.0
        %3316 = vmatpush1.msra.mxu0 0.0
        %3317 = vmatprep.subr.mxu0 0.0
        %3318 = vmatpush1.msra.mxu0 0.0
        %3319 = vmatprep.subr.mxu0 0.0
        %3320 = vmatpush1.msra.mxu0 0.0
        %3321 = vmatprep.subr.mxu0 0.0
        %3322 = vmatpush1.msra.mxu0 0.0
        %3323 = vmatprep.subr.mxu0 0.0
        %3324 = vmatpush1.msra.mxu0 0.0
        %3325 = vmatprep.subr.mxu0 0.0
        %3326 = vmatpush1.msra.mxu0 0.0
        %3327 = vmatprep.subr.mxu0 0.0
        %3328 = vmatpush1.msra.mxu0 0.0
        %3329 = vmatprep.subr.mxu0 0.0
        %3330 = vmatpush1.msra.mxu0 0.0
        %3331 = vmatprep.subr.mxu0 0.0
        %3332 = vmatpush1.msra.mxu0 0.0
        %3333 = vmatprep.subr.mxu0 0.0
        %3334 = vmatpush1.msra.mxu0 0.0
        %3335 = vmatprep.subr.mxu0 0.0
        %3336 = vmatpush1.msra.mxu0 0.0
        %3337 = vmatprep.subr.mxu0 0.0
        %3338 = vmatpush1.msra.mxu0 0.0
        %3339 = vmatprep.subr.mxu0 0.0
        %3340 = vmatpush1.msra.mxu0 0.0
        %3341 = vmatprep.subr.mxu0 0.0
        %3342 = vmatpush1.msra.mxu0 %v2107
        %3343 = vmatprep.subr.mxu0 0.0
        %3344 = vmatpush2.msra.mxu0 0.0
        %3345 = vmatprep.subr.mxu0 0.0
        %3346 = vmatpush2.msra.mxu0 0.0
        %3347 = vmatprep.subr.mxu0 0.0
        %3348 = vmatpush2.msra.mxu0 0.0
        %3349 = vmatprep.subr.mxu0 0.0
        %3350 = vmatpush2.msra.mxu0 0.0
        %3351 = vmatprep.subr.mxu0 0.0
        %3352 = vmatpush2.msra.mxu0 0.0
        %3353 = vmatprep.subr.mxu0 0.0
        %3354 = vmatpush2.msra.mxu0 0.0
        %3355 = vmatprep.subr.mxu0 0.0
        %3356 = vmatpush2.msra.mxu0 0.0
        %3357 = vmatprep.subr.mxu0 0.0
        %3358 = vmatpush2.msra.mxu0 0.0
        %3359 = vmatprep.subr.mxu0 0.0
        %3360 = vmatpush2.msra.mxu0 0.0
        %3361 = vmatprep.subr.mxu0 0.0
        %3362 = vmatpush2.msra.mxu0 0.0
        %3363 = vmatprep.subr.mxu0 0.0
        %3364 = vmatpush2.msra.mxu0 0.0
        %3365 = vmatprep.subr.mxu0 0.0
        %3366 = vmatpush2.msra.mxu0 0.0
        %3367 = vmatprep.subr.mxu0 0.0
        %3368 = vmatpush2.msra.mxu0 0.0
        %3369 = vmatprep.subr.mxu0 0.0
        %3370 = vmatpush2.msra.mxu0 0.0
        %3371 = vmatprep.subr.mxu0 0.0
        %3372 = vmatpush2.msra.mxu0 0.0
        %3373 = vmatprep.subr.mxu0 0.0
        %3374 = vmatpush2.msra.mxu0 0.0
        %3375 = vmatprep.mubr.f32.mxu0 0.0
        %3376 = vmatmul.mubr.f32.gmra.mxu0 %v3309
        %v3377 = vpop.f32.mrf.mxu0
        %v3378 = vadd.f32 0.0, %v3377
        %v3379 = vpop.f32.mrf.mxu0
        %3380 = vdwg.mxu0
        %v3382 = vsel %vm2935, %v2979, 0
        %3384 = vmatprep.subr.mxu0 0.0
        %3385 = vmatpush1.msra.mxu0 0.0
        %3386 = vmatprep.subr.mxu0 0.0
        %3387 = vmatpush1.msra.mxu0 0.0
        %3388 = vmatprep.subr.mxu0 0.0
        %3389 = vmatpush1.msra.mxu0 0.0
        %3390 = vmatprep.subr.mxu0 0.0
        %3391 = vmatpush1.msra.mxu0 0.0
        %3392 = vmatprep.subr.mxu0 0.0
        %3393 = vmatpush1.msra.mxu0 0.0
        %3394 = vmatprep.subr.mxu0 0.0
        %3395 = vmatpush1.msra.mxu0 0.0
        %3396 = vmatprep.subr.mxu0 0.0
        %3397 = vmatpush1.msra.mxu0 0.0
        %3398 = vmatprep.subr.mxu0 0.0
        %3399 = vmatpush1.msra.mxu0 0.0
        %3400 = vmatprep.subr.mxu0 0.0
        %3401 = vmatpush1.msra.mxu0 0.0
        %3402 = vmatprep.subr.mxu0 0.0
        %3403 = vmatpush1.msra.mxu0 0.0
        %3404 = vmatprep.subr.mxu0 0.0
        %3405 = vmatpush1.msra.mxu0 0.0
        %3406 = vmatprep.subr.mxu0 0.0
        %3407 = vmatpush1.msra.mxu0 0.0
        %3408 = vmatprep.subr.mxu0 0.0
        %3409 = vmatpush1.msra.mxu0 0.0
        %3410 = vmatprep.subr.mxu0 0.0
        %3411 = vmatpush1.msra.mxu0 0.0
        %3412 = vmatprep.subr.mxu0 0.0
        %3413 = vmatpush1.msra.mxu0 0.0
        %3414 = vmatprep.subr.mxu0 0.0
        %3415 = vmatpush1.msra.mxu0 %v2177
        %3416 = vmatprep.subr.mxu0 0.0
        %3417 = vmatpush2.msra.mxu0 0.0
        %3418 = vmatprep.subr.mxu0 0.0
        %3419 = vmatpush2.msra.mxu0 0.0
        %3420 = vmatprep.subr.mxu0 0.0
        %3421 = vmatpush2.msra.mxu0 0.0
        %3422 = vmatprep.subr.mxu0 0.0
        %3423 = vmatpush2.msra.mxu0 0.0
        %3424 = vmatprep.subr.mxu0 0.0
        %3425 = vmatpush2.msra.mxu0 0.0
        %3426 = vmatprep.subr.mxu0 0.0
        %3427 = vmatpush2.msra.mxu0 0.0
        %3428 = vmatprep.subr.mxu0 0.0
        %3429 = vmatpush2.msra.mxu0 0.0
        %3430 = vmatprep.subr.mxu0 0.0
        %3431 = vmatpush2.msra.mxu0 0.0
        %3432 = vmatprep.subr.mxu0 0.0
        %3433 = vmatpush2.msra.mxu0 0.0
        %3434 = vmatprep.subr.mxu0 0.0
        %3435 = vmatpush2.msra.mxu0 0.0
        %3436 = vmatprep.subr.mxu0 0.0
        %3437 = vmatpush2.msra.mxu0 0.0
        %3438 = vmatprep.subr.mxu0 0.0
        %3439 = vmatpush2.msra.mxu0 0.0
        %3440 = vmatprep.subr.mxu0 0.0
        %3441 = vmatpush2.msra.mxu0 0.0
        %3442 = vmatprep.subr.mxu0 0.0
        %3443 = vmatpush2.msra.mxu0 0.0
        %3444 = vmatprep.subr.mxu0 0.0
        %3445 = vmatpush2.msra.mxu0 0.0
        %3446 = vmatprep.subr.mxu0 0.0
        %3447 = vmatpush2.msra.mxu0 0.0
        %3448 = vmatprep.mubr.f32.mxu0 0.0
        %3449 = vmatmul.mubr.f32.gmra.mxu0 %v3382
        %v3450 = vpop.f32.mrf.mxu0
        %v3451 = vadd.f32 0.0, %v3450
        %v3452 = vpop.f32.mrf.mxu0
        %3453 = vdwg.mxu0
        %v3455 = vsel %vm2935, %v2981, 0
        %3457 = vmatprep.subr.mxu0 0.0
        %3458 = vmatpush1.msra.mxu0 0.0
        %3459 = vmatprep.subr.mxu0 0.0
        %3460 = vmatpush1.msra.mxu0 0.0
        %3461 = vmatprep.subr.mxu0 0.0
        %3462 = vmatpush1.msra.mxu0 0.0
        %3463 = vmatprep.subr.mxu0 0.0
        %3464 = vmatpush1.msra.mxu0 0.0
        %3465 = vmatprep.subr.mxu0 0.0
        %3466 = vmatpush1.msra.mxu0 0.0
        %3467 = vmatprep.subr.mxu0 0.0
        %3468 = vmatpush1.msra.mxu0 0.0
        %3469 = vmatprep.subr.mxu0 0.0
        %3470 = vmatpush1.msra.mxu0 0.0
        %3471 = vmatprep.subr.mxu0 0.0
        %3472 = vmatpush1.msra.mxu0 0.0
        %3473 = vmatprep.subr.mxu0 0.0
        %3474 = vmatpush1.msra.mxu0 0.0
        %3475 = vmatprep.subr.mxu0 0.0
        %3476 = vmatpush1.msra.mxu0 0.0
        %3477 = vmatprep.subr.mxu0 0.0
        %3478 = vmatpush1.msra.mxu0 0.0
        %3479 = vmatprep.subr.mxu0 0.0
        %3480 = vmatpush1.msra.mxu0 0.0
        %3481 = vmatprep.subr.mxu0 0.0
        %3482 = vmatpush1.msra.mxu0 0.0
        %3483 = vmatprep.subr.mxu0 0.0
        %3484 = vmatpush1.msra.mxu0 0.0
        %3485 = vmatprep.subr.mxu0 0.0
        %3486 = vmatpush1.msra.mxu0 0.0
        %3487 = vmatprep.subr.mxu0 0.0
        %3488 = vmatpush1.msra.mxu0 %v2247
        %3489 = vmatprep.subr.mxu0 0.0
        %3490 = vmatpush2.msra.mxu0 0.0
        %3491 = vmatprep.subr.mxu0 0.0
        %3492 = vmatpush2.msra.mxu0 0.0
        %3493 = vmatprep.subr.mxu0 0.0
        %3494 = vmatpush2.msra.mxu0 0.0
        %3495 = vmatprep.subr.mxu0 0.0
        %3496 = vmatpush2.msra.mxu0 0.0
        %3497 = vmatprep.subr.mxu0 0.0
        %3498 = vmatpush2.msra.mxu0 0.0
        %3499 = vmatprep.subr.mxu0 0.0
        %3500 = vmatpush2.msra.mxu0 0.0
        %3501 = vmatprep.subr.mxu0 0.0
        %3502 = vmatpush2.msra.mxu0 0.0
        %3503 = vmatprep.subr.mxu0 0.0
        %3504 = vmatpush2.msra.mxu0 0.0
        %3505 = vmatprep.subr.mxu0 0.0
        %3506 = vmatpush2.msra.mxu0 0.0
        %3507 = vmatprep.subr.mxu0 0.0
        %3508 = vmatpush2.msra.mxu0 0.0
        %3509 = vmatprep.subr.mxu0 0.0
        %3510 = vmatpush2.msra.mxu0 0.0
        %3511 = vmatprep.subr.mxu0 0.0
        %3512 = vmatpush2.msra.mxu0 0.0
        %3513 = vmatprep.subr.mxu0 0.0
        %3514 = vmatpush2.msra.mxu0 0.0
        %3515 = vmatprep.subr.mxu0 0.0
        %3516 = vmatpush2.msra.mxu0 0.0
        %3517 = vmatprep.subr.mxu0 0.0
        %3518 = vmatpush2.msra.mxu0 0.0
        %3519 = vmatprep.subr.mxu0 0.0
        %3520 = vmatpush2.msra.mxu0 0.0
        %3521 = vmatprep.mubr.f32.mxu0 0.0
        %3522 = vmatmul.mubr.f32.gmra.mxu0 %v3455
        %v3523 = vpop.f32.mrf.mxu0
        %v3524 = vadd.f32 0.0, %v3523
        %v3525 = vpop.f32.mrf.mxu0
        %3526 = vdwg.mxu0
        %v3528 = vsel %vm2935, %v2983, 0
        %3530 = vmatprep.subr.mxu0 0.0
        %3531 = vmatpush1.msra.mxu0 0.0
        %3532 = vmatprep.subr.mxu0 0.0
        %3533 = vmatpush1.msra.mxu0 0.0
        %3534 = vmatprep.subr.mxu0 0.0
        %3535 = vmatpush1.msra.mxu0 0.0
        %3536 = vmatprep.subr.mxu0 0.0
        %3537 = vmatpush1.msra.mxu0 0.0
        %3538 = vmatprep.subr.mxu0 0.0
        %3539 = vmatpush1.msra.mxu0 0.0
        %3540 = vmatprep.subr.mxu0 0.0
        %3541 = vmatpush1.msra.mxu0 0.0
        %3542 = vmatprep.subr.mxu0 0.0
        %3543 = vmatpush1.msra.mxu0 0.0
        %3544 = vmatprep.subr.mxu0 0.0
        %3545 = vmatpush1.msra.mxu0 0.0
        %3546 = vmatprep.subr.mxu0 0.0
        %3547 = vmatpush1.msra.mxu0 0.0
        %3548 = vmatprep.subr.mxu0 0.0
        %3549 = vmatpush1.msra.mxu0 0.0
        %3550 = vmatprep.subr.mxu0 0.0
        %3551 = vmatpush1.msra.mxu0 0.0
        %3552 = vmatprep.subr.mxu0 0.0
        %3553 = vmatpush1.msra.mxu0 0.0
        %3554 = vmatprep.subr.mxu0 0.0
        %3555 = vmatpush1.msra.mxu0 0.0
        %3556 = vmatprep.subr.mxu0 0.0
        %3557 = vmatpush1.msra.mxu0 0.0
        %3558 = vmatprep.subr.mxu0 0.0
        %3559 = vmatpush1.msra.mxu0 0.0
        %3560 = vmatprep.subr.mxu0 0.0
        %3561 = vmatpush1.msra.mxu0 %v2317
        %3562 = vmatprep.subr.mxu0 0.0
        %3563 = vmatpush2.msra.mxu0 0.0
        %3564 = vmatprep.subr.mxu0 0.0
        %3565 = vmatpush2.msra.mxu0 0.0
        %3566 = vmatprep.subr.mxu0 0.0
        %3567 = vmatpush2.msra.mxu0 0.0
        %3568 = vmatprep.subr.mxu0 0.0
        %3569 = vmatpush2.msra.mxu0 0.0
        %3570 = vmatprep.subr.mxu0 0.0
        %3571 = vmatpush2.msra.mxu0 0.0
        %3572 = vmatprep.subr.mxu0 0.0
        %3573 = vmatpush2.msra.mxu0 0.0
        %3574 = vmatprep.subr.mxu0 0.0
        %3575 = vmatpush2.msra.mxu0 0.0
        %3576 = vmatprep.subr.mxu0 0.0
        %3577 = vmatpush2.msra.mxu0 0.0
        %3578 = vmatprep.subr.mxu0 0.0
        %3579 = vmatpush2.msra.mxu0 0.0
        %3580 = vmatprep.subr.mxu0 0.0
        %3581 = vmatpush2.msra.mxu0 0.0
        %3582 = vmatprep.subr.mxu0 0.0
        %3583 = vmatpush2.msra.mxu0 0.0
        %3584 = vmatprep.subr.mxu0 0.0
        %3585 = vmatpush2.msra.mxu0 0.0
        %3586 = vmatprep.subr.mxu0 0.0
        %3587 = vmatpush2.msra.mxu0 0.0
        %3588 = vmatprep.subr.mxu0 0.0
        %3589 = vmatpush2.msra.mxu0 0.0
        %3590 = vmatprep.subr.mxu0 0.0
        %3591 = vmatpush2.msra.mxu0 0.0
        %3592 = vmatprep.subr.mxu0 0.0
        %3593 = vmatpush2.msra.mxu0 0.0
        %3594 = vmatprep.mubr.f32.mxu0 0.0
        %3595 = vmatmul.mubr.f32.gmra.mxu0 %v3528
        %v3596 = vpop.f32.mrf.mxu0
        %v3597 = vadd.f32 0.0, %v3596
        %v3598 = vpop.f32.mrf.mxu0
        %3599 = vdwg.mxu0
        %v3600 = vmul.f32 %v3086, %v3008
        %v3601 = vmul.f32 %v3159, %v3009
        %v3602 = vmul.f32 %v3232, %v3010
        %v3603 = vmul.f32 %v3305, %v3011
        %v3604 = vmul.f32 %v3378, %v3012
        %v3605 = vmul.f32 %v3451, %v3013
        %v3606 = vmul.f32 %v3524, %v3014
        %v3607 = vmul.f32 %v3597, %v3015
        %v3608 = vld [vmem:[%s4] sm:$0xff]
        %v3609 = vld [vmem:[%s4 + $0x8] sm:$0xff]
        %v3610 = vld [vmem:[%s4 + $0x10] sm:$0xff]
        %v3611 = vld [vmem:[%s4 + $0x18] sm:$0xff]
        %v3612 = vld [vmem:[%s4 + $0x20] sm:$0xff]
        %v3613 = vld [vmem:[%s4 + $0x28] sm:$0xff]
        %v3614 = vld [vmem:[%s4 + $0x30] sm:$0xff]
        %v3615 = vld [vmem:[%s4 + $0x38] sm:$0xff]
        %v3616 = vld [vmem:[%s4 + $0x40] sm:$0xff]
        %v3617 = vld [vmem:[%s4 + $0x48] sm:$0xff]
        %v3618 = vld [vmem:[%s4 + $0x50] sm:$0xff]
        %v3619 = vld [vmem:[%s4 + $0x58] sm:$0xff]
        %v3620 = vld [vmem:[%s4 + $0x60] sm:$0xff]
        %v3621 = vld [vmem:[%s4 + $0x68] sm:$0xff]
        %v3622 = vld [vmem:[%s4 + $0x70] sm:$0xff]
        %v3623 = vld [vmem:[%s4 + $0x78] sm:$0xff]
        %v3625 = vsel %vm2326, %v3600, 0
        %3627 = vmatprep.subr.mxu0 0.0
        %3628 = vmatpush1.msra.mxu0 0.0
        %3629 = vmatprep.subr.mxu0 0.0
        %3630 = vmatpush1.msra.mxu0 0.0
        %3631 = vmatprep.subr.mxu0 0.0
        %3632 = vmatpush1.msra.mxu0 0.0
        %3633 = vmatprep.subr.mxu0 0.0
        %3634 = vmatpush1.msra.mxu0 0.0
        %3635 = vmatprep.subr.mxu0 0.0
        %3636 = vmatpush1.msra.mxu0 0.0
        %3637 = vmatprep.subr.mxu0 0.0
        %3638 = vmatpush1.msra.mxu0 0.0
        %3639 = vmatprep.subr.mxu0 0.0
        %3640 = vmatpush1.msra.mxu0 0.0
        %3641 = vmatprep.subr.mxu0 0.0
        %3642 = vmatpush1.msra.mxu0 0.0
        %3643 = vmatprep.subr.mxu0 0.0
        %3644 = vmatpush1.msra.mxu0 0.0
        %3645 = vmatprep.subr.mxu0 0.0
        %3646 = vmatpush1.msra.mxu0 0.0
        %3647 = vmatprep.subr.mxu0 0.0
        %3648 = vmatpush1.msra.mxu0 0.0
        %3649 = vmatprep.subr.mxu0 0.0
        %3650 = vmatpush1.msra.mxu0 0.0
        %3651 = vmatprep.subr.mxu0 0.0
        %3652 = vmatpush1.msra.mxu0 0.0
        %3653 = vmatprep.subr.mxu0 0.0
        %3654 = vmatpush1.msra.mxu0 0.0
        %3655 = vmatprep.subr.mxu0 0.0
        %3656 = vmatpush1.msra.mxu0 %v3609
        %3657 = vmatprep.subr.mxu0 0.0
        %3658 = vmatpush1.msra.mxu0 %v3608
        %3659 = vmatprep.subr.mxu0 0.0
        %3660 = vmatpush2.msra.mxu0 0.0
        %3661 = vmatprep.subr.mxu0 0.0
        %3662 = vmatpush2.msra.mxu0 0.0
        %3663 = vmatprep.subr.mxu0 0.0
        %3664 = vmatpush2.msra.mxu0 0.0
        %3665 = vmatprep.subr.mxu0 0.0
        %3666 = vmatpush2.msra.mxu0 0.0
        %3667 = vmatprep.subr.mxu0 0.0
        %3668 = vmatpush2.msra.mxu0 0.0
        %3669 = vmatprep.subr.mxu0 0.0
        %3670 = vmatpush2.msra.mxu0 0.0
        %3671 = vmatprep.subr.mxu0 0.0
        %3672 = vmatpush2.msra.mxu0 0.0
        %3673 = vmatprep.subr.mxu0 0.0
        %3674 = vmatpush2.msra.mxu0 0.0
        %3675 = vmatprep.subr.mxu0 0.0
        %3676 = vmatpush2.msra.mxu0 0.0
        %3677 = vmatprep.subr.mxu0 0.0
        %3678 = vmatpush2.msra.mxu0 0.0
        %3679 = vmatprep.subr.mxu0 0.0
        %3680 = vmatpush2.msra.mxu0 0.0
        %3681 = vmatprep.subr.mxu0 0.0
        %3682 = vmatpush2.msra.mxu0 0.0
        %3683 = vmatprep.subr.mxu0 0.0
        %3684 = vmatpush2.msra.mxu0 0.0
        %3685 = vmatprep.subr.mxu0 0.0
        %3686 = vmatpush2.msra.mxu0 0.0
        %3687 = vmatprep.subr.mxu0 0.0
        %3688 = vmatpush2.msra.mxu0 0.0
        %3689 = vmatprep.subr.mxu0 0.0
        %3690 = vmatpush2.msra.mxu0 0.0
        %3691 = vmatprep.mubr.f32.mxu0 0.0
        %3692 = vmatmul.mubr.f32.gmra.mxu0 %v3625
        %v3693 = vpop.f32.mrf.mxu0
        %v3694 = vadd.f32 0.0, %v3693
        %v3695 = vpop.f32.mrf.mxu0
        %3696 = vdwg.mxu0
        %v3698 = vsel %vm2326, %v3601, 0
        %3700 = vmatprep.subr.mxu0 0.0
        %3701 = vmatpush1.msra.mxu0 0.0
        %3702 = vmatprep.subr.mxu0 0.0
        %3703 = vmatpush1.msra.mxu0 0.0
        %3704 = vmatprep.subr.mxu0 0.0
        %3705 = vmatpush1.msra.mxu0 0.0
        %3706 = vmatprep.subr.mxu0 0.0
        %3707 = vmatpush1.msra.mxu0 0.0
        %3708 = vmatprep.subr.mxu0 0.0
        %3709 = vmatpush1.msra.mxu0 0.0
        %3710 = vmatprep.subr.mxu0 0.0
        %3711 = vmatpush1.msra.mxu0 0.0
        %3712 = vmatprep.subr.mxu0 0.0
        %3713 = vmatpush1.msra.mxu0 0.0
        %3714 = vmatprep.subr.mxu0 0.0
        %3715 = vmatpush1.msra.mxu0 0.0
        %3716 = vmatprep.subr.mxu0 0.0
        %3717 = vmatpush1.msra.mxu0 0.0
        %3718 = vmatprep.subr.mxu0 0.0
        %3719 = vmatpush1.msra.mxu0 0.0
        %3720 = vmatprep.subr.mxu0 0.0
        %3721 = vmatpush1.msra.mxu0 0.0
        %3722 = vmatprep.subr.mxu0 0.0
        %3723 = vmatpush1.msra.mxu0 0.0
        %3724 = vmatprep.subr.mxu0 0.0
        %3725 = vmatpush1.msra.mxu0 0.0
        %3726 = vmatprep.subr.mxu0 0.0
        %3727 = vmatpush1.msra.mxu0 0.0
        %3728 = vmatprep.subr.mxu0 0.0
        %3729 = vmatpush1.msra.mxu0 %v3611
        %3730 = vmatprep.subr.mxu0 0.0
        %3731 = vmatpush1.msra.mxu0 %v3610
        %3732 = vmatprep.subr.mxu0 0.0
        %3733 = vmatpush2.msra.mxu0 0.0
        %3734 = vmatprep.subr.mxu0 0.0
        %3735 = vmatpush2.msra.mxu0 0.0
        %3736 = vmatprep.subr.mxu0 0.0
        %3737 = vmatpush2.msra.mxu0 0.0
        %3738 = vmatprep.subr.mxu0 0.0
        %3739 = vmatpush2.msra.mxu0 0.0
        %3740 = vmatprep.subr.mxu0 0.0
        %3741 = vmatpush2.msra.mxu0 0.0
        %3742 = vmatprep.subr.mxu0 0.0
        %3743 = vmatpush2.msra.mxu0 0.0
        %3744 = vmatprep.subr.mxu0 0.0
        %3745 = vmatpush2.msra.mxu0 0.0
        %3746 = vmatprep.subr.mxu0 0.0
        %3747 = vmatpush2.msra.mxu0 0.0
        %3748 = vmatprep.subr.mxu0 0.0
        %3749 = vmatpush2.msra.mxu0 0.0
        %3750 = vmatprep.subr.mxu0 0.0
        %3751 = vmatpush2.msra.mxu0 0.0
        %3752 = vmatprep.subr.mxu0 0.0
        %3753 = vmatpush2.msra.mxu0 0.0
        %3754 = vmatprep.subr.mxu0 0.0
        %3755 = vmatpush2.msra.mxu0 0.0
        %3756 = vmatprep.subr.mxu0 0.0
        %3757 = vmatpush2.msra.mxu0 0.0
        %3758 = vmatprep.subr.mxu0 0.0
        %3759 = vmatpush2.msra.mxu0 0.0
        %3760 = vmatprep.subr.mxu0 0.0
        %3761 = vmatpush2.msra.mxu0 0.0
        %3762 = vmatprep.subr.mxu0 0.0
        %3763 = vmatpush2.msra.mxu0 0.0
        %3764 = vmatprep.mubr.f32.mxu0 0.0
        %3765 = vmatmul.mubr.f32.gmra.mxu0 %v3698
        %v3766 = vpop.f32.mrf.mxu0
        %v3767 = vadd.f32 0.0, %v3766
        %v3768 = vpop.f32.mrf.mxu0
        %3769 = vdwg.mxu0
        %v3771 = vsel %vm2326, %v3602, 0
        %3773 = vmatprep.subr.mxu0 0.0
        %3774 = vmatpush1.msra.mxu0 0.0
        %3775 = vmatprep.subr.mxu0 0.0
        %3776 = vmatpush1.msra.mxu0 0.0
        %3777 = vmatprep.subr.mxu0 0.0
        %3778 = vmatpush1.msra.mxu0 0.0
        %3779 = vmatprep.subr.mxu0 0.0
        %3780 = vmatpush1.msra.mxu0 0.0
        %3781 = vmatprep.subr.mxu0 0.0
        %3782 = vmatpush1.msra.mxu0 0.0
        %3783 = vmatprep.subr.mxu0 0.0
        %3784 = vmatpush1.msra.mxu0 0.0
        %3785 = vmatprep.subr.mxu0 0.0
        %3786 = vmatpush1.msra.mxu0 0.0
        %3787 = vmatprep.subr.mxu0 0.0
        %3788 = vmatpush1.msra.mxu0 0.0
        %3789 = vmatprep.subr.mxu0 0.0
        %3790 = vmatpush1.msra.mxu0 0.0
        %3791 = vmatprep.subr.mxu0 0.0
        %3792 = vmatpush1.msra.mxu0 0.0
        %3793 = vmatprep.subr.mxu0 0.0
        %3794 = vmatpush1.msra.mxu0 0.0
        %3795 = vmatprep.subr.mxu0 0.0
        %3796 = vmatpush1.msra.mxu0 0.0
        %3797 = vmatprep.subr.mxu0 0.0
        %3798 = vmatpush1.msra.mxu0 0.0
        %3799 = vmatprep.subr.mxu0 0.0
        %3800 = vmatpush1.msra.mxu0 0.0
        %3801 = vmatprep.subr.mxu0 0.0
        %3802 = vmatpush1.msra.mxu0 %v3613
        %3803 = vmatprep.subr.mxu0 0.0
        %3804 = vmatpush1.msra.mxu0 %v3612
        %3805 = vmatprep.subr.mxu0 0.0
        %3806 = vmatpush2.msra.mxu0 0.0
        %3807 = vmatprep.subr.mxu0 0.0
        %3808 = vmatpush2.msra.mxu0 0.0
        %3809 = vmatprep.subr.mxu0 0.0
        %3810 = vmatpush2.msra.mxu0 0.0
        %3811 = vmatprep.subr.mxu0 0.0
        %3812 = vmatpush2.msra.mxu0 0.0
        %3813 = vmatprep.subr.mxu0 0.0
        %3814 = vmatpush2.msra.mxu0 0.0
        %3815 = vmatprep.subr.mxu0 0.0
        %3816 = vmatpush2.msra.mxu0 0.0
        %3817 = vmatprep.subr.mxu0 0.0
        %3818 = vmatpush2.msra.mxu0 0.0
        %3819 = vmatprep.subr.mxu0 0.0
        %3820 = vmatpush2.msra.mxu0 0.0
        %3821 = vmatprep.subr.mxu0 0.0
        %3822 = vmatpush2.msra.mxu0 0.0
        %3823 = vmatprep.subr.mxu0 0.0
        %3824 = vmatpush2.msra.mxu0 0.0
        %3825 = vmatprep.subr.mxu0 0.0
        %3826 = vmatpush2.msra.mxu0 0.0
        %3827 = vmatprep.subr.mxu0 0.0
        %3828 = vmatpush2.msra.mxu0 0.0
        %3829 = vmatprep.subr.mxu0 0.0
        %3830 = vmatpush2.msra.mxu0 0.0
        %3831 = vmatprep.subr.mxu0 0.0
        %3832 = vmatpush2.msra.mxu0 0.0
        %3833 = vmatprep.subr.mxu0 0.0
        %3834 = vmatpush2.msra.mxu0 0.0
        %3835 = vmatprep.subr.mxu0 0.0
        %3836 = vmatpush2.msra.mxu0 0.0
        %3837 = vmatprep.mubr.f32.mxu0 0.0
        %3838 = vmatmul.mubr.f32.gmra.mxu0 %v3771
        %v3839 = vpop.f32.mrf.mxu0
        %v3840 = vadd.f32 0.0, %v3839
        %v3841 = vpop.f32.mrf.mxu0
        %3842 = vdwg.mxu0
        %v3844 = vsel %vm2326, %v3603, 0
        %3846 = vmatprep.subr.mxu0 0.0
        %3847 = vmatpush1.msra.mxu0 0.0
        %3848 = vmatprep.subr.mxu0 0.0
        %3849 = vmatpush1.msra.mxu0 0.0
        %3850 = vmatprep.subr.mxu0 0.0
        %3851 = vmatpush1.msra.mxu0 0.0
        %3852 = vmatprep.subr.mxu0 0.0
        %3853 = vmatpush1.msra.mxu0 0.0
        %3854 = vmatprep.subr.mxu0 0.0
        %3855 = vmatpush1.msra.mxu0 0.0
        %3856 = vmatprep.subr.mxu0 0.0
        %3857 = vmatpush1.msra.mxu0 0.0
        %3858 = vmatprep.subr.mxu0 0.0
        %3859 = vmatpush1.msra.mxu0 0.0
        %3860 = vmatprep.subr.mxu0 0.0
        %3861 = vmatpush1.msra.mxu0 0.0
        %3862 = vmatprep.subr.mxu0 0.0
        %3863 = vmatpush1.msra.mxu0 0.0
        %3864 = vmatprep.subr.mxu0 0.0
        %3865 = vmatpush1.msra.mxu0 0.0
        %3866 = vmatprep.subr.mxu0 0.0
        %3867 = vmatpush1.msra.mxu0 0.0
        %3868 = vmatprep.subr.mxu0 0.0
        %3869 = vmatpush1.msra.mxu0 0.0
        %3870 = vmatprep.subr.mxu0 0.0
        %3871 = vmatpush1.msra.mxu0 0.0
        %3872 = vmatprep.subr.mxu0 0.0
        %3873 = vmatpush1.msra.mxu0 0.0
        %3874 = vmatprep.subr.mxu0 0.0
        %3875 = vmatpush1.msra.mxu0 %v3615
        %3876 = vmatprep.subr.mxu0 0.0
        %3877 = vmatpush1.msra.mxu0 %v3614
        %3878 = vmatprep.subr.mxu0 0.0
        %3879 = vmatpush2.msra.mxu0 0.0
        %3880 = vmatprep.subr.mxu0 0.0
        %3881 = vmatpush2.msra.mxu0 0.0
        %3882 = vmatprep.subr.mxu0 0.0
        %3883 = vmatpush2.msra.mxu0 0.0
        %3884 = vmatprep.subr.mxu0 0.0
        %3885 = vmatpush2.msra.mxu0 0.0
        %3886 = vmatprep.subr.mxu0 0.0
        %3887 = vmatpush2.msra.mxu0 0.0
        %3888 = vmatprep.subr.mxu0 0.0
        %3889 = vmatpush2.msra.mxu0 0.0
        %3890 = vmatprep.subr.mxu0 0.0
        %3891 = vmatpush2.msra.mxu0 0.0
        %3892 = vmatprep.subr.mxu0 0.0
        %3893 = vmatpush2.msra.mxu0 0.0
        %3894 = vmatprep.subr.mxu0 0.0
        %3895 = vmatpush2.msra.mxu0 0.0
        %3896 = vmatprep.subr.mxu0 0.0
        %3897 = vmatpush2.msra.mxu0 0.0
        %3898 = vmatprep.subr.mxu0 0.0
        %3899 = vmatpush2.msra.mxu0 0.0
        %3900 = vmatprep.subr.mxu0 0.0
        %3901 = vmatpush2.msra.mxu0 0.0
        %3902 = vmatprep.subr.mxu0 0.0
        %3903 = vmatpush2.msra.mxu0 0.0
        %3904 = vmatprep.subr.mxu0 0.0
        %3905 = vmatpush2.msra.mxu0 0.0
        %3906 = vmatprep.subr.mxu0 0.0
        %3907 = vmatpush2.msra.mxu0 0.0
        %3908 = vmatprep.subr.mxu0 0.0
        %3909 = vmatpush2.msra.mxu0 0.0
        %3910 = vmatprep.mubr.f32.mxu0 0.0
        %3911 = vmatmul.mubr.f32.gmra.mxu0 %v3844
        %v3912 = vpop.f32.mrf.mxu0
        %v3913 = vadd.f32 0.0, %v3912
        %v3914 = vpop.f32.mrf.mxu0
        %3915 = vdwg.mxu0
        %v3917 = vsel %vm2326, %v3604, 0
        %3919 = vmatprep.subr.mxu0 0.0
        %3920 = vmatpush1.msra.mxu0 0.0
        %3921 = vmatprep.subr.mxu0 0.0
        %3922 = vmatpush1.msra.mxu0 0.0
        %3923 = vmatprep.subr.mxu0 0.0
        %3924 = vmatpush1.msra.mxu0 0.0
        %3925 = vmatprep.subr.mxu0 0.0
        %3926 = vmatpush1.msra.mxu0 0.0
        %3927 = vmatprep.subr.mxu0 0.0
        %3928 = vmatpush1.msra.mxu0 0.0
        %3929 = vmatprep.subr.mxu0 0.0
        %3930 = vmatpush1.msra.mxu0 0.0
        %3931 = vmatprep.subr.mxu0 0.0
        %3932 = vmatpush1.msra.mxu0 0.0
        %3933 = vmatprep.subr.mxu0 0.0
        %3934 = vmatpush1.msra.mxu0 0.0
        %3935 = vmatprep.subr.mxu0 0.0
        %3936 = vmatpush1.msra.mxu0 0.0
        %3937 = vmatprep.subr.mxu0 0.0
        %3938 = vmatpush1.msra.mxu0 0.0
        %3939 = vmatprep.subr.mxu0 0.0
        %3940 = vmatpush1.msra.mxu0 0.0
        %3941 = vmatprep.subr.mxu0 0.0
        %3942 = vmatpush1.msra.mxu0 0.0
        %3943 = vmatprep.subr.mxu0 0.0
        %3944 = vmatpush1.msra.mxu0 0.0
        %3945 = vmatprep.subr.mxu0 0.0
        %3946 = vmatpush1.msra.mxu0 0.0
        %3947 = vmatprep.subr.mxu0 0.0
        %3948 = vmatpush1.msra.mxu0 %v3617
        %3949 = vmatprep.subr.mxu0 0.0
        %3950 = vmatpush1.msra.mxu0 %v3616
        %3951 = vmatprep.subr.mxu0 0.0
        %3952 = vmatpush2.msra.mxu0 0.0
        %3953 = vmatprep.subr.mxu0 0.0
        %3954 = vmatpush2.msra.mxu0 0.0
        %3955 = vmatprep.subr.mxu0 0.0
        %3956 = vmatpush2.msra.mxu0 0.0
        %3957 = vmatprep.subr.mxu0 0.0
        %3958 = vmatpush2.msra.mxu0 0.0
        %3959 = vmatprep.subr.mxu0 0.0
        %3960 = vmatpush2.msra.mxu0 0.0
        %3961 = vmatprep.subr.mxu0 0.0
        %3962 = vmatpush2.msra.mxu0 0.0
        %3963 = vmatprep.subr.mxu0 0.0
        %3964 = vmatpush2.msra.mxu0 0.0
        %3965 = vmatprep.subr.mxu0 0.0
        %3966 = vmatpush2.msra.mxu0 0.0
        %3967 = vmatprep.subr.mxu0 0.0
        %3968 = vmatpush2.msra.mxu0 0.0
        %3969 = vmatprep.subr.mxu0 0.0
        %3970 = vmatpush2.msra.mxu0 0.0
        %3971 = vmatprep.subr.mxu0 0.0
        %3972 = vmatpush2.msra.mxu0 0.0
        %3973 = vmatprep.subr.mxu0 0.0
        %3974 = vmatpush2.msra.mxu0 0.0
        %3975 = vmatprep.subr.mxu0 0.0
        %3976 = vmatpush2.msra.mxu0 0.0
        %3977 = vmatprep.subr.mxu0 0.0
        %3978 = vmatpush2.msra.mxu0 0.0
        %3979 = vmatprep.subr.mxu0 0.0
        %3980 = vmatpush2.msra.mxu0 0.0
        %3981 = vmatprep.subr.mxu0 0.0
        %3982 = vmatpush2.msra.mxu0 0.0
        %3983 = vmatprep.mubr.f32.mxu0 0.0
        %3984 = vmatmul.mubr.f32.gmra.mxu0 %v3917
        %v3985 = vpop.f32.mrf.mxu0
        %v3986 = vadd.f32 0.0, %v3985
        %v3987 = vpop.f32.mrf.mxu0
        %3988 = vdwg.mxu0
        %v3990 = vsel %vm2326, %v3605, 0
        %3992 = vmatprep.subr.mxu0 0.0
        %3993 = vmatpush1.msra.mxu0 0.0
        %3994 = vmatprep.subr.mxu0 0.0
        %3995 = vmatpush1.msra.mxu0 0.0
        %3996 = vmatprep.subr.mxu0 0.0
        %3997 = vmatpush1.msra.mxu0 0.0
        %3998 = vmatprep.subr.mxu0 0.0
        %3999 = vmatpush1.msra.mxu0 0.0
        %4000 = vmatprep.subr.mxu0 0.0
        %4001 = vmatpush1.msra.mxu0 0.0
        %4002 = vmatprep.subr.mxu0 0.0
        %4003 = vmatpush1.msra.mxu0 0.0
        %4004 = vmatprep.subr.mxu0 0.0
        %4005 = vmatpush1.msra.mxu0 0.0
        %4006 = vmatprep.subr.mxu0 0.0
        %4007 = vmatpush1.msra.mxu0 0.0
        %4008 = vmatprep.subr.mxu0 0.0
        %4009 = vmatpush1.msra.mxu0 0.0
        %4010 = vmatprep.subr.mxu0 0.0
        %4011 = vmatpush1.msra.mxu0 0.0
        %4012 = vmatprep.subr.mxu0 0.0
        %4013 = vmatpush1.msra.mxu0 0.0
        %4014 = vmatprep.subr.mxu0 0.0
        %4015 = vmatpush1.msra.mxu0 0.0
        %4016 = vmatprep.subr.mxu0 0.0
        %4017 = vmatpush1.msra.mxu0 0.0
        %4018 = vmatprep.subr.mxu0 0.0
        %4019 = vmatpush1.msra.mxu0 0.0
        %4020 = vmatprep.subr.mxu0 0.0
        %4021 = vmatpush1.msra.mxu0 %v3619
        %4022 = vmatprep.subr.mxu0 0.0
        %4023 = vmatpush1.msra.mxu0 %v3618
        %4024 = vmatprep.subr.mxu0 0.0
        %4025 = vmatpush2.msra.mxu0 0.0
        %4026 = vmatprep.subr.mxu0 0.0
        %4027 = vmatpush2.msra.mxu0 0.0
        %4028 = vmatprep.subr.mxu0 0.0
        %4029 = vmatpush2.msra.mxu0 0.0
        %4030 = vmatprep.subr.mxu0 0.0
        %4031 = vmatpush2.msra.mxu0 0.0
        %4032 = vmatprep.subr.mxu0 0.0
        %4033 = vmatpush2.msra.mxu0 0.0
        %4034 = vmatprep.subr.mxu0 0.0
        %4035 = vmatpush2.msra.mxu0 0.0
        %4036 = vmatprep.subr.mxu0 0.0
        %4037 = vmatpush2.msra.mxu0 0.0
        %4038 = vmatprep.subr.mxu0 0.0
        %4039 = vmatpush2.msra.mxu0 0.0
        %4040 = vmatprep.subr.mxu0 0.0
        %4041 = vmatpush2.msra.mxu0 0.0
        %4042 = vmatprep.subr.mxu0 0.0
        %4043 = vmatpush2.msra.mxu0 0.0
        %4044 = vmatprep.subr.mxu0 0.0
        %4045 = vmatpush2.msra.mxu0 0.0
        %4046 = vmatprep.subr.mxu0 0.0
        %4047 = vmatpush2.msra.mxu0 0.0
        %4048 = vmatprep.subr.mxu0 0.0
        %4049 = vmatpush2.msra.mxu0 0.0
        %4050 = vmatprep.subr.mxu0 0.0
        %4051 = vmatpush2.msra.mxu0 0.0
        %4052 = vmatprep.subr.mxu0 0.0
        %4053 = vmatpush2.msra.mxu0 0.0
        %4054 = vmatprep.subr.mxu0 0.0
        %4055 = vmatpush2.msra.mxu0 0.0
        %4056 = vmatprep.mubr.f32.mxu0 0.0
        %4057 = vmatmul.mubr.f32.gmra.mxu0 %v3990
        %v4058 = vpop.f32.mrf.mxu0
        %v4059 = vadd.f32 0.0, %v4058
        %v4060 = vpop.f32.mrf.mxu0
        %4061 = vdwg.mxu0
        %v4063 = vsel %vm2326, %v3606, 0
        %4065 = vmatprep.subr.mxu0 0.0
        %4066 = vmatpush1.msra.mxu0 0.0
        %4067 = vmatprep.subr.mxu0 0.0
        %4068 = vmatpush1.msra.mxu0 0.0
        %4069 = vmatprep.subr.mxu0 0.0
        %4070 = vmatpush1.msra.mxu0 0.0
        %4071 = vmatprep.subr.mxu0 0.0
        %4072 = vmatpush1.msra.mxu0 0.0
        %4073 = vmatprep.subr.mxu0 0.0
        %4074 = vmatpush1.msra.mxu0 0.0
        %4075 = vmatprep.subr.mxu0 0.0
        %4076 = vmatpush1.msra.mxu0 0.0
        %4077 = vmatprep.subr.mxu0 0.0
        %4078 = vmatpush1.msra.mxu0 0.0
        %4079 = vmatprep.subr.mxu0 0.0
        %4080 = vmatpush1.msra.mxu0 0.0
        %4081 = vmatprep.subr.mxu0 0.0
        %4082 = vmatpush1.msra.mxu0 0.0
        %4083 = vmatprep.subr.mxu0 0.0
        %4084 = vmatpush1.msra.mxu0 0.0
        %4085 = vmatprep.subr.mxu0 0.0
        %4086 = vmatpush1.msra.mxu0 0.0
        %4087 = vmatprep.subr.mxu0 0.0
        %4088 = vmatpush1.msra.mxu0 0.0
        %4089 = vmatprep.subr.mxu0 0.0
        %4090 = vmatpush1.msra.mxu0 0.0
        %4091 = vmatprep.subr.mxu0 0.0
        %4092 = vmatpush1.msra.mxu0 0.0
        %4093 = vmatprep.subr.mxu0 0.0
        %4094 = vmatpush1.msra.mxu0 %v3621
        %4095 = vmatprep.subr.mxu0 0.0
        %4096 = vmatpush1.msra.mxu0 %v3620
        %4097 = vmatprep.subr.mxu0 0.0
        %4098 = vmatpush2.msra.mxu0 0.0
        %4099 = vmatprep.subr.mxu0 0.0
        %4100 = vmatpush2.msra.mxu0 0.0
        %4101 = vmatprep.subr.mxu0 0.0
        %4102 = vmatpush2.msra.mxu0 0.0
        %4103 = vmatprep.subr.mxu0 0.0
        %4104 = vmatpush2.msra.mxu0 0.0
        %4105 = vmatprep.subr.mxu0 0.0
        %4106 = vmatpush2.msra.mxu0 0.0
        %4107 = vmatprep.subr.mxu0 0.0
        %4108 = vmatpush2.msra.mxu0 0.0
        %4109 = vmatprep.subr.mxu0 0.0
        %4110 = vmatpush2.msra.mxu0 0.0
        %4111 = vmatprep.subr.mxu0 0.0
        %4112 = vmatpush2.msra.mxu0 0.0
        %4113 = vmatprep.subr.mxu0 0.0
        %4114 = vmatpush2.msra.mxu0 0.0
        %4115 = vmatprep.subr.mxu0 0.0
        %4116 = vmatpush2.msra.mxu0 0.0
        %4117 = vmatprep.subr.mxu0 0.0
        %4118 = vmatpush2.msra.mxu0 0.0
        %4119 = vmatprep.subr.mxu0 0.0
        %4120 = vmatpush2.msra.mxu0 0.0
        %4121 = vmatprep.subr.mxu0 0.0
        %4122 = vmatpush2.msra.mxu0 0.0
        %4123 = vmatprep.subr.mxu0 0.0
        %4124 = vmatpush2.msra.mxu0 0.0
        %4125 = vmatprep.subr.mxu0 0.0
        %4126 = vmatpush2.msra.mxu0 0.0
        %4127 = vmatprep.subr.mxu0 0.0
        %4128 = vmatpush2.msra.mxu0 0.0
        %4129 = vmatprep.mubr.f32.mxu0 0.0
        %4130 = vmatmul.mubr.f32.gmra.mxu0 %v4063
        %v4131 = vpop.f32.mrf.mxu0
        %v4132 = vadd.f32 0.0, %v4131
        %v4133 = vpop.f32.mrf.mxu0
        %4134 = vdwg.mxu0
        %v4136 = vsel %vm2326, %v3607, 0
        %4138 = vmatprep.subr.mxu0 0.0
        %4139 = vmatpush1.msra.mxu0 0.0
        %4140 = vmatprep.subr.mxu0 0.0
        %4141 = vmatpush1.msra.mxu0 0.0
        %4142 = vmatprep.subr.mxu0 0.0
        %4143 = vmatpush1.msra.mxu0 0.0
        %4144 = vmatprep.subr.mxu0 0.0
        %4145 = vmatpush1.msra.mxu0 0.0
        %4146 = vmatprep.subr.mxu0 0.0
        %4147 = vmatpush1.msra.mxu0 0.0
        %4148 = vmatprep.subr.mxu0 0.0
        %4149 = vmatpush1.msra.mxu0 0.0
        %4150 = vmatprep.subr.mxu0 0.0
        %4151 = vmatpush1.msra.mxu0 0.0
        %4152 = vmatprep.subr.mxu0 0.0
        %4153 = vmatpush1.msra.mxu0 0.0
        %4154 = vmatprep.subr.mxu0 0.0
        %4155 = vmatpush1.msra.mxu0 0.0
        %4156 = vmatprep.subr.mxu0 0.0
        %4157 = vmatpush1.msra.mxu0 0.0
        %4158 = vmatprep.subr.mxu0 0.0
        %4159 = vmatpush1.msra.mxu0 0.0
        %4160 = vmatprep.subr.mxu0 0.0
        %4161 = vmatpush1.msra.mxu0 0.0
        %4162 = vmatprep.subr.mxu0 0.0
        %4163 = vmatpush1.msra.mxu0 0.0
        %4164 = vmatprep.subr.mxu0 0.0
        %4165 = vmatpush1.msra.mxu0 0.0
        %4166 = vmatprep.subr.mxu0 0.0
        %4167 = vmatpush1.msra.mxu0 %v3623
        %4168 = vmatprep.subr.mxu0 0.0
        %4169 = vmatpush1.msra.mxu0 %v3622
        %4170 = vmatprep.subr.mxu0 0.0
        %4171 = vmatpush2.msra.mxu0 0.0
        %4172 = vmatprep.subr.mxu0 0.0
        %4173 = vmatpush2.msra.mxu0 0.0
        %4174 = vmatprep.subr.mxu0 0.0
        %4175 = vmatpush2.msra.mxu0 0.0
        %4176 = vmatprep.subr.mxu0 0.0
        %4177 = vmatpush2.msra.mxu0 0.0
        %4178 = vmatprep.subr.mxu0 0.0
        %4179 = vmatpush2.msra.mxu0 0.0
        %4180 = vmatprep.subr.mxu0 0.0
        %4181 = vmatpush2.msra.mxu0 0.0
        %4182 = vmatprep.subr.mxu0 0.0
        %4183 = vmatpush2.msra.mxu0 0.0
        %4184 = vmatprep.subr.mxu0 0.0
        %4185 = vmatpush2.msra.mxu0 0.0
        %4186 = vmatprep.subr.mxu0 0.0
        %4187 = vmatpush2.msra.mxu0 0.0
        %4188 = vmatprep.subr.mxu0 0.0
        %4189 = vmatpush2.msra.mxu0 0.0
        %4190 = vmatprep.subr.mxu0 0.0
        %4191 = vmatpush2.msra.mxu0 0.0
        %4192 = vmatprep.subr.mxu0 0.0
        %4193 = vmatpush2.msra.mxu0 0.0
        %4194 = vmatprep.subr.mxu0 0.0
        %4195 = vmatpush2.msra.mxu0 0.0
        %4196 = vmatprep.subr.mxu0 0.0
        %4197 = vmatpush2.msra.mxu0 0.0
        %4198 = vmatprep.subr.mxu0 0.0
        %4199 = vmatpush2.msra.mxu0 0.0
        %4200 = vmatprep.subr.mxu0 0.0
        %4201 = vmatpush2.msra.mxu0 0.0
        %4202 = vmatprep.mubr.f32.mxu0 0.0
        %4203 = vmatmul.mubr.f32.gmra.mxu0 %v4136
        %v4204 = vpop.f32.mrf.mxu0
        %v4205 = vadd.f32 0.0, %v4204
        %v4206 = vpop.f32.mrf.mxu0
        %4207 = vdwg.mxu0
        %v4208 = vadd.f32 %v3694, %v3767
        %v4209 = vadd.f32 %v4208, %v3840
        %v4210 = vadd.f32 %v4209, %v3913
        %v4211 = vadd.f32 %v4210, %v3986
        %v4212 = vadd.f32 %v4211, %v4059
        %v4213 = vadd.f32 %v4212, %v4132
        %v4214 = vadd.f32 %v4213, %v4205
        %v4215 = vld [vmem:[%s5] sm:$0x1]
        %v4217 = vlaneseq
        %v4218 = vshrl.u32 %v4217, 7
        %v4219 = vsub.s32 0, %v4218
        %v4220 = vrot.slane %v4215, %v4219
        %v4222 = vadd.f32 %v4214, %v4220
        %4223 = vst [vmem:[%s242] sm:$0xff] %v4222
        %s4224 = sand.u32 %s159, 1
        %s4225 = scalar_lea.sflag [#allocation3], %s4224
        %s4226 = sand.u32 %s159, 1
        %s4227 = smul.addr %s4226, 8
        %s4228 = scalar_lea.vmem [#allocation2], %s4227
        // Predicated region
        $region45: #{multi_head_attention_packed.1} parent=43 // pred_check
          %p4229 = pneg %p169
        $region46: #{multi_head_attention_packed.1} parent=43 // pred_check_branch
          %4231 = sbr.rel (%p4229) target = $region48
        $region47: #{multi_head_attention_packed.1} parent=43 // pred_region
          %s4233 = ssub.s32 128, 128
          %4234 = vsyncadd %s4225, %s4233
          %s4235 = smul.addr %s20, 128
          %s4236 = scalar_lea.hbm %s6, %s4235
          %s4238 = sshll.u32 %s4228, 4
          %s4239 = int_to_ptr.vmem [resolvable:$true] %s4238
          %4241 = dma.vmem_to_hbm [thread:$0]  %s4239, 128, %s4236, %s4225
        $region48: #{multi_head_attention_packed.1} parent=43 // pred_fallthru
          _
      $region44: #{multi_head_attention_packed.1} parent=5 // pred_fallthru
        _
      %p4242 = scmp.le.s32.totalorder 2, %s15
      // Predicated region
      $region49: #{multi_head_attention_packed.1} parent=5 // pred_check
        %p4243 = pneg %p4242
      $region50: #{multi_head_attention_packed.1} parent=5 // pred_check_branch
        %4245 = sbr.rel (%p4243) target = $region52
      $region51: #{multi_head_attention_packed.1} parent=5 // pred_region
        %s4246 = ssub.s32 %s15, 2
        // Predicated region
        $region53: #{multi_head_attention_packed.1} parent=51 // pred_check
          %p4247 = pneg %p175
        $region54: #{multi_head_attention_packed.1} parent=51 // pred_check_branch
          %4249 = sbr.rel (%p4247) target = $region56
        $region55: #{multi_head_attention_packed.1} parent=51 // pred_region
          %s4250 = sand.u32 %s160, 1
          %s4251 = scalar_lea.sflag [#allocation3], %s4250
          %s4252 = sand.u32 %s160, 1
          %s4253 = smul.addr %s4252, 8
          %s4254 = scalar_lea.vmem [#allocation2], %s4253
          %4255 = dma.done %s4251, 128
        $region56: #{multi_head_attention_packed.1} parent=51 // pred_fallthru
          _
      $region52: #{multi_head_attention_packed.1} parent=5 // pred_fallthru
        _
    $region6: #{multi_head_attention_packed.1} parent=1 // loop_footer
      %s19 = sadd.s32 1, %s15
    $region7: #{multi_head_attention_packed.1} parent=1 // loop_footer_branch
      %14 = sbr.rel target = $region3
    $region8: #{multi_head_attention_packed.1} parent=1 // loop_exit
      _
    %4256 = vsyncpa [#allocation3], 1
    %s4257 = scalar_lea.sflag [#allocation3], 1
    %4258 = vsyncpa %s4257, 1

</llo_original>
